<compile_context>
chip_gen: v6e
topology: v6e:2x2x1
jax: 0.10.0
libtpu: 0.0.40
codegen_flags: <defaults>
</compile_context>

<pallas_src>
import functools

import jax
import jax.numpy as jnp
from jax import lax
from jax.experimental import pallas as pl
from jax.experimental.pallas import tpu as pltpu

LR = jnp.array([1e-6, 1e-5, 1e-4, 1e-3, 1e-2, 1e-1, 1.0], dtype=jnp.float32)
NORM_CLIP = 10.0
VALUE_CLIP = 10000.0

N_SAMPLES = 150
N_FEATURES = 4
N_CLASSES = 3
H = 10
DIMENSION = (N_FEATURES * H + H) + (H * H + H) + (H * N_CLASSES + N_CLASSES)  # 193

# Fused per-MLP output block G[r, c] = sum_n Dcat[r, n] * Hcat[c, n]
#   Dcat rows: [da1 (10) | da2 (10) | dlogits (3) | per-sample-loss (1)] -> 24
#   Hcat rows: [x^T (4)  | h1 (10)  | h2 (10)     | ones (1)]            -> 25
_GR = 2 * H + N_CLASSES + 1       # 24
_GC = N_FEATURES + 2 * H + 1      # 25
_L1P = 16                         # per-MLP layer-1 rows padded 10 -> 16 (aligned slices)
_PSROWS = 16                      # packed param slab rows
_PSCOLS = 12                      # packed param slab cols (W cols 0:10, b1@10, b2@11)
_MAX_CHUNK = 32                   # MLPs handled per grid step (large batches)


def _mlp_grad_kernel(xy_ref, w1t_ref, ps_ref, g_ref, a1_scr, *, chunk):
    """Forward + mean-CE + manual backward for `chunk` MLPs (N=150 on lanes)."""
    xy = xy_ref[...]                                   # (7, 150) = [x^T ; y one-hot^T]
    xt = xy[0:N_FEATURES, :]                           # (4, 150)
    yt = xy[N_FEATURES:, :]                            # (3, 150)
    xtb = xt.astype(jnp.bfloat16)                      # hoisted loop invariants
    ones_b = jnp.ones((1, N_SAMPLES), jnp.bfloat16)
    inv_n = jnp.float32(1.0 / N_SAMPLES)

    # Stacked layer-1 forward for the whole chunk: one (4,chunk*16)^T x (4,150)
    # matmul; result parked in VMEM scratch, sliced per MLP inside the loop.
    w1t_all = w1t_ref[0]                               # (4, chunk*16)
    a1_scr[...] = lax.dot_general(
        w1t_all, xt, (((0,), (0,)), ((), ())),
        preferred_element_type=jnp.float32)            # (chunk*16, 150)

    def body(j, carry):
        ps = ps_ref[j]                                 # (16, 12) packed params of MLP j
        w2 = ps[0:H, 0:H]                              # (10, 10)
        w3 = ps[H:H + N_CLASSES, 0:H]                  # (3, 10)
        b1 = ps[0:H, H:H + 1]                          # (10, 1)
        b2 = ps[0:H, H + 1:H + 2]                      # (10, 1)
        b3 = ps[H:H + N_CLASSES, H:H + 1]              # (3, 1)

        # ---- forward (f32: keeps ReLU masks / softmax in f32 agreement) ----
        row0 = pl.multiple_of(j * _L1P, 8)
        a1 = a1_scr[pl.ds(row0, H), :]                 # (10, 150) pre-activation L1
        h1 = jnp.maximum(a1 + b1, 0.0)
        h2 = jnp.maximum(
            jnp.dot(w2, h1, preferred_element_type=jnp.float32) + b2, 0.0)
        z = jnp.dot(w3, h2, preferred_element_type=jnp.float32) + b3     # (3, 150)

        # ---- mean cross-entropy (column-wise softmax) ----
        m = jnp.max(z, axis=0, keepdims=True)          # (1, 150)
        e = jnp.exp(z - m)                             # (3, 150)
        s = jnp.sum(e, axis=0, keepdims=True)          # (1, 150)
        inv_s = pl.reciprocal(s, approx=True)          # EUP, free slot
        zy = jnp.sum(yt * z, axis=0, keepdims=True)    # (1, 150)
        lrow = (jnp.log(s) + m - zy) * inv_n           # per-sample loss / N; sum = loss

        # ---- manual backward (bf16 MXU operands, f32 accumulate) ----
        dz = (e * inv_s - yt) * inv_n                  # (3, 150) (softmax - onehot)/N
        w2b = w2.astype(jnp.bfloat16)
        w3b = w3.astype(jnp.bfloat16)
        dzb = dz.astype(jnp.bfloat16)
        dh2 = lax.dot_general(w3b, dzb, (((0,), (0,)), ((), ())),
                              preferred_element_type=jnp.float32)        # W3^T @ dz
        da2 = jnp.where(h2 > 0.0, dh2, 0.0)
        da2b = da2.astype(jnp.bfloat16)
        dh1 = lax.dot_general(w2b, da2b, (((0,), (0,)), ((), ())),
                              preferred_element_type=jnp.float32)        # W2^T @ da2
        da1 = jnp.where(h1 > 0.0, dh1, 0.0)

        # ---- all weight grads, bias grads AND the loss in ONE NT matmul ----
        dcat = jnp.concatenate(
            [da1.astype(jnp.bfloat16), da2b, dzb, lrow.astype(jnp.bfloat16)],
            axis=0)                                                      # (24, 150)
        hcat = jnp.concatenate(
            [xtb, h1.astype(jnp.bfloat16), h2.astype(jnp.bfloat16), ones_b],
            axis=0)                                                      # (25, 150)
        g_ref[j] = lax.dot_general(dcat, hcat, (((1,), (1,)), ((), ())),
                                   preferred_element_type=jnp.float32)   # (24, 25)
        return carry

    lax.fori_loop(0, chunk, body, 0, unroll=min(8, chunk))


def _pick_chunk(batch_size):
    """chunk in multiples of 8; target 32, keep grid length >= 2 when B allows."""
    b8 = -(-batch_size // 8) * 8
    if b8 >= 2 * _MAX_CHUNK:
        return _MAX_CHUNK
    if b8 >= 16 and (b8 // 2) % 8 == 0:
        return b8 // 2
    return 8


def _make_eval_call(padded_b, chunk):
    num_chunks = padded_b // chunk
    kernel = functools.partial(_mlp_grad_kernel, chunk=chunk)
    in_specs = [
        pl.BlockSpec((N_FEATURES + N_CLASSES, N_SAMPLES), lambda i: (0, 0)),  # [x^T;y^T]
        pl.BlockSpec((1, N_FEATURES, chunk * _L1P), lambda i: (i, 0, 0)),     # stacked W1^T
        pl.BlockSpec((chunk, _PSROWS, _PSCOLS), lambda i: (i, 0, 0)),         # W2/W3/biases
    ]
    out_specs = pl.BlockSpec((chunk, _GR, _GC), lambda i: (i, 0, 0))
    out_shape = jax.ShapeDtypeStruct((padded_b, _GR, _GC), jnp.float32)
    return pl.pallas_call(
        kernel,
        grid=(num_chunks,),
        in_specs=in_specs,
        out_specs=out_specs,
        out_shape=out_shape,
        scratch_shapes=[pltpu.VMEM((chunk * _L1P, N_SAMPLES), jnp.float32)],
        compiler_params=pltpu.CompilerParams(dimension_semantics=("parallel",)),
    )


class MlpEnvironment:
    """JAX/Pallas port of l2o.env.MlpEnvironment (reset / step / state semantics)."""

    def __init__(self, batch_size, dimension, seed=0):
        assert dimension == DIMENSION, f"Dimension should be {DIMENSION}"
        self.batch_size = B = batch_size
        self._key = jax.random.PRNGKey(seed)

        # TODO(synk): sklearn.datasets.load_iris replaced with deterministic synthetic
        # iris-like data (same shapes: 150x4 features, 3 classes) — no file access.
        dkey = jax.random.PRNGKey(1234)
        means = jnp.array([[5.0, 3.4, 1.5, 0.2],
                           [5.9, 2.8, 4.3, 1.3],
                           [6.6, 3.0, 5.5, 2.0]], dtype=jnp.float32)
        labels = jnp.repeat(jnp.arange(N_CLASSES, dtype=jnp.int32), N_SAMPLES // N_CLASSES)
        noise = 0.3 * jax.random.normal(dkey, (N_SAMPLES, N_FEATURES), dtype=jnp.float32)
        self.data_x = means[labels] + noise            # (150, 4)
        self.data_y = labels                           # (150,)
        self.y_onehot = jax.nn.one_hot(labels, N_CLASSES, dtype=jnp.float32)

        xy = jnp.concatenate([self.data_x.T, self.y_onehot.T], axis=0)  # (7, 150)

        chunk = _pick_chunk(B)
        padded_b = -(-B // chunk) * chunk
        num_chunks = padded_b // chunk
        eval_call = _make_eval_call(padded_b, chunk)

        def eval_core(params_flat):
            # unpack flat PyTorch-ordered params -> packed kernel slabs (fused XLA)
            pp = jnp.pad(params_flat, ((0, padded_b - B), (0, 0)))
            w1 = pp[:, 0:40].reshape(padded_b, H, N_FEATURES)
            b1 = pp[:, 40:50]
            w2 = pp[:, 50:150].reshape(padded_b, H, H)
            b2 = pp[:, 150:160]
            w3 = pp[:, 160:190].reshape(padded_b, N_CLASSES, H)
            b3 = pp[:, 190:193]

            # stacked W1^T slab (num_chunks, 4, chunk*16); MLP j owns cols j*16..j*16+9
            w1t = jnp.transpose(w1, (0, 2, 1))                               # (pb,4,10)
            w1t = jnp.pad(w1t, ((0, 0), (0, 0), (0, _L1P - H)))              # (pb,4,16)
            w1t_slab = (w1t.reshape(num_chunks, chunk, N_FEATURES, _L1P)
                            .transpose(0, 2, 1, 3)
                            .reshape(num_chunks, N_FEATURES, chunk * _L1P))

            # packed per-MLP slab (16,12): W2@[0:10,0:10], W3@[10:13,0:10],
            #                              b1@[0:10,10],  b2@[0:10,11], b3@[10:13,10]
            top = jnp.concatenate([w2, b1[:, :, None], b2[:, :, None]], axis=2)
            bot = jnp.concatenate(
                [w3, b3[:, :, None], jnp.zeros((padded_b, N_CLASSES, 1), jnp.float32)],
                axis=2)
            pslab = jnp.concatenate(
                [top, bot,
                 jnp.zeros((padded_b, _PSROWS - H - N_CLASSES, _PSCOLS), jnp.float32)],
                axis=1)                                                      # (pb,16,12)

            g = eval_call(xy, w1t_slab, pslab)                               # (pb,24,25)
            g = g[:B]              # drop zero-padded MLPs BEFORE the global norm clip
            loss = g[:, _GR - 1, _GC - 1]
            # flatten grads back to PyTorch named_parameters order (fused XLA)
            grads_flat = jnp.concatenate([
                g[:, 0:H, 0:N_FEATURES].reshape(B, H * N_FEATURES),                   # W1
                g[:, 0:H, _GC - 1],                                                    # b1
                g[:, H:2 * H, N_FEATURES:N_FEATURES + H].reshape(B, H * H),            # W2
                g[:, H:2 * H, _GC - 1],                                                # b2
                g[:, 2 * H:2 * H + N_CLASSES,
                  N_FEATURES + H:N_FEATURES + 2 * H].reshape(B, N_CLASSES * H),        # W3
                g[:, 2 * H:2 * H + N_CLASSES, _GC - 1],                                # b3
            ], axis=1)                                                                 # (B,193)
            # torch.nn.utils.clip_grad_norm over ALL params of ALL MLPs (norm_type=2)
            total_norm = jnp.sqrt(jnp.sum(grads_flat * grads_flat))
            scale = jnp.minimum(jnp.float32(NORM_CLIP) / (total_norm + 1e-6), 1.0)
            grads_flat = grads_flat * scale
            # x.data.clamp_(-VALUE_CLIP, VALUE_CLIP) after backward (torch order)
            params_clamped = jnp.clip(params_flat, -VALUE_CLIP, VALUE_CLIP)
            return params_clamped, grads_flat, loss

        def reset_core(params_flat):
            p, gflat, loss = eval_core(params_flat)
            state = jnp.concatenate([p, gflat, loss[:, None]], axis=1)
            return p, gflat, loss, state

        def step_core(params_flat, grads_flat, func_val, step_size):
            lr = LR[step_size]                                    # (B,)
            new_p = params_flat - lr[:, None] * grads_flat        # p -= lr * grad
            p, gflat, loss = eval_core(new_p)
            improvement = jnp.clip(func_val - loss, -VALUE_CLIP, VALUE_CLIP)
            state = jnp.concatenate([p, gflat, loss[:, None]], axis=1)
            return p, gflat, loss, state, improvement

        self._reset_jit = jax.jit(reset_core)
        self._step_jit = jax.jit(step_core)

        self.params_flat = None
        self.grads_flat = None
        self.func_val = None
        self._state = None
        self.reset()

    # nn.Linear.reset_parameters: W, b ~ U(-1/sqrt(fan_in), +1/sqrt(fan_in))
    def _init_params_flat(self):
        B = self.batch_size
        specs = [(H * N_FEATURES, N_FEATURES), (H, N_FEATURES),
                 (H * H, H), (H, H),
                 (N_CLASSES * H, H), (N_CLASSES, H)]
        pieces = []
        key = self._key
        for size, fan_in in specs:
            key, sub = jax.random.split(key)
            bound = 1.0 / (float(fan_in) ** 0.5)
            pieces.append(jax.random.uniform(sub, (B, size), jnp.float32, -bound, bound))
        self._key = key
        return jnp.concatenate(pieces, axis=1)        # (B, 193) PyTorch flatten order

    def reset(self):
        params0 = self._init_params_flat()
        p, g, loss, state = self._reset_jit(params0)
        self.params_flat, self.grads_flat, self.func_val, self._state = p, g, loss, state
        return state

    def step(self, step_size):
        step_size = jnp.asarray(step_size, dtype=jnp.int32)
        p, g, loss, state, improvement = self._step_jit(
            self.params_flat, self.grads_flat, self.func_val, step_size)
        self.params_flat, self.grads_flat, self.func_val, self._state = p, g, loss, state
        return state, improvement, False, None

    def _get_state(self):
        return self._state


def _reference_eval(params_flat, data_x, y_onehot):
    """Pure-JAX reference (vmap + autodiff, f32 HIGHEST) for a correctness spot-check."""
    hp = jax.lax.Precision.HIGHEST

    def per_mlp_loss(p):
        w1 = p[0:40].reshape(H, N_FEATURES); b1 = p[40:50]
        w2 = p[50:150].reshape(H, H);        b2 = p[150:160]
        w3 = p[160:190].reshape(N_CLASSES, H); b3 = p[190:193]
        h1 = jnp.maximum(jnp.dot(data_x, w1.T, precision=hp) + b1, 0.0)
        h2 = jnp.maximum(jnp.dot(h1, w2.T, precision=hp) + b2, 0.0)
        z = jnp.dot(h2, w3.T, precision=hp) + b3
        logp = jax.nn.log_softmax(z, axis=-1)
        return -jnp.mean(jnp.sum(y_onehot * logp, axis=-1))

    losses = jax.vmap(per_mlp_loss)(params_flat)
    grads = jax.vmap(jax.grad(per_mlp_loss))(params_flat)
    total_norm = jnp.sqrt(jnp.sum(grads * grads))
    scale = jnp.minimum(NORM_CLIP / (total_norm + 1e-6), 1.0)
    return losses, grads * scale


if __name__ == "__main__":
    B = 2
    env = MlpEnvironment(batch_size=B, dimension=DIMENSION, seed=0)
    state0 = env.reset()
    assert state0.shape == (B, 2 * DIMENSION + 1)

    # numeric spot-check of the kernel against pure-JAX f32 autodiff
    # (backward/grad matmuls run in bf16 -> tolerances sized for bf16-class error)
    ref_loss, ref_grads = _reference_eval(env.params_flat, env.data_x, env.y_onehot)
    assert bool(jnp.allclose(env.func_val, ref_loss, rtol=2e-2, atol=2e-3)), "loss mismatch"
    assert bool(jnp.allclose(env.grads_flat, ref_grads, rtol=2e-2, atol=5e-3)), "grad mismatch"

    step_size = jnp.array([3, 5], dtype=jnp.int32)    # indices into LR
    state1, improvement, done, info = env.step(step_size)

    jax.block_until_ready(state1)
    jax.block_until_ready(improvement)
    assert state1.shape == (B, 2 * DIMENSION + 1)
    assert improvement.shape == (B,)
    print("KERNEL_OK")
</pallas_src>

<mosaic_0001>
module attributes {stable_mosaic.version = 11 : i64} {
  func.func @_mlp_grad_kernel(%arg0: i32, %arg1: memref<7x150xf32, #tpu.memory_space<vmem>>, %arg2: memref<1x4x128xf32, #tpu.memory_space<vmem>>, %arg3: memref<8x16x12xf32, #tpu.memory_space<vmem>>, %arg4: memref<8x24x25xf32, #tpu.memory_space<vmem>>, %arg5: memref<128x150xf32, #tpu.memory_space<vmem>>) attributes {dimension_semantics = [#tpu.dimension_semantics<parallel>], iteration_bounds = array<i64: 1>, scalar_prefetch = 0 : i64, scratch_operands = 1 : i64, tpu.core_type = #tpu.core_type<tc>, window_params = [{pipeline_mode = #tpu.pipeline_mode<synchronous>, transform_indices = @transform_0, window_bounds = array<i64: 7, 150>}, {transform_indices = @transform_1, window_bounds = array<i64: 1, 4, 128>}, {transform_indices = @transform_2, window_bounds = array<i64: 8, 16, 12>}, {transform_indices = @transform_3, window_bounds = array<i64: 8, 24, 25>}]} {
    %c0 = arith.constant 0 : index
    %c0_0 = arith.constant 0 : index
    %0 = vector.load %arg1[%c0, %c0_0] : memref<7x150xf32, #tpu.memory_space<vmem>>, vector<7x150xf32>
    %1 = vector.extract_strided_slice %0 {offsets = [0, 0], sizes = [4, 150], strides = [1, 1]} : vector<7x150xf32> to vector<4x150xf32>
    %2 = vector.extract_strided_slice %0 {offsets = [4, 0], sizes = [3, 150], strides = [1, 1]} : vector<7x150xf32> to vector<3x150xf32>
    %3 = arith.truncf %1 : vector<4x150xf32> to vector<4x150xbf16>
    %cst = arith.constant 1.000000e+00 : bf16
    %4 = vector.broadcast %cst : bf16 to vector<1x150xbf16>
    %c0_1 = arith.constant 0 : index
    %c0_2 = arith.constant 0 : index
    %c0_3 = arith.constant 0 : index
    %5 = vector.load %arg2[%c0_1, %c0_2, %c0_3] : memref<1x4x128xf32, #tpu.memory_space<vmem>>, vector<1x4x128xf32>
    %6 = vector.shape_cast %5 : vector<1x4x128xf32> to vector<4x128xf32>
    %cst_4 = arith.constant dense<0.000000e+00> : vector<128x150xf32>
    %7 = tpu.matmul %6, %1, %cst_4 {dimension_numbers = #tpu.dot_dimension_numbers<[0], [0], [1], [1], [0, 1, 1, 1], [], []>} : vector<4x128xf32>, vector<4x150xf32>, vector<128x150xf32> -> vector<128x150xf32>
    %c0_5 = arith.constant 0 : index
    %c0_6 = arith.constant 0 : index
    %8 = vector.load %arg5[%c0_5, %c0_6] : memref<128x150xf32, #tpu.memory_space<vmem>>, vector<128x150xf32>
    tpu.vector_store %arg5[%c0_5, %c0_6], %7 {strides = array<i32>} : memref<128x150xf32, #tpu.memory_space<vmem>>, vector<128x150xf32>,
    %cst_7 = arith.constant 0.00666666683 : f32
    %c0_i32 = arith.constant 0 : i32
    %9 = arith.index_cast %c0_i32 : i32 to index
    %c0_8 = arith.constant 0 : index
    %c0_9 = arith.constant 0 : index
    %10 = vector.load %arg3[%9, %c0_8, %c0_9] : memref<8x16x12xf32, #tpu.memory_space<vmem>>, vector<1x16x12xf32>
    %11 = vector.shape_cast %10 : vector<1x16x12xf32> to vector<16x12xf32>
    %12 = vector.extract_strided_slice %11 {offsets = [0, 0], sizes = [10, 10], strides = [1, 1]} : vector<16x12xf32> to vector<10x10xf32>
    %13 = vector.extract_strided_slice %11 {offsets = [10, 0], sizes = [3, 10], strides = [1, 1]} : vector<16x12xf32> to vector<3x10xf32>
    %14 = vector.extract_strided_slice %11 {offsets = [0, 10], sizes = [10, 1], strides = [1, 1]} : vector<16x12xf32> to vector<10x1xf32>
    %15 = vector.extract_strided_slice %11 {offsets = [0, 11], sizes = [10, 1], strides = [1, 1]} : vector<16x12xf32> to vector<10x1xf32>
    %16 = vector.extract_strided_slice %11 {offsets = [10, 10], sizes = [3, 1], strides = [1, 1]} : vector<16x12xf32> to vector<3x1xf32>
    %c16_i32 = arith.constant 16 : i32
    %17 = arith.muli %c0_i32, %c16_i32 : i32
    %18 = tpu.assume_multiple %17, 8 : i32
    %19 = arith.index_cast %18 : i32 to index
    %c0_10 = arith.constant 0 : index
    %20 = vector.load %arg5[%19, %c0_10] : memref<128x150xf32, #tpu.memory_space<vmem>>, vector<10x150xf32>
    %21 = vector.broadcast %14 : vector<10x1xf32> to vector<10x150xf32>
    %22 = arith.addf %20, %21 : vector<10x150xf32>
    %cst_11 = arith.constant 0.000000e+00 : f32
    %23 = vector.broadcast %cst_11 : f32 to vector<10x150xf32>
    %24 = arith.maximumf %22, %23 : vector<10x150xf32>
    %cst_12 = arith.constant dense<0.000000e+00> : vector<10x150xf32>
    %25 = tpu.matmul %12, %24, %cst_12 {dimension_numbers = #tpu.dot_dimension_numbers<[1], [0], [0], [1], [0, 0, 1, 1], [], []>} : vector<10x10xf32>, vector<10x150xf32>, vector<10x150xf32> -> vector<10x150xf32>
    %26 = vector.broadcast %15 : vector<10x1xf32> to vector<10x150xf32>
    %27 = arith.addf %25, %26 : vector<10x150xf32>
    %cst_13 = arith.constant 0.000000e+00 : f32
    %28 = vector.broadcast %cst_13 : f32 to vector<10x150xf32>
    %29 = arith.maximumf %27, %28 : vector<10x150xf32>
    %cst_14 = arith.constant dense<0.000000e+00> : vector<3x150xf32>
    %30 = tpu.matmul %13, %29, %cst_14 {dimension_numbers = #tpu.dot_dimension_numbers<[1], [0], [0], [1], [0, 0, 1, 1], [], []>} : vector<3x10xf32>, vector<10x150xf32>, vector<3x150xf32> -> vector<3x150xf32>
    %31 = vector.broadcast %16 : vector<3x1xf32> to vector<3x150xf32>
    %32 = arith.addf %30, %31 : vector<3x150xf32>
    %cst_15 = arith.constant dense<0xFF800000> : vector<150xf32>
    %33 = vector.multi_reduction <maximumf>, %32, %cst_15 [0] : vector<3x150xf32> to vector<150xf32>
    %34 = vector.shape_cast %33 : vector<150xf32> to vector<1x150xf32>
    %35 = vector.broadcast %34 : vector<1x150xf32> to vector<3x150xf32>
    %36 = arith.subf %32, %35 : vector<3x150xf32>
    %37 = math.exp %36 : vector<3x150xf32>
    %cst_16 = arith.constant dense<0.000000e+00> : vector<150xf32>
    %38 = vector.multi_reduction <add>, %37, %cst_16 [0] : vector<3x150xf32> to vector<150xf32>
    %39 = vector.shape_cast %38 : vector<150xf32> to vector<1x150xf32>
    %40 = tpu.reciprocal %39 {approx = true} : vector<1x150xf32> -> vector<1x150xf32>
    %41 = arith.mulf %2, %32 : vector<3x150xf32>
    %cst_17 = arith.constant dense<0.000000e+00> : vector<150xf32>
    %42 = vector.multi_reduction <add>, %41, %cst_17 [0] : vector<3x150xf32> to vector<150xf32>
    %43 = vector.shape_cast %42 : vector<150xf32> to vector<1x150xf32>
    %44 = math.log %39 : vector<1x150xf32>
    %45 = arith.addf %44, %34 : vector<1x150xf32>
    %46 = arith.subf %45, %43 : vector<1x150xf32>
    %47 = vector.broadcast %cst_7 : f32 to vector<1x150xf32>
    %48 = arith.mulf %46, %47 : vector<1x150xf32>
    %49 = vector.broadcast %40 : vector<1x150xf32> to vector<3x150xf32>
    %50 = arith.mulf %37, %49 : vector<3x150xf32>
    %51 = arith.subf %50, %2 : vector<3x150xf32>
    %52 = vector.broadcast %cst_7 : f32 to vector<3x150xf32>
    %53 = arith.mulf %51, %52 : vector<3x150xf32>
    %54 = arith.truncf %12 : vector<10x10xf32> to vector<10x10xbf16>
    %55 = arith.truncf %13 : vector<3x10xf32> to vector<3x10xbf16>
    %56 = arith.truncf %53 : vector<3x150xf32> to vector<3x150xbf16>
    %cst_18 = arith.constant dense<0.000000e+00> : vector<10x150xf32>
    %57 = tpu.matmul %55, %56, %cst_18 {dimension_numbers = #tpu.dot_dimension_numbers<[0], [0], [1], [1], [0, 1, 1, 1], [], []>} : vector<3x10xbf16>, vector<3x150xbf16>, vector<10x150xf32> -> vector<10x150xf32>
    %cst_19 = arith.constant 0.000000e+00 : f32
    %58 = vector.broadcast %cst_19 : f32 to vector<10x150xf32>
    %59 = arith.cmpf ogt, %29, %58 : vector<10x150xf32>
    %cst_20 = arith.constant 0.000000e+00 : f32
    %60 = vector.broadcast %cst_20 : f32 to vector<10x150xf32>
    %61 = arith.select %59, %57, %60 : vector<10x150xi1>, vector<10x150xf32>
    %62 = arith.truncf %61 : vector<10x150xf32> to vector<10x150xbf16>
    %cst_21 = arith.constant dense<0.000000e+00> : vector<10x150xf32>
    %63 = tpu.matmul %54, %62, %cst_21 {dimension_numbers = #tpu.dot_dimension_numbers<[0], [0], [1], [1], [0, 1, 1, 1], [], []>} : vector<10x10xbf16>, vector<10x150xbf16>, vector<10x150xf32> -> vector<10x150xf32>
    %cst_22 = arith.constant 0.000000e+00 : f32
    %64 = vector.broadcast %cst_22 : f32 to vector<10x150xf32>
    %65 = arith.cmpf ogt, %24, %64 : vector<10x150xf32>
    %cst_23 = arith.constant 0.000000e+00 : f32
    %66 = vector.broadcast %cst_23 : f32 to vector<10x150xf32>
    %67 = arith.select %65, %63, %66 : vector<10x150xi1>, vector<10x150xf32>
    %68 = arith.truncf %67 : vector<10x150xf32> to vector<10x150xbf16>
    %69 = arith.truncf %48 : vector<1x150xf32> to vector<1x150xbf16>
    %70 = tpu.concatenate %68, %62, %56, %69 in 0 : vector<10x150xbf16>, vector<10x150xbf16>, vector<3x150xbf16>, vector<1x150xbf16> -> vector<24x150xbf16>
    %71 = arith.truncf %24 : vector<10x150xf32> to vector<10x150xbf16>
    %72 = arith.truncf %29 : vector<10x150xf32> to vector<10x150xbf16>
    %73 = tpu.concatenate %3, %71, %72, %4 in 0 : vector<4x150xbf16>, vector<10x150xbf16>, vector<10x150xbf16>, vector<1x150xbf16> -> vector<25x150xbf16>
    %cst_24 = arith.constant dense<0.000000e+00> : vector<24x25xf32>
    %74 = tpu.matmul %70, %73, %cst_24 {dimension_numbers = #tpu.dot_dimension_numbers<[1], [1], [0], [0], [0, 0, 1, 0], [], []>} : vector<24x150xbf16>, vector<25x150xbf16>, vector<24x25xf32> -> vector<24x25xf32>
    %75 = arith.index_cast %c0_i32 : i32 to index
    %c0_25 = arith.constant 0 : index
    %c0_26 = arith.constant 0 : index
    %76 = vector.load %arg4[%75, %c0_25, %c0_26] : memref<8x24x25xf32, #tpu.memory_space<vmem>>, vector<1x24x25xf32>
    %77 = vector.shape_cast %76 : vector<1x24x25xf32> to vector<24x25xf32>
    %78 = vector.shape_cast %74 : vector<24x25xf32> to vector<1x24x25xf32>
    tpu.vector_store %arg4[%75, %c0_25, %c0_26], %78 {strides = array<i32>} : memref<8x24x25xf32, #tpu.memory_space<vmem>>, vector<1x24x25xf32>,
    %c1_i32 = arith.constant 1 : i32
    %79 = arith.index_cast %c1_i32 : i32 to index
    %c0_27 = arith.constant 0 : index
    %c0_28 = arith.constant 0 : index
    %80 = vector.load %arg3[%79, %c0_27, %c0_28] : memref<8x16x12xf32, #tpu.memory_space<vmem>>, vector<1x16x12xf32>
    %81 = vector.shape_cast %80 : vector<1x16x12xf32> to vector<16x12xf32>
    %82 = vector.extract_strided_slice %81 {offsets = [0, 0], sizes = [10, 10], strides = [1, 1]} : vector<16x12xf32> to vector<10x10xf32>
    %83 = vector.extract_strided_slice %81 {offsets = [10, 0], sizes = [3, 10], strides = [1, 1]} : vector<16x12xf32> to vector<3x10xf32>
    %84 = vector.extract_strided_slice %81 {offsets = [0, 10], sizes = [10, 1], strides = [1, 1]} : vector<16x12xf32> to vector<10x1xf32>
    %85 = vector.extract_strided_slice %81 {offsets = [0, 11], sizes = [10, 1], strides = [1, 1]} : vector<16x12xf32> to vector<10x1xf32>
    %86 = vector.extract_strided_slice %81 {offsets = [10, 10], sizes = [3, 1], strides = [1, 1]} : vector<16x12xf32> to vector<3x1xf32>
    %c16_i32_29 = arith.constant 16 : i32
    %87 = arith.muli %c1_i32, %c16_i32_29 : i32
    %88 = tpu.assume_multiple %87, 8 : i32
    %89 = arith.index_cast %88 : i32 to index
    %c0_30 = arith.constant 0 : index
    %90 = vector.load %arg5[%89, %c0_30] : memref<128x150xf32, #tpu.memory_space<vmem>>, vector<10x150xf32>
    %91 = vector.broadcast %84 : vector<10x1xf32> to vector<10x150xf32>
    %92 = arith.addf %90, %91 : vector<10x150xf32>
    %cst_31 = arith.constant 0.000000e+00 : f32
    %93 = vector.broadcast %cst_31 : f32 to vector<10x150xf32>
    %94 = arith.maximumf %92, %93 : vector<10x150xf32>
    %cst_32 = arith.constant dense<0.000000e+00> : vector<10x150xf32>
    %95 = tpu.matmul %82, %94, %cst_32 {dimension_numbers = #tpu.dot_dimension_numbers<[1], [0], [0], [1], [0, 0, 1, 1], [], []>} : vector<10x10xf32>, vector<10x150xf32>, vector<10x150xf32> -> vector<10x150xf32>
    %96 = vector.broadcast %85 : vector<10x1xf32> to vector<10x150xf32>
    %97 = arith.addf %95, %96 : vector<10x150xf32>
    %cst_33 = arith.constant 0.000000e+00 : f32
    %98 = vector.broadcast %cst_33 : f32 to vector<10x150xf32>
    %99 = arith.maximumf %97, %98 : vector<10x150xf32>
    %cst_34 = arith.constant dense<0.000000e+00> : vector<3x150xf32>
    %100 = tpu.matmul %83, %99, %cst_34 {dimension_numbers = #tpu.dot_dimension_numbers<[1], [0], [0], [1], [0, 0, 1, 1], [], []>} : vector<3x10xf32>, vector<10x150xf32>, vector<3x150xf32> -> vector<3x150xf32>
    %101 = vector.broadcast %86 : vector<3x1xf32> to vector<3x150xf32>
    %102 = arith.addf %100, %101 : vector<3x150xf32>
    %cst_35 = arith.constant dense<0xFF800000> : vector<150xf32>
    %103 = vector.multi_reduction <maximumf>, %102, %cst_35 [0] : vector<3x150xf32> to vector<150xf32>
    %104 = vector.shape_cast %103 : vector<150xf32> to vector<1x150xf32>
    %105 = vector.broadcast %104 : vector<1x150xf32> to vector<3x150xf32>
    %106 = arith.subf %102, %105 : vector<3x150xf32>
    %107 = math.exp %106 : vector<3x150xf32>
    %cst_36 = arith.constant dense<0.000000e+00> : vector<150xf32>
    %108 = vector.multi_reduction <add>, %107, %cst_36 [0] : vector<3x150xf32> to vector<150xf32>
    %109 = vector.shape_cast %108 : vector<150xf32> to vector<1x150xf32>
    %110 = tpu.reciprocal %109 {approx = true} : vector<1x150xf32> -> vector<1x150xf32>
    %111 = arith.mulf %2, %102 : vector<3x150xf32>
    %cst_37 = arith.constant dense<0.000000e+00> : vector<150xf32>
    %112 = vector.multi_reduction <add>, %111, %cst_37 [0] : vector<3x150xf32> to vector<150xf32>
    %113 = vector.shape_cast %112 : vector<150xf32> to vector<1x150xf32>
    %114 = math.log %109 : vector<1x150xf32>
    %115 = arith.addf %114, %104 : vector<1x150xf32>
    %116 = arith.subf %115, %113 : vector<1x150xf32>
    %117 = vector.broadcast %cst_7 : f32 to vector<1x150xf32>
    %118 = arith.mulf %116, %117 : vector<1x150xf32>
    %119 = vector.broadcast %110 : vector<1x150xf32> to vector<3x150xf32>
    %120 = arith.mulf %107, %119 : vector<3x150xf32>
    %121 = arith.subf %120, %2 : vector<3x150xf32>
    %122 = vector.broadcast %cst_7 : f32 to vector<3x150xf32>
    %123 = arith.mulf %121, %122 : vector<3x150xf32>
    %124 = arith.truncf %82 : vector<10x10xf32> to vector<10x10xbf16>
    %125 = arith.truncf %83 : vector<3x10xf32> to vector<3x10xbf16>
    %126 = arith.truncf %123 : vector<3x150xf32> to vector<3x150xbf16>
    %cst_38 = arith.constant dense<0.000000e+00> : vector<10x150xf32>
    %127 = tpu.matmul %125, %126, %cst_38 {dimension_numbers = #tpu.dot_dimension_numbers<[0], [0], [1], [1], [0, 1, 1, 1], [], []>} : vector<3x10xbf16>, vector<3x150xbf16>, vector<10x150xf32> -> vector<10x150xf32>
    %cst_39 = arith.constant 0.000000e+00 : f32
    %128 = vector.broadcast %cst_39 : f32 to vector<10x150xf32>
    %129 = arith.cmpf ogt, %99, %128 : vector<10x150xf32>
    %cst_40 = arith.constant 0.000000e+00 : f32
    %130 = vector.broadcast %cst_40 : f32 to vector<10x150xf32>
    %131 = arith.select %129, %127, %130 : vector<10x150xi1>, vector<10x150xf32>
    %132 = arith.truncf %131 : vector<10x150xf32> to vector<10x150xbf16>
    %cst_41 = arith.constant dense<0.000000e+00> : vector<10x150xf32>
    %133 = tpu.matmul %124, %132, %cst_41 {dimension_numbers = #tpu.dot_dimension_numbers<[0], [0], [1], [1], [0, 1, 1, 1], [], []>} : vector<10x10xbf16>, vector<10x150xbf16>, vector<10x150xf32> -> vector<10x150xf32>
    %cst_42 = arith.constant 0.000000e+00 : f32
    %134 = vector.broadcast %cst_42 : f32 to vector<10x150xf32>
    %135 = arith.cmpf ogt, %94, %134 : vector<10x150xf32>
    %cst_43 = arith.constant 0.000000e+00 : f32
    %136 = vector.broadcast %cst_43 : f32 to vector<10x150xf32>
    %137 = arith.select %135, %133, %136 : vector<10x150xi1>, vector<10x150xf32>
    %138 = arith.truncf %137 : vector<10x150xf32> to vector<10x150xbf16>
    %139 = arith.truncf %118 : vector<1x150xf32> to vector<1x150xbf16>
    %140 = tpu.concatenate %138, %132, %126, %139 in 0 : vector<10x150xbf16>, vector<10x150xbf16>, vector<3x150xbf16>, vector<1x150xbf16> -> vector<24x150xbf16>
    %141 = arith.truncf %94 : vector<10x150xf32> to vector<10x150xbf16>
    %142 = arith.truncf %99 : vector<10x150xf32> to vector<10x150xbf16>
    %143 = tpu.concatenate %3, %141, %142, %4 in 0 : vector<4x150xbf16>, vector<10x150xbf16>, vector<10x150xbf16>, vector<1x150xbf16> -> vector<25x150xbf16>
    %cst_44 = arith.constant dense<0.000000e+00> : vector<24x25xf32>
    %144 = tpu.matmul %140, %143, %cst_44 {dimension_numbers = #tpu.dot_dimension_numbers<[1], [1], [0], [0], [0, 0, 1, 0], [], []>} : vector<24x150xbf16>, vector<25x150xbf16>, vector<24x25xf32> -> vector<24x25xf32>
    %145 = arith.index_cast %c1_i32 : i32 to index
    %c0_45 = arith.constant 0 : index
    %c0_46 = arith.constant 0 : index
    %146 = vector.load %arg4[%145, %c0_45, %c0_46] : memref<8x24x25xf32, #tpu.memory_space<vmem>>, vector<1x24x25xf32>
    %147 = vector.shape_cast %146 : vector<1x24x25xf32> to vector<24x25xf32>
    %148 = vector.shape_cast %144 : vector<24x25xf32> to vector<1x24x25xf32>
    tpu.vector_store %arg4[%145, %c0_45, %c0_46], %148 {strides = array<i32>} : memref<8x24x25xf32, #tpu.memory_space<vmem>>, vector<1x24x25xf32>,
    %c2_i32 = arith.constant 2 : i32
    %149 = arith.index_cast %c2_i32 : i32 to index
    %c0_47 = arith.constant 0 : index
    %c0_48 = arith.constant 0 : index
    %150 = vector.load %arg3[%149, %c0_47, %c0_48] : memref<8x16x12xf32, #tpu.memory_space<vmem>>, vector<1x16x12xf32>
    %151 = vector.shape_cast %150 : vector<1x16x12xf32> to vector<16x12xf32>
    %152 = vector.extract_strided_slice %151 {offsets = [0, 0], sizes = [10, 10], strides = [1, 1]} : vector<16x12xf32> to vector<10x10xf32>
    %153 = vector.extract_strided_slice %151 {offsets = [10, 0], sizes = [3, 10], strides = [1, 1]} : vector<16x12xf32> to vector<3x10xf32>
    %154 = vector.extract_strided_slice %151 {offsets = [0, 10], sizes = [10, 1], strides = [1, 1]} : vector<16x12xf32> to vector<10x1xf32>
    %155 = vector.extract_strided_slice %151 {offsets = [0, 11], sizes = [10, 1], strides = [1, 1]} : vector<16x12xf32> to vector<10x1xf32>
    %156 = vector.extract_strided_slice %151 {offsets = [10, 10], sizes = [3, 1], strides = [1, 1]} : vector<16x12xf32> to vector<3x1xf32>
    %c16_i32_49 = arith.constant 16 : i32
    %157 = arith.muli %c2_i32, %c16_i32_49 : i32
    %158 = tpu.assume_multiple %157, 8 : i32
    %159 = arith.index_cast %158 : i32 to index
    %c0_50 = arith.constant 0 : index
    %160 = vector.load %arg5[%159, %c0_50] : memref<128x150xf32, #tpu.memory_space<vmem>>, vector<10x150xf32>
    %161 = vector.broadcast %154 : vector<10x1xf32> to vector<10x150xf32>
    %162 = arith.addf %160, %161 : vector<10x150xf32>
    %cst_51 = arith.constant 0.000000e+00 : f32
    %163 = vector.broadcast %cst_51 : f32 to vector<10x150xf32>
    %164 = arith.maximumf %162, %163 : vector<10x150xf32>
    %cst_52 = arith.constant dense<0.000000e+00> : vector<10x150xf32>
    %165 = tpu.matmul %152, %164, %cst_52 {dimension_numbers = #tpu.dot_dimension_numbers<[1], [0], [0], [1], [0, 0, 1, 1], [], []>} : vector<10x10xf32>, vector<10x150xf32>, vector<10x150xf32> -> vector<10x150xf32>
    %166 = vector.broadcast %155 : vector<10x1xf32> to vector<10x150xf32>
    %167 = arith.addf %165, %166 : vector<10x150xf32>
    %cst_53 = arith.constant 0.000000e+00 : f32
    %168 = vector.broadcast %cst_53 : f32 to vector<10x150xf32>
    %169 = arith.maximumf %167, %168 : vector<10x150xf32>
    %cst_54 = arith.constant dense<0.000000e+00> : vector<3x150xf32>
    %170 = tpu.matmul %153, %169, %cst_54 {dimension_numbers = #tpu.dot_dimension_numbers<[1], [0], [0], [1], [0, 0, 1, 1], [], []>} : vector<3x10xf32>, vector<10x150xf32>, vector<3x150xf32> -> vector<3x150xf32>
    %171 = vector.broadcast %156 : vector<3x1xf32> to vector<3x150xf32>
    %172 = arith.addf %170, %171 : vector<3x150xf32>
    %cst_55 = arith.constant dense<0xFF800000> : vector<150xf32>
    %173 = vector.multi_reduction <maximumf>, %172, %cst_55 [0] : vector<3x150xf32> to vector<150xf32>
    %174 = vector.shape_cast %173 : vector<150xf32> to vector<1x150xf32>
    %175 = vector.broadcast %174 : vector<1x150xf32> to vector<3x150xf32>
    %176 = arith.subf %172, %175 : vector<3x150xf32>
    %177 = math.exp %176 : vector<3x150xf32>
    %cst_56 = arith.constant dense<0.000000e+00> : vector<150xf32>
    %178 = vector.multi_reduction <add>, %177, %cst_56 [0] : vector<3x150xf32> to vector<150xf32>
    %179 = vector.shape_cast %178 : vector<150xf32> to vector<1x150xf32>
    %180 = tpu.reciprocal %179 {approx = true} : vector<1x150xf32> -> vector<1x150xf32>
    %181 = arith.mulf %2, %172 : vector<3x150xf32>
    %cst_57 = arith.constant dense<0.000000e+00> : vector<150xf32>
    %182 = vector.multi_reduction <add>, %181, %cst_57 [0] : vector<3x150xf32> to vector<150xf32>
    %183 = vector.shape_cast %182 : vector<150xf32> to vector<1x150xf32>
    %184 = math.log %179 : vector<1x150xf32>
    %185 = arith.addf %184, %174 : vector<1x150xf32>
    %186 = arith.subf %185, %183 : vector<1x150xf32>
    %187 = vector.broadcast %cst_7 : f32 to vector<1x150xf32>
    %188 = arith.mulf %186, %187 : vector<1x150xf32>
    %189 = vector.broadcast %180 : vector<1x150xf32> to vector<3x150xf32>
    %190 = arith.mulf %177, %189 : vector<3x150xf32>
    %191 = arith.subf %190, %2 : vector<3x150xf32>
    %192 = vector.broadcast %cst_7 : f32 to vector<3x150xf32>
    %193 = arith.mulf %191, %192 : vector<3x150xf32>
    %194 = arith.truncf %152 : vector<10x10xf32> to vector<10x10xbf16>
    %195 = arith.truncf %153 : vector<3x10xf32> to vector<3x10xbf16>
    %196 = arith.truncf %193 : vector<3x150xf32> to vector<3x150xbf16>
    %cst_58 = arith.constant dense<0.000000e+00> : vector<10x150xf32>
    %197 = tpu.matmul %195, %196, %cst_58 {dimension_numbers = #tpu.dot_dimension_numbers<[0], [0], [1], [1], [0, 1, 1, 1], [], []>} : vector<3x10xbf16>, vector<3x150xbf16>, vector<10x150xf32> -> vector<10x150xf32>
    %cst_59 = arith.constant 0.000000e+00 : f32
    %198 = vector.broadcast %cst_59 : f32 to vector<10x150xf32>
    %199 = arith.cmpf ogt, %169, %198 : vector<10x150xf32>
    %cst_60 = arith.constant 0.000000e+00 : f32
    %200 = vector.broadcast %cst_60 : f32 to vector<10x150xf32>
    %201 = arith.select %199, %197, %200 : vector<10x150xi1>, vector<10x150xf32>
    %202 = arith.truncf %201 : vector<10x150xf32> to vector<10x150xbf16>
    %cst_61 = arith.constant dense<0.000000e+00> : vector<10x150xf32>
    %203 = tpu.matmul %194, %202, %cst_61 {dimension_numbers = #tpu.dot_dimension_numbers<[0], [0], [1], [1], [0, 1, 1, 1], [], []>} : vector<10x10xbf16>, vector<10x150xbf16>, vector<10x150xf32> -> vector<10x150xf32>
    %cst_62 = arith.constant 0.000000e+00 : f32
    %204 = vector.broadcast %cst_62 : f32 to vector<10x150xf32>
    %205 = arith.cmpf ogt, %164, %204 : vector<10x150xf32>
    %cst_63 = arith.constant 0.000000e+00 : f32
    %206 = vector.broadcast %cst_63 : f32 to vector<10x150xf32>
    %207 = arith.select %205, %203, %206 : vector<10x150xi1>, vector<10x150xf32>
    %208 = arith.truncf %207 : vector<10x150xf32> to vector<10x150xbf16>
    %209 = arith.truncf %188 : vector<1x150xf32> to vector<1x150xbf16>
    %210 = tpu.concatenate %208, %202, %196, %209 in 0 : vector<10x150xbf16>, vector<10x150xbf16>, vector<3x150xbf16>, vector<1x150xbf16> -> vector<24x150xbf16>
    %211 = arith.truncf %164 : vector<10x150xf32> to vector<10x150xbf16>
    %212 = arith.truncf %169 : vector<10x150xf32> to vector<10x150xbf16>
    %213 = tpu.concatenate %3, %211, %212, %4 in 0 : vector<4x150xbf16>, vector<10x150xbf16>, vector<10x150xbf16>, vector<1x150xbf16> -> vector<25x150xbf16>
    %cst_64 = arith.constant dense<0.000000e+00> : vector<24x25xf32>
    %214 = tpu.matmul %210, %213, %cst_64 {dimension_numbers = #tpu.dot_dimension_numbers<[1], [1], [0], [0], [0, 0, 1, 0], [], []>} : vector<24x150xbf16>, vector<25x150xbf16>, vector<24x25xf32> -> vector<24x25xf32>
    %215 = arith.index_cast %c2_i32 : i32 to index
    %c0_65 = arith.constant 0 : index
    %c0_66 = arith.constant 0 : index
    %216 = vector.load %arg4[%215, %c0_65, %c0_66] : memref<8x24x25xf32, #tpu.memory_space<vmem>>, vector<1x24x25xf32>
    %217 = vector.shape_cast %216 : vector<1x24x25xf32> to vector<24x25xf32>
    %218 = vector.shape_cast %214 : vector<24x25xf32> to vector<1x24x25xf32>
    tpu.vector_store %arg4[%215, %c0_65, %c0_66], %218 {strides = array<i32>} : memref<8x24x25xf32, #tpu.memory_space<vmem>>, vector<1x24x25xf32>,
    %c3_i32 = arith.constant 3 : i32
    %219 = arith.index_cast %c3_i32 : i32 to index
    %c0_67 = arith.constant 0 : index
    %c0_68 = arith.constant 0 : index
    %220 = vector.load %arg3[%219, %c0_67, %c0_68] : memref<8x16x12xf32, #tpu.memory_space<vmem>>, vector<1x16x12xf32>
    %221 = vector.shape_cast %220 : vector<1x16x12xf32> to vector<16x12xf32>
    %222 = vector.extract_strided_slice %221 {offsets = [0, 0], sizes = [10, 10], strides = [1, 1]} : vector<16x12xf32> to vector<10x10xf32>
    %223 = vector.extract_strided_slice %221 {offsets = [10, 0], sizes = [3, 10], strides = [1, 1]} : vector<16x12xf32> to vector<3x10xf32>
    %224 = vector.extract_strided_slice %221 {offsets = [0, 10], sizes = [10, 1], strides = [1, 1]} : vector<16x12xf32> to vector<10x1xf32>
    %225 = vector.extract_strided_slice %221 {offsets = [0, 11], sizes = [10, 1], strides = [1, 1]} : vector<16x12xf32> to vector<10x1xf32>
    %226 = vector.extract_strided_slice %221 {offsets = [10, 10], sizes = [3, 1], strides = [1, 1]} : vector<16x12xf32> to vector<3x1xf32>
    %c16_i32_69 = arith.constant 16 : i32
    %227 = arith.muli %c3_i32, %c16_i32_69 : i32
    %228 = tpu.assume_multiple %227, 8 : i32
    %229 = arith.index_cast %228 : i32 to index
    %c0_70 = arith.constant 0 : index
    %230 = vector.load %arg5[%229, %c0_70] : memref<128x150xf32, #tpu.memory_space<vmem>>, vector<10x150xf32>
    %231 = vector.broadcast %224 : vector<10x1xf32> to vector<10x150xf32>
    %232 = arith.addf %230, %231 : vector<10x150xf32>
    %cst_71 = arith.constant 0.000000e+00 : f32
    %233 = vector.broadcast %cst_71 : f32 to vector<10x150xf32>
    %234 = arith.maximumf %232, %233 : vector<10x150xf32>
    %cst_72 = arith.constant dense<0.000000e+00> : vector<10x150xf32>
    %235 = tpu.matmul %222, %234, %cst_72 {dimension_numbers = #tpu.dot_dimension_numbers<[1], [0], [0], [1], [0, 0, 1, 1], [], []>} : vector<10x10xf32>, vector<10x150xf32>, vector<10x150xf32> -> vector<10x150xf32>
    %236 = vector.broadcast %225 : vector<10x1xf32> to vector<10x150xf32>
    %237 = arith.addf %235, %236 : vector<10x150xf32>
    %cst_73 = arith.constant 0.000000e+00 : f32
    %238 = vector.broadcast %cst_73 : f32 to vector<10x150xf32>
    %239 = arith.maximumf %237, %238 : vector<10x150xf32>
    %cst_74 = arith.constant dense<0.000000e+00> : vector<3x150xf32>
    %240 = tpu.matmul %223, %239, %cst_74 {dimension_numbers = #tpu.dot_dimension_numbers<[1], [0], [0], [1], [0, 0, 1, 1], [], []>} : vector<3x10xf32>, vector<10x150xf32>, vector<3x150xf32> -> vector<3x150xf32>
    %241 = vector.broadcast %226 : vector<3x1xf32> to vector<3x150xf32>
    %242 = arith.addf %240, %241 : vector<3x150xf32>
    %cst_75 = arith.constant dense<0xFF800000> : vector<150xf32>
    %243 = vector.multi_reduction <maximumf>, %242, %cst_75 [0] : vector<3x150xf32> to vector<150xf32>
    %244 = vector.shape_cast %243 : vector<150xf32> to vector<1x150xf32>
    %245 = vector.broadcast %244 : vector<1x150xf32> to vector<3x150xf32>
    %246 = arith.subf %242, %245 : vector<3x150xf32>
    %247 = math.exp %246 : vector<3x150xf32>
    %cst_76 = arith.constant dense<0.000000e+00> : vector<150xf32>
    %248 = vector.multi_reduction <add>, %247, %cst_76 [0] : vector<3x150xf32> to vector<150xf32>
    %249 = vector.shape_cast %248 : vector<150xf32> to vector<1x150xf32>
    %250 = tpu.reciprocal %249 {approx = true} : vector<1x150xf32> -> vector<1x150xf32>
    %251 = arith.mulf %2, %242 : vector<3x150xf32>
    %cst_77 = arith.constant dense<0.000000e+00> : vector<150xf32>
    %252 = vector.multi_reduction <add>, %251, %cst_77 [0] : vector<3x150xf32> to vector<150xf32>
    %253 = vector.shape_cast %252 : vector<150xf32> to vector<1x150xf32>
    %254 = math.log %249 : vector<1x150xf32>
    %255 = arith.addf %254, %244 : vector<1x150xf32>
    %256 = arith.subf %255, %253 : vector<1x150xf32>
    %257 = vector.broadcast %cst_7 : f32 to vector<1x150xf32>
    %258 = arith.mulf %256, %257 : vector<1x150xf32>
    %259 = vector.broadcast %250 : vector<1x150xf32> to vector<3x150xf32>
    %260 = arith.mulf %247, %259 : vector<3x150xf32>
    %261 = arith.subf %260, %2 : vector<3x150xf32>
    %262 = vector.broadcast %cst_7 : f32 to vector<3x150xf32>
    %263 = arith.mulf %261, %262 : vector<3x150xf32>
    %264 = arith.truncf %222 : vector<10x10xf32> to vector<10x10xbf16>
    %265 = arith.truncf %223 : vector<3x10xf32> to vector<3x10xbf16>
    %266 = arith.truncf %263 : vector<3x150xf32> to vector<3x150xbf16>
    %cst_78 = arith.constant dense<0.000000e+00> : vector<10x150xf32>
    %267 = tpu.matmul %265, %266, %cst_78 {dimension_numbers = #tpu.dot_dimension_numbers<[0], [0], [1], [1], [0, 1, 1, 1], [], []>} : vector<3x10xbf16>, vector<3x150xbf16>, vector<10x150xf32> -> vector<10x150xf32>
    %cst_79 = arith.constant 0.000000e+00 : f32
    %268 = vector.broadcast %cst_79 : f32 to vector<10x150xf32>
    %269 = arith.cmpf ogt, %239, %268 : vector<10x150xf32>
    %cst_80 = arith.constant 0.000000e+00 : f32
    %270 = vector.broadcast %cst_80 : f32 to vector<10x150xf32>
    %271 = arith.select %269, %267, %270 : vector<10x150xi1>, vector<10x150xf32>
    %272 = arith.truncf %271 : vector<10x150xf32> to vector<10x150xbf16>
    %cst_81 = arith.constant dense<0.000000e+00> : vector<10x150xf32>
    %273 = tpu.matmul %264, %272, %cst_81 {dimension_numbers = #tpu.dot_dimension_numbers<[0], [0], [1], [1], [0, 1, 1, 1], [], []>} : vector<10x10xbf16>, vector<10x150xbf16>, vector<10x150xf32> -> vector<10x150xf32>
    %cst_82 = arith.constant 0.000000e+00 : f32
    %274 = vector.broadcast %cst_82 : f32 to vector<10x150xf32>
    %275 = arith.cmpf ogt, %234, %274 : vector<10x150xf32>
    %cst_83 = arith.constant 0.000000e+00 : f32
    %276 = vector.broadcast %cst_83 : f32 to vector<10x150xf32>
    %277 = arith.select %275, %273, %276 : vector<10x150xi1>, vector<10x150xf32>
    %278 = arith.truncf %277 : vector<10x150xf32> to vector<10x150xbf16>
    %279 = arith.truncf %258 : vector<1x150xf32> to vector<1x150xbf16>
    %280 = tpu.concatenate %278, %272, %266, %279 in 0 : vector<10x150xbf16>, vector<10x150xbf16>, vector<3x150xbf16>, vector<1x150xbf16> -> vector<24x150xbf16>
    %281 = arith.truncf %234 : vector<10x150xf32> to vector<10x150xbf16>
    %282 = arith.truncf %239 : vector<10x150xf32> to vector<10x150xbf16>
    %283 = tpu.concatenate %3, %281, %282, %4 in 0 : vector<4x150xbf16>, vector<10x150xbf16>, vector<10x150xbf16>, vector<1x150xbf16> -> vector<25x150xbf16>
    %cst_84 = arith.constant dense<0.000000e+00> : vector<24x25xf32>
    %284 = tpu.matmul %280, %283, %cst_84 {dimension_numbers = #tpu.dot_dimension_numbers<[1], [1], [0], [0], [0, 0, 1, 0], [], []>} : vector<24x150xbf16>, vector<25x150xbf16>, vector<24x25xf32> -> vector<24x25xf32>
    %285 = arith.index_cast %c3_i32 : i32 to index
    %c0_85 = arith.constant 0 : index
    %c0_86 = arith.constant 0 : index
    %286 = vector.load %arg4[%285, %c0_85, %c0_86] : memref<8x24x25xf32, #tpu.memory_space<vmem>>, vector<1x24x25xf32>
    %287 = vector.shape_cast %286 : vector<1x24x25xf32> to vector<24x25xf32>
    %288 = vector.shape_cast %284 : vector<24x25xf32> to vector<1x24x25xf32>
    tpu.vector_store %arg4[%285, %c0_85, %c0_86], %288 {strides = array<i32>} : memref<8x24x25xf32, #tpu.memory_space<vmem>>, vector<1x24x25xf32>,
    %c4_i32 = arith.constant 4 : i32
    %289 = arith.index_cast %c4_i32 : i32 to index
    %c0_87 = arith.constant 0 : index
    %c0_88 = arith.constant 0 : index
    %290 = vector.load %arg3[%289, %c0_87, %c0_88] : memref<8x16x12xf32, #tpu.memory_space<vmem>>, vector<1x16x12xf32>
    %291 = vector.shape_cast %290 : vector<1x16x12xf32> to vector<16x12xf32>
    %292 = vector.extract_strided_slice %291 {offsets = [0, 0], sizes = [10, 10], strides = [1, 1]} : vector<16x12xf32> to vector<10x10xf32>
    %293 = vector.extract_strided_slice %291 {offsets = [10, 0], sizes = [3, 10], strides = [1, 1]} : vector<16x12xf32> to vector<3x10xf32>
    %294 = vector.extract_strided_slice %291 {offsets = [0, 10], sizes = [10, 1], strides = [1, 1]} : vector<16x12xf32> to vector<10x1xf32>
    %295 = vector.extract_strided_slice %291 {offsets = [0, 11], sizes = [10, 1], strides = [1, 1]} : vector<16x12xf32> to vector<10x1xf32>
    %296 = vector.extract_strided_slice %291 {offsets = [10, 10], sizes = [3, 1], strides = [1, 1]} : vector<16x12xf32> to vector<3x1xf32>
    %c16_i32_89 = arith.constant 16 : i32
    %297 = arith.muli %c4_i32, %c16_i32_89 : i32
    %298 = tpu.assume_multiple %297, 8 : i32
    %299 = arith.index_cast %298 : i32 to index
    %c0_90 = arith.constant 0 : index
    %300 = vector.load %arg5[%299, %c0_90] : memref<128x150xf32, #tpu.memory_space<vmem>>, vector<10x150xf32>
    %301 = vector.broadcast %294 : vector<10x1xf32> to vector<10x150xf32>
    %302 = arith.addf %300, %301 : vector<10x150xf32>
    %cst_91 = arith.constant 0.000000e+00 : f32
    %303 = vector.broadcast %cst_91 : f32 to vector<10x150xf32>
    %304 = arith.maximumf %302, %303 : vector<10x150xf32>
    %cst_92 = arith.constant dense<0.000000e+00> : vector<10x150xf32>
    %305 = tpu.matmul %292, %304, %cst_92 {dimension_numbers = #tpu.dot_dimension_numbers<[1], [0], [0], [1], [0, 0, 1, 1], [], []>} : vector<10x10xf32>, vector<10x150xf32>, vector<10x150xf32> -> vector<10x150xf32>
    %306 = vector.broadcast %295 : vector<10x1xf32> to vector<10x150xf32>
    %307 = arith.addf %305, %306 : vector<10x150xf32>
    %cst_93 = arith.constant 0.000000e+00 : f32
    %308 = vector.broadcast %cst_93 : f32 to vector<10x150xf32>
    %309 = arith.maximumf %307, %308 : vector<10x150xf32>
    %cst_94 = arith.constant dense<0.000000e+00> : vector<3x150xf32>
    %310 = tpu.matmul %293, %309, %cst_94 {dimension_numbers = #tpu.dot_dimension_numbers<[1], [0], [0], [1], [0, 0, 1, 1], [], []>} : vector<3x10xf32>, vector<10x150xf32>, vector<3x150xf32> -> vector<3x150xf32>
    %311 = vector.broadcast %296 : vector<3x1xf32> to vector<3x150xf32>
    %312 = arith.addf %310, %311 : vector<3x150xf32>
    %cst_95 = arith.constant dense<0xFF800000> : vector<150xf32>
    %313 = vector.multi_reduction <maximumf>, %312, %cst_95 [0] : vector<3x150xf32> to vector<150xf32>
    %314 = vector.shape_cast %313 : vector<150xf32> to vector<1x150xf32>
    %315 = vector.broadcast %314 : vector<1x150xf32> to vector<3x150xf32>
    %316 = arith.subf %312, %315 : vector<3x150xf32>
    %317 = math.exp %316 : vector<3x150xf32>
    %cst_96 = arith.constant dense<0.000000e+00> : vector<150xf32>
    %318 = vector.multi_reduction <add>, %317, %cst_96 [0] : vector<3x150xf32> to vector<150xf32>
    %319 = vector.shape_cast %318 : vector<150xf32> to vector<1x150xf32>
    %320 = tpu.reciprocal %319 {approx = true} : vector<1x150xf32> -> vector<1x150xf32>
    %321 = arith.mulf %2, %312 : vector<3x150xf32>
    %cst_97 = arith.constant dense<0.000000e+00> : vector<150xf32>
    %322 = vector.multi_reduction <add>, %321, %cst_97 [0] : vector<3x150xf32> to vector<150xf32>
    %323 = vector.shape_cast %322 : vector<150xf32> to vector<1x150xf32>
    %324 = math.log %319 : vector<1x150xf32>
    %325 = arith.addf %324, %314 : vector<1x150xf32>
    %326 = arith.subf %325, %323 : vector<1x150xf32>
    %327 = vector.broadcast %cst_7 : f32 to vector<1x150xf32>
    %328 = arith.mulf %326, %327 : vector<1x150xf32>
    %329 = vector.broadcast %320 : vector<1x150xf32> to vector<3x150xf32>
    %330 = arith.mulf %317, %329 : vector<3x150xf32>
    %331 = arith.subf %330, %2 : vector<3x150xf32>
    %332 = vector.broadcast %cst_7 : f32 to vector<3x150xf32>
    %333 = arith.mulf %331, %332 : vector<3x150xf32>
    %334 = arith.truncf %292 : vector<10x10xf32> to vector<10x10xbf16>
    %335 = arith.truncf %293 : vector<3x10xf32> to vector<3x10xbf16>
    %336 = arith.truncf %333 : vector<3x150xf32> to vector<3x150xbf16>
    %cst_98 = arith.constant dense<0.000000e+00> : vector<10x150xf32>
    %337 = tpu.matmul %335, %336, %cst_98 {dimension_numbers = #tpu.dot_dimension_numbers<[0], [0], [1], [1], [0, 1, 1, 1], [], []>} : vector<3x10xbf16>, vector<3x150xbf16>, vector<10x150xf32> -> vector<10x150xf32>
    %cst_99 = arith.constant 0.000000e+00 : f32
    %338 = vector.broadcast %cst_99 : f32 to vector<10x150xf32>
    %339 = arith.cmpf ogt, %309, %338 : vector<10x150xf32>
    %cst_100 = arith.constant 0.000000e+00 : f32
    %340 = vector.broadcast %cst_100 : f32 to vector<10x150xf32>
    %341 = arith.select %339, %337, %340 : vector<10x150xi1>, vector<10x150xf32>
    %342 = arith.truncf %341 : vector<10x150xf32> to vector<10x150xbf16>
    %cst_101 = arith.constant dense<0.000000e+00> : vector<10x150xf32>
    %343 = tpu.matmul %334, %342, %cst_101 {dimension_numbers = #tpu.dot_dimension_numbers<[0], [0], [1], [1], [0, 1, 1, 1], [], []>} : vector<10x10xbf16>, vector<10x150xbf16>, vector<10x150xf32> -> vector<10x150xf32>
    %cst_102 = arith.constant 0.000000e+00 : f32
    %344 = vector.broadcast %cst_102 : f32 to vector<10x150xf32>
    %345 = arith.cmpf ogt, %304, %344 : vector<10x150xf32>
    %cst_103 = arith.constant 0.000000e+00 : f32
    %346 = vector.broadcast %cst_103 : f32 to vector<10x150xf32>
    %347 = arith.select %345, %343, %346 : vector<10x150xi1>, vector<10x150xf32>
    %348 = arith.truncf %347 : vector<10x150xf32> to vector<10x150xbf16>
    %349 = arith.truncf %328 : vector<1x150xf32> to vector<1x150xbf16>
    %350 = tpu.concatenate %348, %342, %336, %349 in 0 : vector<10x150xbf16>, vector<10x150xbf16>, vector<3x150xbf16>, vector<1x150xbf16> -> vector<24x150xbf16>
    %351 = arith.truncf %304 : vector<10x150xf32> to vector<10x150xbf16>
    %352 = arith.truncf %309 : vector<10x150xf32> to vector<10x150xbf16>
    %353 = tpu.concatenate %3, %351, %352, %4 in 0 : vector<4x150xbf16>, vector<10x150xbf16>, vector<10x150xbf16>, vector<1x150xbf16> -> vector<25x150xbf16>
    %cst_104 = arith.constant dense<0.000000e+00> : vector<24x25xf32>
    %354 = tpu.matmul %350, %353, %cst_104 {dimension_numbers = #tpu.dot_dimension_numbers<[1], [1], [0], [0], [0, 0, 1, 0], [], []>} : vector<24x150xbf16>, vector<25x150xbf16>, vector<24x25xf32> -> vector<24x25xf32>
    %355 = arith.index_cast %c4_i32 : i32 to index
    %c0_105 = arith.constant 0 : index
    %c0_106 = arith.constant 0 : index
    %356 = vector.load %arg4[%355, %c0_105, %c0_106] : memref<8x24x25xf32, #tpu.memory_space<vmem>>, vector<1x24x25xf32>
    %357 = vector.shape_cast %356 : vector<1x24x25xf32> to vector<24x25xf32>
    %358 = vector.shape_cast %354 : vector<24x25xf32> to vector<1x24x25xf32>
    tpu.vector_store %arg4[%355, %c0_105, %c0_106], %358 {strides = array<i32>} : memref<8x24x25xf32, #tpu.memory_space<vmem>>, vector<1x24x25xf32>,
    %c5_i32 = arith.constant 5 : i32
    %359 = arith.index_cast %c5_i32 : i32 to index
    %c0_107 = arith.constant 0 : index
    %c0_108 = arith.constant 0 : index
    %360 = vector.load %arg3[%359, %c0_107, %c0_108] : memref<8x16x12xf32, #tpu.memory_space<vmem>>, vector<1x16x12xf32>
    %361 = vector.shape_cast %360 : vector<1x16x12xf32> to vector<16x12xf32>
    %362 = vector.extract_strided_slice %361 {offsets = [0, 0], sizes = [10, 10], strides = [1, 1]} : vector<16x12xf32> to vector<10x10xf32>
    %363 = vector.extract_strided_slice %361 {offsets = [10, 0], sizes = [3, 10], strides = [1, 1]} : vector<16x12xf32> to vector<3x10xf32>
    %364 = vector.extract_strided_slice %361 {offsets = [0, 10], sizes = [10, 1], strides = [1, 1]} : vector<16x12xf32> to vector<10x1xf32>
    %365 = vector.extract_strided_slice %361 {offsets = [0, 11], sizes = [10, 1], strides = [1, 1]} : vector<16x12xf32> to vector<10x1xf32>
    %366 = vector.extract_strided_slice %361 {offsets = [10, 10], sizes = [3, 1], strides = [1, 1]} : vector<16x12xf32> to vector<3x1xf32>
    %c16_i32_109 = arith.constant 16 : i32
    %367 = arith.muli %c5_i32, %c16_i32_109 : i32
    %368 = tpu.assume_multiple %367, 8 : i32
    %369 = arith.index_cast %368 : i32 to index
    %c0_110 = arith.constant 0 : index
    %370 = vector.load %arg5[%369, %c0_110] : memref<128x150xf32, #tpu.memory_space<vmem>>, vector<10x150xf32>
    %371 = vector.broadcast %364 : vector<10x1xf32> to vector<10x150xf32>
    %372 = arith.addf %370, %371 : vector<10x150xf32>
    %cst_111 = arith.constant 0.000000e+00 : f32
    %373 = vector.broadcast %cst_111 : f32 to vector<10x150xf32>
    %374 = arith.maximumf %372, %373 : vector<10x150xf32>
    %cst_112 = arith.constant dense<0.000000e+00> : vector<10x150xf32>
    %375 = tpu.matmul %362, %374, %cst_112 {dimension_numbers = #tpu.dot_dimension_numbers<[1], [0], [0], [1], [0, 0, 1, 1], [], []>} : vector<10x10xf32>, vector<10x150xf32>, vector<10x150xf32> -> vector<10x150xf32>
    %376 = vector.broadcast %365 : vector<10x1xf32> to vector<10x150xf32>
    %377 = arith.addf %375, %376 : vector<10x150xf32>
    %cst_113 = arith.constant 0.000000e+00 : f32
    %378 = vector.broadcast %cst_113 : f32 to vector<10x150xf32>
    %379 = arith.maximumf %377, %378 : vector<10x150xf32>
    %cst_114 = arith.constant dense<0.000000e+00> : vector<3x150xf32>
    %380 = tpu.matmul %363, %379, %cst_114 {dimension_numbers = #tpu.dot_dimension_numbers<[1], [0], [0], [1], [0, 0, 1, 1], [], []>} : vector<3x10xf32>, vector<10x150xf32>, vector<3x150xf32> -> vector<3x150xf32>
    %381 = vector.broadcast %366 : vector<3x1xf32> to vector<3x150xf32>
    %382 = arith.addf %380, %381 : vector<3x150xf32>
    %cst_115 = arith.constant dense<0xFF800000> : vector<150xf32>
    %383 = vector.multi_reduction <maximumf>, %382, %cst_115 [0] : vector<3x150xf32> to vector<150xf32>
    %384 = vector.shape_cast %383 : vector<150xf32> to vector<1x150xf32>
    %385 = vector.broadcast %384 : vector<1x150xf32> to vector<3x150xf32>
    %386 = arith.subf %382, %385 : vector<3x150xf32>
    %387 = math.exp %386 : vector<3x150xf32>
    %cst_116 = arith.constant dense<0.000000e+00> : vector<150xf32>
    %388 = vector.multi_reduction <add>, %387, %cst_116 [0] : vector<3x150xf32> to vector<150xf32>
    %389 = vector.shape_cast %388 : vector<150xf32> to vector<1x150xf32>
    %390 = tpu.reciprocal %389 {approx = true} : vector<1x150xf32> -> vector<1x150xf32>
    %391 = arith.mulf %2, %382 : vector<3x150xf32>
    %cst_117 = arith.constant dense<0.000000e+00> : vector<150xf32>
    %392 = vector.multi_reduction <add>, %391, %cst_117 [0] : vector<3x150xf32> to vector<150xf32>
    %393 = vector.shape_cast %392 : vector<150xf32> to vector<1x150xf32>
    %394 = math.log %389 : vector<1x150xf32>
    %395 = arith.addf %394, %384 : vector<1x150xf32>
    %396 = arith.subf %395, %393 : vector<1x150xf32>
    %397 = vector.broadcast %cst_7 : f32 to vector<1x150xf32>
    %398 = arith.mulf %396, %397 : vector<1x150xf32>
    %399 = vector.broadcast %390 : vector<1x150xf32> to vector<3x150xf32>
    %400 = arith.mulf %387, %399 : vector<3x150xf32>
    %401 = arith.subf %400, %2 : vector<3x150xf32>
    %402 = vector.broadcast %cst_7 : f32 to vector<3x150xf32>
    %403 = arith.mulf %401, %402 : vector<3x150xf32>
    %404 = arith.truncf %362 : vector<10x10xf32> to vector<10x10xbf16>
    %405 = arith.truncf %363 : vector<3x10xf32> to vector<3x10xbf16>
    %406 = arith.truncf %403 : vector<3x150xf32> to vector<3x150xbf16>
    %cst_118 = arith.constant dense<0.000000e+00> : vector<10x150xf32>
    %407 = tpu.matmul %405, %406, %cst_118 {dimension_numbers = #tpu.dot_dimension_numbers<[0], [0], [1], [1], [0, 1, 1, 1], [], []>} : vector<3x10xbf16>, vector<3x150xbf16>, vector<10x150xf32> -> vector<10x150xf32>
    %cst_119 = arith.constant 0.000000e+00 : f32
    %408 = vector.broadcast %cst_119 : f32 to vector<10x150xf32>
    %409 = arith.cmpf ogt, %379, %408 : vector<10x150xf32>
    %cst_120 = arith.constant 0.000000e+00 : f32
    %410 = vector.broadcast %cst_120 : f32 to vector<10x150xf32>
    %411 = arith.select %409, %407, %410 : vector<10x150xi1>, vector<10x150xf32>
    %412 = arith.truncf %411 : vector<10x150xf32> to vector<10x150xbf16>
    %cst_121 = arith.constant dense<0.000000e+00> : vector<10x150xf32>
    %413 = tpu.matmul %404, %412, %cst_121 {dimension_numbers = #tpu.dot_dimension_numbers<[0], [0], [1], [1], [0, 1, 1, 1], [], []>} : vector<10x10xbf16>, vector<10x150xbf16>, vector<10x150xf32> -> vector<10x150xf32>
    %cst_122 = arith.constant 0.000000e+00 : f32
    %414 = vector.broadcast %cst_122 : f32 to vector<10x150xf32>
    %415 = arith.cmpf ogt, %374, %414 : vector<10x150xf32>
    %cst_123 = arith.constant 0.000000e+00 : f32
    %416 = vector.broadcast %cst_123 : f32 to vector<10x150xf32>
    %417 = arith.select %415, %413, %416 : vector<10x150xi1>, vector<10x150xf32>
    %418 = arith.truncf %417 : vector<10x150xf32> to vector<10x150xbf16>
    %419 = arith.truncf %398 : vector<1x150xf32> to vector<1x150xbf16>
    %420 = tpu.concatenate %418, %412, %406, %419 in 0 : vector<10x150xbf16>, vector<10x150xbf16>, vector<3x150xbf16>, vector<1x150xbf16> -> vector<24x150xbf16>
    %421 = arith.truncf %374 : vector<10x150xf32> to vector<10x150xbf16>
    %422 = arith.truncf %379 : vector<10x150xf32> to vector<10x150xbf16>
    %423 = tpu.concatenate %3, %421, %422, %4 in 0 : vector<4x150xbf16>, vector<10x150xbf16>, vector<10x150xbf16>, vector<1x150xbf16> -> vector<25x150xbf16>
    %cst_124 = arith.constant dense<0.000000e+00> : vector<24x25xf32>
    %424 = tpu.matmul %420, %423, %cst_124 {dimension_numbers = #tpu.dot_dimension_numbers<[1], [1], [0], [0], [0, 0, 1, 0], [], []>} : vector<24x150xbf16>, vector<25x150xbf16>, vector<24x25xf32> -> vector<24x25xf32>
    %425 = arith.index_cast %c5_i32 : i32 to index
    %c0_125 = arith.constant 0 : index
    %c0_126 = arith.constant 0 : index
    %426 = vector.load %arg4[%425, %c0_125, %c0_126] : memref<8x24x25xf32, #tpu.memory_space<vmem>>, vector<1x24x25xf32>
    %427 = vector.shape_cast %426 : vector<1x24x25xf32> to vector<24x25xf32>
    %428 = vector.shape_cast %424 : vector<24x25xf32> to vector<1x24x25xf32>
    tpu.vector_store %arg4[%425, %c0_125, %c0_126], %428 {strides = array<i32>} : memref<8x24x25xf32, #tpu.memory_space<vmem>>, vector<1x24x25xf32>,
    %c6_i32 = arith.constant 6 : i32
    %429 = arith.index_cast %c6_i32 : i32 to index
    %c0_127 = arith.constant 0 : index
    %c0_128 = arith.constant 0 : index
    %430 = vector.load %arg3[%429, %c0_127, %c0_128] : memref<8x16x12xf32, #tpu.memory_space<vmem>>, vector<1x16x12xf32>
    %431 = vector.shape_cast %430 : vector<1x16x12xf32> to vector<16x12xf32>
    %432 = vector.extract_strided_slice %431 {offsets = [0, 0], sizes = [10, 10], strides = [1, 1]} : vector<16x12xf32> to vector<10x10xf32>
    %433 = vector.extract_strided_slice %431 {offsets = [10, 0], sizes = [3, 10], strides = [1, 1]} : vector<16x12xf32> to vector<3x10xf32>
    %434 = vector.extract_strided_slice %431 {offsets = [0, 10], sizes = [10, 1], strides = [1, 1]} : vector<16x12xf32> to vector<10x1xf32>
    %435 = vector.extract_strided_slice %431 {offsets = [0, 11], sizes = [10, 1], strides = [1, 1]} : vector<16x12xf32> to vector<10x1xf32>
    %436 = vector.extract_strided_slice %431 {offsets = [10, 10], sizes = [3, 1], strides = [1, 1]} : vector<16x12xf32> to vector<3x1xf32>
    %c16_i32_129 = arith.constant 16 : i32
    %437 = arith.muli %c6_i32, %c16_i32_129 : i32
    %438 = tpu.assume_multiple %437, 8 : i32
    %439 = arith.index_cast %438 : i32 to index
    %c0_130 = arith.constant 0 : index
    %440 = vector.load %arg5[%439, %c0_130] : memref<128x150xf32, #tpu.memory_space<vmem>>, vector<10x150xf32>
    %441 = vector.broadcast %434 : vector<10x1xf32> to vector<10x150xf32>
    %442 = arith.addf %440, %441 : vector<10x150xf32>
    %cst_131 = arith.constant 0.000000e+00 : f32
    %443 = vector.broadcast %cst_131 : f32 to vector<10x150xf32>
    %444 = arith.maximumf %442, %443 : vector<10x150xf32>
    %cst_132 = arith.constant dense<0.000000e+00> : vector<10x150xf32>
    %445 = tpu.matmul %432, %444, %cst_132 {dimension_numbers = #tpu.dot_dimension_numbers<[1], [0], [0], [1], [0, 0, 1, 1], [], []>} : vector<10x10xf32>, vector<10x150xf32>, vector<10x150xf32> -> vector<10x150xf32>
    %446 = vector.broadcast %435 : vector<10x1xf32> to vector<10x150xf32>
    %447 = arith.addf %445, %446 : vector<10x150xf32>
    %cst_133 = arith.constant 0.000000e+00 : f32
    %448 = vector.broadcast %cst_133 : f32 to vector<10x150xf32>
    %449 = arith.maximumf %447, %448 : vector<10x150xf32>
    %cst_134 = arith.constant dense<0.000000e+00> : vector<3x150xf32>
    %450 = tpu.matmul %433, %449, %cst_134 {dimension_numbers = #tpu.dot_dimension_numbers<[1], [0], [0], [1], [0, 0, 1, 1], [], []>} : vector<3x10xf32>, vector<10x150xf32>, vector<3x150xf32> -> vector<3x150xf32>
    %451 = vector.broadcast %436 : vector<3x1xf32> to vector<3x150xf32>
    %452 = arith.addf %450, %451 : vector<3x150xf32>
    %cst_135 = arith.constant dense<0xFF800000> : vector<150xf32>
    %453 = vector.multi_reduction <maximumf>, %452, %cst_135 [0] : vector<3x150xf32> to vector<150xf32>
    %454 = vector.shape_cast %453 : vector<150xf32> to vector<1x150xf32>
    %455 = vector.broadcast %454 : vector<1x150xf32> to vector<3x150xf32>
    %456 = arith.subf %452, %455 : vector<3x150xf32>
    %457 = math.exp %456 : vector<3x150xf32>
    %cst_136 = arith.constant dense<0.000000e+00> : vector<150xf32>
    %458 = vector.multi_reduction <add>, %457, %cst_136 [0] : vector<3x150xf32> to vector<150xf32>
    %459 = vector.shape_cast %458 : vector<150xf32> to vector<1x150xf32>
    %460 = tpu.reciprocal %459 {approx = true} : vector<1x150xf32> -> vector<1x150xf32>
    %461 = arith.mulf %2, %452 : vector<3x150xf32>
    %cst_137 = arith.constant dense<0.000000e+00> : vector<150xf32>
    %462 = vector.multi_reduction <add>, %461, %cst_137 [0] : vector<3x150xf32> to vector<150xf32>
    %463 = vector.shape_cast %462 : vector<150xf32> to vector<1x150xf32>
    %464 = math.log %459 : vector<1x150xf32>
    %465 = arith.addf %464, %454 : vector<1x150xf32>
    %466 = arith.subf %465, %463 : vector<1x150xf32>
    %467 = vector.broadcast %cst_7 : f32 to vector<1x150xf32>
    %468 = arith.mulf %466, %467 : vector<1x150xf32>
    %469 = vector.broadcast %460 : vector<1x150xf32> to vector<3x150xf32>
    %470 = arith.mulf %457, %469 : vector<3x150xf32>
    %471 = arith.subf %470, %2 : vector<3x150xf32>
    %472 = vector.broadcast %cst_7 : f32 to vector<3x150xf32>
    %473 = arith.mulf %471, %472 : vector<3x150xf32>
    %474 = arith.truncf %432 : vector<10x10xf32> to vector<10x10xbf16>
    %475 = arith.truncf %433 : vector<3x10xf32> to vector<3x10xbf16>
    %476 = arith.truncf %473 : vector<3x150xf32> to vector<3x150xbf16>
    %cst_138 = arith.constant dense<0.000000e+00> : vector<10x150xf32>
    %477 = tpu.matmul %475, %476, %cst_138 {dimension_numbers = #tpu.dot_dimension_numbers<[0], [0], [1], [1], [0, 1, 1, 1], [], []>} : vector<3x10xbf16>, vector<3x150xbf16>, vector<10x150xf32> -> vector<10x150xf32>
    %cst_139 = arith.constant 0.000000e+00 : f32
    %478 = vector.broadcast %cst_139 : f32 to vector<10x150xf32>
    %479 = arith.cmpf ogt, %449, %478 : vector<10x150xf32>
    %cst_140 = arith.constant 0.000000e+00 : f32
    %480 = vector.broadcast %cst_140 : f32 to vector<10x150xf32>
    %481 = arith.select %479, %477, %480 : vector<10x150xi1>, vector<10x150xf32>
    %482 = arith.truncf %481 : vector<10x150xf32> to vector<10x150xbf16>
    %cst_141 = arith.constant dense<0.000000e+00> : vector<10x150xf32>
    %483 = tpu.matmul %474, %482, %cst_141 {dimension_numbers = #tpu.dot_dimension_numbers<[0], [0], [1], [1], [0, 1, 1, 1], [], []>} : vector<10x10xbf16>, vector<10x150xbf16>, vector<10x150xf32> -> vector<10x150xf32>
    %cst_142 = arith.constant 0.000000e+00 : f32
    %484 = vector.broadcast %cst_142 : f32 to vector<10x150xf32>
    %485 = arith.cmpf ogt, %444, %484 : vector<10x150xf32>
    %cst_143 = arith.constant 0.000000e+00 : f32
    %486 = vector.broadcast %cst_143 : f32 to vector<10x150xf32>
    %487 = arith.select %485, %483, %486 : vector<10x150xi1>, vector<10x150xf32>
    %488 = arith.truncf %487 : vector<10x150xf32> to vector<10x150xbf16>
    %489 = arith.truncf %468 : vector<1x150xf32> to vector<1x150xbf16>
    %490 = tpu.concatenate %488, %482, %476, %489 in 0 : vector<10x150xbf16>, vector<10x150xbf16>, vector<3x150xbf16>, vector<1x150xbf16> -> vector<24x150xbf16>
    %491 = arith.truncf %444 : vector<10x150xf32> to vector<10x150xbf16>
    %492 = arith.truncf %449 : vector<10x150xf32> to vector<10x150xbf16>
    %493 = tpu.concatenate %3, %491, %492, %4 in 0 : vector<4x150xbf16>, vector<10x150xbf16>, vector<10x150xbf16>, vector<1x150xbf16> -> vector<25x150xbf16>
    %cst_144 = arith.constant dense<0.000000e+00> : vector<24x25xf32>
    %494 = tpu.matmul %490, %493, %cst_144 {dimension_numbers = #tpu.dot_dimension_numbers<[1], [1], [0], [0], [0, 0, 1, 0], [], []>} : vector<24x150xbf16>, vector<25x150xbf16>, vector<24x25xf32> -> vector<24x25xf32>
    %495 = arith.index_cast %c6_i32 : i32 to index
    %c0_145 = arith.constant 0 : index
    %c0_146 = arith.constant 0 : index
    %496 = vector.load %arg4[%495, %c0_145, %c0_146] : memref<8x24x25xf32, #tpu.memory_space<vmem>>, vector<1x24x25xf32>
    %497 = vector.shape_cast %496 : vector<1x24x25xf32> to vector<24x25xf32>
    %498 = vector.shape_cast %494 : vector<24x25xf32> to vector<1x24x25xf32>
    tpu.vector_store %arg4[%495, %c0_145, %c0_146], %498 {strides = array<i32>} : memref<8x24x25xf32, #tpu.memory_space<vmem>>, vector<1x24x25xf32>,
    %c7_i32 = arith.constant 7 : i32
    %499 = arith.index_cast %c7_i32 : i32 to index
    %c0_147 = arith.constant 0 : index
    %c0_148 = arith.constant 0 : index
    %500 = vector.load %arg3[%499, %c0_147, %c0_148] : memref<8x16x12xf32, #tpu.memory_space<vmem>>, vector<1x16x12xf32>
    %501 = vector.shape_cast %500 : vector<1x16x12xf32> to vector<16x12xf32>
    %502 = vector.extract_strided_slice %501 {offsets = [0, 0], sizes = [10, 10], strides = [1, 1]} : vector<16x12xf32> to vector<10x10xf32>
    %503 = vector.extract_strided_slice %501 {offsets = [10, 0], sizes = [3, 10], strides = [1, 1]} : vector<16x12xf32> to vector<3x10xf32>
    %504 = vector.extract_strided_slice %501 {offsets = [0, 10], sizes = [10, 1], strides = [1, 1]} : vector<16x12xf32> to vector<10x1xf32>
    %505 = vector.extract_strided_slice %501 {offsets = [0, 11], sizes = [10, 1], strides = [1, 1]} : vector<16x12xf32> to vector<10x1xf32>
    %506 = vector.extract_strided_slice %501 {offsets = [10, 10], sizes = [3, 1], strides = [1, 1]} : vector<16x12xf32> to vector<3x1xf32>
    %c16_i32_149 = arith.constant 16 : i32
    %507 = arith.muli %c7_i32, %c16_i32_149 : i32
    %508 = tpu.assume_multiple %507, 8 : i32
    %509 = arith.index_cast %508 : i32 to index
    %c0_150 = arith.constant 0 : index
    %510 = vector.load %arg5[%509, %c0_150] : memref<128x150xf32, #tpu.memory_space<vmem>>, vector<10x150xf32>
    %511 = vector.broadcast %504 : vector<10x1xf32> to vector<10x150xf32>
    %512 = arith.addf %510, %511 : vector<10x150xf32>
    %cst_151 = arith.constant 0.000000e+00 : f32
    %513 = vector.broadcast %cst_151 : f32 to vector<10x150xf32>
    %514 = arith.maximumf %512, %513 : vector<10x150xf32>
    %cst_152 = arith.constant dense<0.000000e+00> : vector<10x150xf32>
    %515 = tpu.matmul %502, %514, %cst_152 {dimension_numbers = #tpu.dot_dimension_numbers<[1], [0], [0], [1], [0, 0, 1, 1], [], []>} : vector<10x10xf32>, vector<10x150xf32>, vector<10x150xf32> -> vector<10x150xf32>
    %516 = vector.broadcast %505 : vector<10x1xf32> to vector<10x150xf32>
    %517 = arith.addf %515, %516 : vector<10x150xf32>
    %cst_153 = arith.constant 0.000000e+00 : f32
    %518 = vector.broadcast %cst_153 : f32 to vector<10x150xf32>
    %519 = arith.maximumf %517, %518 : vector<10x150xf32>
    %cst_154 = arith.constant dense<0.000000e+00> : vector<3x150xf32>
    %520 = tpu.matmul %503, %519, %cst_154 {dimension_numbers = #tpu.dot_dimension_numbers<[1], [0], [0], [1], [0, 0, 1, 1], [], []>} : vector<3x10xf32>, vector<10x150xf32>, vector<3x150xf32> -> vector<3x150xf32>
    %521 = vector.broadcast %506 : vector<3x1xf32> to vector<3x150xf32>
    %522 = arith.addf %520, %521 : vector<3x150xf32>
    %cst_155 = arith.constant dense<0xFF800000> : vector<150xf32>
    %523 = vector.multi_reduction <maximumf>, %522, %cst_155 [0] : vector<3x150xf32> to vector<150xf32>
    %524 = vector.shape_cast %523 : vector<150xf32> to vector<1x150xf32>
    %525 = vector.broadcast %524 : vector<1x150xf32> to vector<3x150xf32>
    %526 = arith.subf %522, %525 : vector<3x150xf32>
    %527 = math.exp %526 : vector<3x150xf32>
    %cst_156 = arith.constant dense<0.000000e+00> : vector<150xf32>
    %528 = vector.multi_reduction <add>, %527, %cst_156 [0] : vector<3x150xf32> to vector<150xf32>
    %529 = vector.shape_cast %528 : vector<150xf32> to vector<1x150xf32>
    %530 = tpu.reciprocal %529 {approx = true} : vector<1x150xf32> -> vector<1x150xf32>
    %531 = arith.mulf %2, %522 : vector<3x150xf32>
    %cst_157 = arith.constant dense<0.000000e+00> : vector<150xf32>
    %532 = vector.multi_reduction <add>, %531, %cst_157 [0] : vector<3x150xf32> to vector<150xf32>
    %533 = vector.shape_cast %532 : vector<150xf32> to vector<1x150xf32>
    %534 = math.log %529 : vector<1x150xf32>
    %535 = arith.addf %534, %524 : vector<1x150xf32>
    %536 = arith.subf %535, %533 : vector<1x150xf32>
    %537 = vector.broadcast %cst_7 : f32 to vector<1x150xf32>
    %538 = arith.mulf %536, %537 : vector<1x150xf32>
    %539 = vector.broadcast %530 : vector<1x150xf32> to vector<3x150xf32>
    %540 = arith.mulf %527, %539 : vector<3x150xf32>
    %541 = arith.subf %540, %2 : vector<3x150xf32>
    %542 = vector.broadcast %cst_7 : f32 to vector<3x150xf32>
    %543 = arith.mulf %541, %542 : vector<3x150xf32>
    %544 = arith.truncf %502 : vector<10x10xf32> to vector<10x10xbf16>
    %545 = arith.truncf %503 : vector<3x10xf32> to vector<3x10xbf16>
    %546 = arith.truncf %543 : vector<3x150xf32> to vector<3x150xbf16>
    %cst_158 = arith.constant dense<0.000000e+00> : vector<10x150xf32>
    %547 = tpu.matmul %545, %546, %cst_158 {dimension_numbers = #tpu.dot_dimension_numbers<[0], [0], [1], [1], [0, 1, 1, 1], [], []>} : vector<3x10xbf16>, vector<3x150xbf16>, vector<10x150xf32> -> vector<10x150xf32>
    %cst_159 = arith.constant 0.000000e+00 : f32
    %548 = vector.broadcast %cst_159 : f32 to vector<10x150xf32>
    %549 = arith.cmpf ogt, %519, %548 : vector<10x150xf32>
    %cst_160 = arith.constant 0.000000e+00 : f32
    %550 = vector.broadcast %cst_160 : f32 to vector<10x150xf32>
    %551 = arith.select %549, %547, %550 : vector<10x150xi1>, vector<10x150xf32>
    %552 = arith.truncf %551 : vector<10x150xf32> to vector<10x150xbf16>
    %cst_161 = arith.constant dense<0.000000e+00> : vector<10x150xf32>
    %553 = tpu.matmul %544, %552, %cst_161 {dimension_numbers = #tpu.dot_dimension_numbers<[0], [0], [1], [1], [0, 1, 1, 1], [], []>} : vector<10x10xbf16>, vector<10x150xbf16>, vector<10x150xf32> -> vector<10x150xf32>
    %cst_162 = arith.constant 0.000000e+00 : f32
    %554 = vector.broadcast %cst_162 : f32 to vector<10x150xf32>
    %555 = arith.cmpf ogt, %514, %554 : vector<10x150xf32>
    %cst_163 = arith.constant 0.000000e+00 : f32
    %556 = vector.broadcast %cst_163 : f32 to vector<10x150xf32>
    %557 = arith.select %555, %553, %556 : vector<10x150xi1>, vector<10x150xf32>
    %558 = arith.truncf %557 : vector<10x150xf32> to vector<10x150xbf16>
    %559 = arith.truncf %538 : vector<1x150xf32> to vector<1x150xbf16>
    %560 = tpu.concatenate %558, %552, %546, %559 in 0 : vector<10x150xbf16>, vector<10x150xbf16>, vector<3x150xbf16>, vector<1x150xbf16> -> vector<24x150xbf16>
    %561 = arith.truncf %514 : vector<10x150xf32> to vector<10x150xbf16>
    %562 = arith.truncf %519 : vector<10x150xf32> to vector<10x150xbf16>
    %563 = tpu.concatenate %3, %561, %562, %4 in 0 : vector<4x150xbf16>, vector<10x150xbf16>, vector<10x150xbf16>, vector<1x150xbf16> -> vector<25x150xbf16>
    %cst_164 = arith.constant dense<0.000000e+00> : vector<24x25xf32>
    %564 = tpu.matmul %560, %563, %cst_164 {dimension_numbers = #tpu.dot_dimension_numbers<[1], [1], [0], [0], [0, 0, 1, 0], [], []>} : vector<24x150xbf16>, vector<25x150xbf16>, vector<24x25xf32> -> vector<24x25xf32>
    %565 = arith.index_cast %c7_i32 : i32 to index
    %c0_165 = arith.constant 0 : index
    %c0_166 = arith.constant 0 : index
    %566 = vector.load %arg4[%565, %c0_165, %c0_166] : memref<8x24x25xf32, #tpu.memory_space<vmem>>, vector<1x24x25xf32>
    %567 = vector.shape_cast %566 : vector<1x24x25xf32> to vector<24x25xf32>
    %568 = vector.shape_cast %564 : vector<24x25xf32> to vector<1x24x25xf32>
    tpu.vector_store %arg4[%565, %c0_165, %c0_166], %568 {strides = array<i32>} : memref<8x24x25xf32, #tpu.memory_space<vmem>>, vector<1x24x25xf32>,
    %c8_i32 = arith.constant 8 : i32
    return
  }
  func.func @transform_0(%arg0: i32) -> (i32, i32) {
    %c0_i32 = arith.constant 0 : i32
    %c0_i32_0 = arith.constant 0 : i32
    %c0_i32_1 = arith.constant 0 : i32
    return %c0_i32, %c0_i32_0 : i32, i32
  }
  func.func @transform_1(%arg0: i32) -> (i32, i32, i32) {
    %c0_i32 = arith.constant 0 : i32
    %c0_i32_0 = arith.constant 0 : i32
    %c0_i32_1 = arith.constant 0 : i32
    return %arg0, %c0_i32, %c0_i32_0 : i32, i32, i32
  }
  func.func @transform_2(%arg0: i32) -> (i32, i32, i32) {
    %c0_i32 = arith.constant 0 : i32
    %c0_i32_0 = arith.constant 0 : i32
    %c0_i32_1 = arith.constant 0 : i32
    return %arg0, %c0_i32, %c0_i32_0 : i32, i32, i32
  }
  func.func @transform_3(%arg0: i32) -> (i32, i32, i32) {
    %c0_i32 = arith.constant 0 : i32
    %c0_i32_0 = arith.constant 0 : i32
    %c0_i32_1 = arith.constant 0 : i32
    return %arg0, %c0_i32, %c0_i32_0 : i32, i32, i32
  }
}

</mosaic_0001>

<llo_original>
// kernel: reset_core.1
$region0: #{reset_core.1}
  #allocation0 [shape = 'u32[]', space=smem, size = 0x4, offset = 0x4, fixed_abs, tag = 'smem constant byte address 0x4 - core index']
  #allocation1 [shape = 'u32[144,128]{1,0:T(1,128)}', space=vmem, size = 0x12000, scoped, tag = 'internal scratch']
  #allocation2 [shape = 'f32[128,150]{1,0:T(8,128)}', space=vmem, size = 0x20000, scoped, tag = 'scratch operand']
  %s0 = inlined_call_operand.vmem [shape: f32[7,150], index: 0, kind: input, shape index: {}]
  %s1 = inlined_call_operand.vmem [shape: f32[1,4,128], index: 1, kind: input, shape index: {}]
  %s2 = inlined_call_operand.vmem [shape: f32[8,16,12], index: 2, kind: input, shape index: {}]
  %s3 = inlined_call_operand.vmem [shape: f32[8,24,25], index: 3, kind: output, shape index: {}]
  %s4 = sld [smem:[#allocation0]]
  $region22: #{reset_core.1} parent=0
    _
  %s6 = ssub.s32 1, %s4
  %s7 = scalar_select 0, %s6, %s4
  // Predicated region
  $region2: #{reset_core.1} parent=0 // pred_check
    _
  $region3: #{reset_core.1} parent=0 // pred_check_branch
    %9 = sbr.rel (0) target = $region5
  $region4: #{reset_core.1} parent=0 // pred_region
    _
  $region5: #{reset_core.1} parent=0 // pred_fallthru
    _
  // Predicated region
  $region6: #{reset_core.1} parent=0 // pred_check
    _
  $region7: #{reset_core.1} parent=0 // pred_check_branch
    %11 = sbr.rel (0) target = $region9
  $region8: #{reset_core.1} parent=0 // pred_region
    _
  $region9: #{reset_core.1} parent=0 // pred_fallthru
    _
  // Predicated region
  $region10: #{reset_core.1} parent=0 // pred_check
    _
  $region11: #{reset_core.1} parent=0 // pred_check_branch
    %13 = sbr.rel (0) target = $region13
  $region12: #{reset_core.1} parent=0 // pred_region
    _
  $region13: #{reset_core.1} parent=0 // pred_fallthru
    _
  %v16 = vld [vmem:[%s0] sm:$0x7f]
  %v17 = vld [vmem:[%s0 + $0x8] sm:$0x7f]
  %v18 = vpack.c.bf16 %v16, %v16
  %v19 = vpack.c.bf16 %v17, %v17
  %v20 = vld [vmem:[%s1] sm:$0xf]
  %21 = vxpose.xlu0.b32.start [1/16] %v20, 128
  %22 = vxpose.xlu0.b32.cont [2/16] 0.0, 128
  %23 = vxpose.xlu0.b32.cont [3/16] 0.0, 128
  %24 = vxpose.xlu0.b32.cont [4/16] 0.0, 128
  %25 = vxpose.xlu0.b32.cont [5/16] 0.0, 128
  %26 = vxpose.xlu0.b32.cont [6/16] 0.0, 128
  %27 = vxpose.xlu0.b32.cont [7/16] 0.0, 128
  %28 = vxpose.xlu0.b32.cont [8/16] 0.0, 128
  %29 = vxpose.xlu0.b32.cont [9/16] 0.0, 128
  %30 = vxpose.xlu0.b32.cont [10/16] 0.0, 128
  %31 = vxpose.xlu0.b32.cont [11/16] 0.0, 128
  %32 = vxpose.xlu0.b32.cont [12/16] 0.0, 128
  %33 = vxpose.xlu0.b32.cont [13/16] 0.0, 128
  %34 = vxpose.xlu0.b32.cont [14/16] 0.0, 128
  %35 = vxpose.xlu0.b32.cont [15/16] 0.0, 128
  %36 = vxpose.xlu0.b32.end [16/16] 0.0, 128
  %v37 = vpop.trf.xlu0
  %v38 = vpop.trf.xlu0
  %v39 = vpop.trf.xlu0
  %v40 = vpop.trf.xlu0
  %v41 = vpop.trf.xlu0
  %v42 = vpop.trf.xlu0
  %v43 = vpop.trf.xlu0
  %v44 = vpop.trf.xlu0
  %v45 = vpop.trf.xlu0
  %v46 = vpop.trf.xlu0
  %v47 = vpop.trf.xlu0
  %v48 = vpop.trf.xlu0
  %v49 = vpop.trf.xlu0
  %v50 = vpop.trf.xlu0
  %v51 = vpop.trf.xlu0
  %v52 = vpop.trf.xlu0
  %vm53 = vcmask 31744
  %v55 = vsel %vm53, %v37, 0
  %v58 = vsel %vm53, %v38, 0
  %v61 = vsel %vm53, %v39, 0
  %v64 = vsel %vm53, %v40, 0
  %v67 = vsel %vm53, %v41, 0
  %v70 = vsel %vm53, %v42, 0
  %v73 = vsel %vm53, %v43, 0
  %v76 = vsel %vm53, %v44, 0
  %v79 = vsel %vm53, %v45, 0
  %v82 = vsel %vm53, %v46, 0
  %v85 = vsel %vm53, %v47, 0
  %v88 = vsel %vm53, %v48, 0
  %v91 = vsel %vm53, %v49, 0
  %v94 = vsel %vm53, %v50, 0
  %v97 = vsel %vm53, %v51, 0
  %v100 = vsel %vm53, %v52, 0
  %vm102 = vcmask 1043456
  %v104 = vsel %vm102, %v16, 0
  %v107 = vsel %vm102, %v17, 0
  %109 = vmatprep.subr.mxu0 0.0
  %110 = vmatpush1.msra.mxu0 0.0
  %111 = vmatprep.subr.mxu0 0.0
  %112 = vmatpush1.msra.mxu0 0.0
  %113 = vmatprep.subr.mxu0 0.0
  %114 = vmatpush1.msra.mxu0 0.0
  %115 = vmatprep.subr.mxu0 0.0
  %116 = vmatpush1.msra.mxu0 0.0
  %117 = vmatprep.subr.mxu0 0.0
  %118 = vmatpush1.msra.mxu0 0.0
  %119 = vmatprep.subr.mxu0 0.0
  %120 = vmatpush1.msra.mxu0 0.0
  %121 = vmatprep.subr.mxu0 0.0
  %122 = vmatpush1.msra.mxu0 0.0
  %123 = vmatprep.subr.mxu0 0.0
  %124 = vmatpush1.msra.mxu0 0.0
  %125 = vmatprep.subr.mxu0 0.0
  %126 = vmatpush1.msra.mxu0 0.0
  %127 = vmatprep.subr.mxu0 0.0
  %128 = vmatpush1.msra.mxu0 0.0
  %129 = vmatprep.subr.mxu0 0.0
  %130 = vmatpush1.msra.mxu0 0.0
  %131 = vmatprep.subr.mxu0 0.0
  %132 = vmatpush1.msra.mxu0 0.0
  %133 = vmatprep.subr.mxu0 0.0
  %134 = vmatpush1.msra.mxu0 0.0
  %135 = vmatprep.subr.mxu0 0.0
  %136 = vmatpush1.msra.mxu0 0.0
  %137 = vmatprep.subr.mxu0 0.0
  %138 = vmatpush1.msra.mxu0 0.0
  %139 = vmatprep.subr.mxu0 %v107
  %140 = vmatpush1.msra.mxu0 %v104
  %141 = vmatprep.subr.mxu0 0.0
  %142 = vmatpush2.msra.mxu0 0.0
  %143 = vmatprep.subr.mxu0 0.0
  %144 = vmatpush2.msra.mxu0 0.0
  %145 = vmatprep.subr.mxu0 0.0
  %146 = vmatpush2.msra.mxu0 0.0
  %147 = vmatprep.subr.mxu0 0.0
  %148 = vmatpush2.msra.mxu0 0.0
  %149 = vmatprep.subr.mxu0 0.0
  %150 = vmatpush2.msra.mxu0 0.0
  %151 = vmatprep.subr.mxu0 0.0
  %152 = vmatpush2.msra.mxu0 0.0
  %153 = vmatprep.subr.mxu0 0.0
  %154 = vmatpush2.msra.mxu0 0.0
  %155 = vmatprep.subr.mxu0 0.0
  %156 = vmatpush2.msra.mxu0 0.0
  %157 = vmatprep.subr.mxu0 0.0
  %158 = vmatpush2.msra.mxu0 0.0
  %159 = vmatprep.subr.mxu0 0.0
  %160 = vmatpush2.msra.mxu0 0.0
  %161 = vmatprep.subr.mxu0 0.0
  %162 = vmatpush2.msra.mxu0 0.0
  %163 = vmatprep.subr.mxu0 0.0
  %164 = vmatpush2.msra.mxu0 0.0
  %165 = vmatprep.subr.mxu0 0.0
  %166 = vmatpush2.msra.mxu0 0.0
  %167 = vmatprep.subr.mxu0 0.0
  %168 = vmatpush2.msra.mxu0 0.0
  %169 = vmatprep.subr.mxu0 0.0
  %170 = vmatpush2.msra.mxu0 0.0
  %171 = vmatprep.subr.mxu0 0.0
  %172 = vmatpush2.msra.mxu0 0.0
  %173 = vmatprep.mubr.f32.mxu0 0.0
  %174 = vmatmul.mubr.f32.gmra.mxu0 %v55
  %v175 = vpop.f32.mrf.mxu0
  %v176 = vadd.f32 0.0, %v175
  %v177 = vpop.f32.mrf.mxu0
  %v178 = vadd.f32 0.0, %v177
  %179 = vmatprep.mubr.f32.mxu0 0.0
  %180 = vmatmul.mubr.f32.gmra.mxu0 %v58
  %v181 = vpop.f32.mrf.mxu0
  %v182 = vadd.f32 0.0, %v181
  %v183 = vpop.f32.mrf.mxu0
  %v184 = vadd.f32 0.0, %v183
  %185 = vmatprep.mubr.f32.mxu0 0.0
  %186 = vmatmul.mubr.f32.gmra.mxu0 %v61
  %v187 = vpop.f32.mrf.mxu0
  %v188 = vadd.f32 0.0, %v187
  %v189 = vpop.f32.mrf.mxu0
  %v190 = vadd.f32 0.0, %v189
  %191 = vmatprep.mubr.f32.mxu0 0.0
  %192 = vmatmul.mubr.f32.gmra.mxu0 %v64
  %v193 = vpop.f32.mrf.mxu0
  %v194 = vadd.f32 0.0, %v193
  %v195 = vpop.f32.mrf.mxu0
  %v196 = vadd.f32 0.0, %v195
  %197 = vmatprep.mubr.f32.mxu0 0.0
  %198 = vmatmul.mubr.f32.gmra.mxu0 %v67
  %v199 = vpop.f32.mrf.mxu0
  %v200 = vadd.f32 0.0, %v199
  %v201 = vpop.f32.mrf.mxu0
  %v202 = vadd.f32 0.0, %v201
  %203 = vmatprep.mubr.f32.mxu0 0.0
  %204 = vmatmul.mubr.f32.gmra.mxu0 %v70
  %v205 = vpop.f32.mrf.mxu0
  %v206 = vadd.f32 0.0, %v205
  %v207 = vpop.f32.mrf.mxu0
  %v208 = vadd.f32 0.0, %v207
  %209 = vmatprep.mubr.f32.mxu0 0.0
  %210 = vmatmul.mubr.f32.gmra.mxu0 %v73
  %v211 = vpop.f32.mrf.mxu0
  %v212 = vadd.f32 0.0, %v211
  %v213 = vpop.f32.mrf.mxu0
  %v214 = vadd.f32 0.0, %v213
  %215 = vmatprep.mubr.f32.mxu0 0.0
  %216 = vmatmul.mubr.f32.gmra.mxu0 %v76
  %v217 = vpop.f32.mrf.mxu0
  %v218 = vadd.f32 0.0, %v217
  %v219 = vpop.f32.mrf.mxu0
  %v220 = vadd.f32 0.0, %v219
  %221 = vmatprep.mubr.f32.mxu0 0.0
  %222 = vmatmul.mubr.f32.gmra.mxu0 %v79
  %v223 = vpop.f32.mrf.mxu0
  %v224 = vadd.f32 0.0, %v223
  %v225 = vpop.f32.mrf.mxu0
  %v226 = vadd.f32 0.0, %v225
  %227 = vmatprep.mubr.f32.mxu0 0.0
  %228 = vmatmul.mubr.f32.gmra.mxu0 %v82
  %v229 = vpop.f32.mrf.mxu0
  %v230 = vadd.f32 0.0, %v229
  %v231 = vpop.f32.mrf.mxu0
  %v232 = vadd.f32 0.0, %v231
  %233 = vmatprep.mubr.f32.mxu0 0.0
  %234 = vmatmul.mubr.f32.gmra.mxu0 %v85
  %v235 = vpop.f32.mrf.mxu0
  %v236 = vadd.f32 0.0, %v235
  %v237 = vpop.f32.mrf.mxu0
  %v238 = vadd.f32 0.0, %v237
  %239 = vmatprep.mubr.f32.mxu0 0.0
  %240 = vmatmul.mubr.f32.gmra.mxu0 %v88
  %v241 = vpop.f32.mrf.mxu0
  %v242 = vadd.f32 0.0, %v241
  %v243 = vpop.f32.mrf.mxu0
  %v244 = vadd.f32 0.0, %v243
  %245 = vmatprep.mubr.f32.mxu0 0.0
  %246 = vmatmul.mubr.f32.gmra.mxu0 %v91
  %v247 = vpop.f32.mrf.mxu0
  %v248 = vadd.f32 0.0, %v247
  %v249 = vpop.f32.mrf.mxu0
  %v250 = vadd.f32 0.0, %v249
  %251 = vmatprep.mubr.f32.mxu0 0.0
  %252 = vmatmul.mubr.f32.gmra.mxu0 %v94
  %v253 = vpop.f32.mrf.mxu0
  %v254 = vadd.f32 0.0, %v253
  %v255 = vpop.f32.mrf.mxu0
  %v256 = vadd.f32 0.0, %v255
  %257 = vmatprep.mubr.f32.mxu0 0.0
  %258 = vmatmul.mubr.f32.gmra.mxu0 %v97
  %v259 = vpop.f32.mrf.mxu0
  %v260 = vadd.f32 0.0, %v259
  %v261 = vpop.f32.mrf.mxu0
  %v262 = vadd.f32 0.0, %v261
  %263 = vmatprep.mubr.f32.mxu0 0.0
  %264 = vmatmul.mubr.f32.gmra.mxu0 %v100
  %v265 = vpop.f32.mrf.mxu0
  %v266 = vadd.f32 0.0, %v265
  %v267 = vpop.f32.mrf.mxu0
  %v268 = vadd.f32 0.0, %v267
  %269 = vdwg.mxu0
  %270 = vst [vmem:[#allocation2] sm:$0xff] %v176
  %vm271 = vcmask 179200
  %272 = vst.msk [vmem:[#allocation2 + $0x8] sm:$0xff] %vm271, %v178
  %273 = vst [vmem:[#allocation2 + $0x10] sm:$0xff] %v182
  %274 = vst.msk [vmem:[#allocation2 + $0x18] sm:$0xff] %vm271, %v184
  %275 = vst [vmem:[#allocation2 + $0x20] sm:$0xff] %v188
  %276 = vst.msk [vmem:[#allocation2 + $0x28] sm:$0xff] %vm271, %v190
  %277 = vst [vmem:[#allocation2 + $0x30] sm:$0xff] %v194
  %278 = vst.msk [vmem:[#allocation2 + $0x38] sm:$0xff] %vm271, %v196
  %279 = vst [vmem:[#allocation2 + $0x40] sm:$0xff] %v200
  %280 = vst.msk [vmem:[#allocation2 + $0x48] sm:$0xff] %vm271, %v202
  %281 = vst [vmem:[#allocation2 + $0x50] sm:$0xff] %v206
  %282 = vst.msk [vmem:[#allocation2 + $0x58] sm:$0xff] %vm271, %v208
  %283 = vst [vmem:[#allocation2 + $0x60] sm:$0xff] %v212
  %284 = vst.msk [vmem:[#allocation2 + $0x68] sm:$0xff] %vm271, %v214
  %285 = vst [vmem:[#allocation2 + $0x70] sm:$0xff] %v218
  %286 = vst.msk [vmem:[#allocation2 + $0x78] sm:$0xff] %vm271, %v220
  %287 = vst [vmem:[#allocation2 + $0x80] sm:$0xff] %v224
  %288 = vst.msk [vmem:[#allocation2 + $0x88] sm:$0xff] %vm271, %v226
  %289 = vst [vmem:[#allocation2 + $0x90] sm:$0xff] %v230
  %290 = vst.msk [vmem:[#allocation2 + $0x98] sm:$0xff] %vm271, %v232
  %291 = vst [vmem:[#allocation2 + $0xa0] sm:$0xff] %v236
  %292 = vst.msk [vmem:[#allocation2 + $0xa8] sm:$0xff] %vm271, %v238
  %293 = vst [vmem:[#allocation2 + $0xb0] sm:$0xff] %v242
  %294 = vst.msk [vmem:[#allocation2 + $0xb8] sm:$0xff] %vm271, %v244
  %295 = vst [vmem:[#allocation2 + $0xc0] sm:$0xff] %v248
  %296 = vst.msk [vmem:[#allocation2 + $0xc8] sm:$0xff] %vm271, %v250
  %297 = vst [vmem:[#allocation2 + $0xd0] sm:$0xff] %v254
  %298 = vst.msk [vmem:[#allocation2 + $0xd8] sm:$0xff] %vm271, %v256
  %299 = vst [vmem:[#allocation2 + $0xe0] sm:$0xff] %v260
  %300 = vst.msk [vmem:[#allocation2 + $0xe8] sm:$0xff] %vm271, %v262
  %301 = vst [vmem:[#allocation2 + $0xf0] sm:$0xff] %v266
  %302 = vst.msk [vmem:[#allocation2 + $0xf8] sm:$0xff] %vm271, %v268
  %v303 = vld [vmem:[%s2] sm:$0xff]
  %v304 = vld [vmem:[%s2 + $0x8] sm:$0xff]
  %s305 = smul.u32 0, 2
  %s306 = smul.addr %s305, 8
  %s307 = scalar_lea.vmem [#allocation2], %s306
  %v308 = vld [vmem:[%s307] sm:$0xff]
  %v309 = vld [vmem:[%s307 + $0x8] sm:$0xff]
  %v310 = vld [vmem:[%s307 + $0x10] sm:$0x3]
  %v311 = vld [vmem:[%s307 + $0x18] sm:$0x3]
  %313 = vset.pattern.permute.xlu0 10
  %314 = vperm.xlu0 %313, %v303
  %v315 = vpop.permute.xlu0 %314
  %318 = vset.pattern.permute.xlu0 10
  %319 = vperm.xlu0 %318, %v304
  %v320 = vpop.permute.xlu0 %319
  %v322 = vadd.f32 %v308, %v315
  %v323 = vadd.f32 %v309, %v315
  %v324 = vadd.f32 %v310, %v320
  %v325 = vadd.f32 %v311, %v320
  %v326 = vmax.f32 %v322, 0.0
  %v327 = vmax.f32 %v323, 0.0
  %v328 = vmax.f32 %v324, 0.0
  %v329 = vmax.f32 %v325, 0.0
  %330 = vset.pattern.permute.xlu0 11
  %331 = vperm.xlu0 %330, %v303
  %v332 = vpop.permute.xlu0 %331
  %334 = vset.pattern.permute.xlu0 11
  %335 = vperm.xlu0 %334, %v304
  %v336 = vpop.permute.xlu0 %335
  %vm338 = vcmask 80896
  %v339 = vsel %vm338, %v303, 0
  %v341 = vsel %vm338, %v304, 0
  %vm343 = vcmask 1041408
  %v345 = vsel %vm343, %v328, 0
  %v348 = vsel %vm343, %v329, 0
  %350 = vmatprep.subr.mxu0 0.0
  %351 = vmatpush1.msra.mxu0 0.0
  %352 = vmatprep.subr.mxu0 0.0
  %353 = vmatpush1.msra.mxu0 0.0
  %354 = vmatprep.subr.mxu0 0.0
  %355 = vmatpush1.msra.mxu0 0.0
  %356 = vmatprep.subr.mxu0 0.0
  %357 = vmatpush1.msra.mxu0 0.0
  %358 = vmatprep.subr.mxu0 0.0
  %359 = vmatpush1.msra.mxu0 0.0
  %360 = vmatprep.subr.mxu0 0.0
  %361 = vmatpush1.msra.mxu0 0.0
  %362 = vmatprep.subr.mxu0 0.0
  %363 = vmatpush1.msra.mxu0 0.0
  %364 = vmatprep.subr.mxu0 0.0
  %365 = vmatpush1.msra.mxu0 0.0
  %366 = vmatprep.subr.mxu0 0.0
  %367 = vmatpush1.msra.mxu0 0.0
  %368 = vmatprep.subr.mxu0 0.0
  %369 = vmatpush1.msra.mxu0 0.0
  %370 = vmatprep.subr.mxu0 0.0
  %371 = vmatpush1.msra.mxu0 0.0
  %372 = vmatprep.subr.mxu0 0.0
  %373 = vmatpush1.msra.mxu0 0.0
  %374 = vmatprep.subr.mxu0 0.0
  %375 = vmatpush1.msra.mxu0 0.0
  %376 = vmatprep.subr.mxu0 0.0
  %377 = vmatpush1.msra.mxu0 0.0
  %378 = vmatprep.subr.mxu0 %v348
  %379 = vmatpush1.msra.mxu0 %v345
  %380 = vmatprep.subr.mxu0 %v327
  %381 = vmatpush1.msra.mxu0 %v326
  %382 = vmatprep.subr.mxu0 0.0
  %383 = vmatpush2.msra.mxu0 0.0
  %384 = vmatprep.subr.mxu0 0.0
  %385 = vmatpush2.msra.mxu0 0.0
  %386 = vmatprep.subr.mxu0 0.0
  %387 = vmatpush2.msra.mxu0 0.0
  %388 = vmatprep.subr.mxu0 0.0
  %389 = vmatpush2.msra.mxu0 0.0
  %390 = vmatprep.subr.mxu0 0.0
  %391 = vmatpush2.msra.mxu0 0.0
  %392 = vmatprep.subr.mxu0 0.0
  %393 = vmatpush2.msra.mxu0 0.0
  %394 = vmatprep.subr.mxu0 0.0
  %395 = vmatpush2.msra.mxu0 0.0
  %396 = vmatprep.subr.mxu0 0.0
  %397 = vmatpush2.msra.mxu0 0.0
  %398 = vmatprep.subr.mxu0 0.0
  %399 = vmatpush2.msra.mxu0 0.0
  %400 = vmatprep.subr.mxu0 0.0
  %401 = vmatpush2.msra.mxu0 0.0
  %402 = vmatprep.subr.mxu0 0.0
  %403 = vmatpush2.msra.mxu0 0.0
  %404 = vmatprep.subr.mxu0 0.0
  %405 = vmatpush2.msra.mxu0 0.0
  %406 = vmatprep.subr.mxu0 0.0
  %407 = vmatpush2.msra.mxu0 0.0
  %408 = vmatprep.subr.mxu0 0.0
  %409 = vmatpush2.msra.mxu0 0.0
  %410 = vmatprep.subr.mxu0 0.0
  %411 = vmatpush2.msra.mxu0 0.0
  %412 = vmatprep.subr.mxu0 0.0
  %413 = vmatpush2.msra.mxu0 0.0
  %414 = vmatprep.mubr.f32.mxu0 0.0
  %415 = vmatmul.mubr.f32.gmra.mxu0 %v339
  %v416 = vpop.f32.mrf.mxu0
  %v417 = vadd.f32 %v332, %v416
  %v418 = vpop.f32.mrf.mxu0
  %v419 = vadd.f32 %v332, %v418
  %420 = vmatprep.mubr.f32.mxu0 0.0
  %421 = vmatmul.mubr.f32.gmra.mxu0 %v341
  %v422 = vpop.f32.mrf.mxu0
  %v423 = vadd.f32 %v336, %v422
  %v424 = vpop.f32.mrf.mxu0
  %v425 = vadd.f32 %v336, %v424
  %426 = vdwg.mxu0
  %v427 = vmax.f32 %v417, 0.0
  %v428 = vmax.f32 %v419, 0.0
  %v429 = vmax.f32 %v423, 0.0
  %v430 = vmax.f32 %v425, 0.0
  %v431 = vrot.slane %v304, 2
  %v432 = vrot.slane %v320, 2
  %v434 = vsel %vm338, %v431, 0
  %v437 = vsel %vm343, %v429, 0
  %v440 = vsel %vm343, %v430, 0
  %442 = vmatprep.subr.mxu0 0.0
  %443 = vmatpush1.msra.mxu0 0.0
  %444 = vmatprep.subr.mxu0 0.0
  %445 = vmatpush1.msra.mxu0 0.0
  %446 = vmatprep.subr.mxu0 0.0
  %447 = vmatpush1.msra.mxu0 0.0
  %448 = vmatprep.subr.mxu0 0.0
  %449 = vmatpush1.msra.mxu0 0.0
  %450 = vmatprep.subr.mxu0 0.0
  %451 = vmatpush1.msra.mxu0 0.0
  %452 = vmatprep.subr.mxu0 0.0
  %453 = vmatpush1.msra.mxu0 0.0
  %454 = vmatprep.subr.mxu0 0.0
  %455 = vmatpush1.msra.mxu0 0.0
  %456 = vmatprep.subr.mxu0 0.0
  %457 = vmatpush1.msra.mxu0 0.0
  %458 = vmatprep.subr.mxu0 0.0
  %459 = vmatpush1.msra.mxu0 0.0
  %460 = vmatprep.subr.mxu0 0.0
  %461 = vmatpush1.msra.mxu0 0.0
  %462 = vmatprep.subr.mxu0 0.0
  %463 = vmatpush1.msra.mxu0 0.0
  %464 = vmatprep.subr.mxu0 0.0
  %465 = vmatpush1.msra.mxu0 0.0
  %466 = vmatprep.subr.mxu0 0.0
  %467 = vmatpush1.msra.mxu0 0.0
  %468 = vmatprep.subr.mxu0 0.0
  %469 = vmatpush1.msra.mxu0 0.0
  %470 = vmatprep.subr.mxu0 %v440
  %471 = vmatpush1.msra.mxu0 %v437
  %472 = vmatprep.subr.mxu0 %v428
  %473 = vmatpush1.msra.mxu0 %v427
  %474 = vmatprep.subr.mxu0 0.0
  %475 = vmatpush2.msra.mxu0 0.0
  %476 = vmatprep.subr.mxu0 0.0
  %477 = vmatpush2.msra.mxu0 0.0
  %478 = vmatprep.subr.mxu0 0.0
  %479 = vmatpush2.msra.mxu0 0.0
  %480 = vmatprep.subr.mxu0 0.0
  %481 = vmatpush2.msra.mxu0 0.0
  %482 = vmatprep.subr.mxu0 0.0
  %483 = vmatpush2.msra.mxu0 0.0
  %484 = vmatprep.subr.mxu0 0.0
  %485 = vmatpush2.msra.mxu0 0.0
  %486 = vmatprep.subr.mxu0 0.0
  %487 = vmatpush2.msra.mxu0 0.0
  %488 = vmatprep.subr.mxu0 0.0
  %489 = vmatpush2.msra.mxu0 0.0
  %490 = vmatprep.subr.mxu0 0.0
  %491 = vmatpush2.msra.mxu0 0.0
  %492 = vmatprep.subr.mxu0 0.0
  %493 = vmatpush2.msra.mxu0 0.0
  %494 = vmatprep.subr.mxu0 0.0
  %495 = vmatpush2.msra.mxu0 0.0
  %496 = vmatprep.subr.mxu0 0.0
  %497 = vmatpush2.msra.mxu0 0.0
  %498 = vmatprep.subr.mxu0 0.0
  %499 = vmatpush2.msra.mxu0 0.0
  %500 = vmatprep.subr.mxu0 0.0
  %501 = vmatpush2.msra.mxu0 0.0
  %502 = vmatprep.subr.mxu0 0.0
  %503 = vmatpush2.msra.mxu0 0.0
  %504 = vmatprep.subr.mxu0 0.0
  %505 = vmatpush2.msra.mxu0 0.0
  %506 = vmatprep.mubr.f32.mxu0 0.0
  %507 = vmatmul.mubr.f32.gmra.mxu0 %v434
  %v508 = vpop.f32.mrf.mxu0
  %v509 = vadd.f32 %v432, %v508
  %v510 = vpop.f32.mrf.mxu0
  %v511 = vadd.f32 %v432, %v510
  %512 = vdwg.mxu0
  %vm513 = vcmask 1042432
  %v514 = vsel %vm513, %v509, -inf
  %v515 = vrot.slane %v514, 4
  %v516 = vmax.f32 %v514, %v515
  %v517 = vrot.slane %v516, 2
  %v518 = vmax.f32 %v516, %v517
  %v519 = vrot.slane %v518, 1
  %v520 = vmax.f32 %v518, %v519
  %vm521 = vcmask 174080
  %v522 = vsel %vm521, %v511, -inf
  %v523 = vrot.slane %v522, 4
  %v524 = vmax.f32 %v522, %v523
  %v525 = vrot.slane %v524, 2
  %v526 = vmax.f32 %v524, %v525
  %v527 = vrot.slane %v526, 1
  %v528 = vmax.f32 %v526, %v527
  %v529 = vsub.f32 %v509, %v520
  %v530 = vsub.f32 %v511, %v528
  %v531 = vmul.f32 %v529, 1.442695
  %v532 = vpow.pop %v531
  %v533 = vmul.f32 %v530, 1.442695
  %v534 = vpow.pop %v533
  %v535 = vsel %vm513, %v532, 0.0
  %v536 = vrot.slane %v535, 4
  %v537 = vadd.f32 %v535, %v536
  %v538 = vrot.slane %v537, 2
  %v539 = vadd.f32 %v537, %v538
  %v540 = vrot.slane %v539, 1
  %v541 = vadd.f32 %v539, %v540
  %v542 = vsel %vm521, %v534, 0.0
  %v543 = vrot.slane %v542, 4
  %v544 = vadd.f32 %v542, %v543
  %v545 = vrot.slane %v544, 2
  %v546 = vadd.f32 %v544, %v545
  %v547 = vrot.slane %v546, 1
  %v548 = vadd.f32 %v546, %v547
  %v549 = vrcp.pop %v541
  %v550 = vrcp.pop %v548
  %v553 = vrot.slane %v509, 4
  %v554 = vrot.slane %v511, 4
  %v557 = vmul.f32 %v16, %v553
  %v558 = vmul.f32 %v17, %v554
  %v561 = vrot.slane %v557, 4
  %v562 = vrot.slane %v558, 4
  %v565 = vsel %vm513, %v561, 0.0
  %v566 = vrot.slane %v565, 4
  %v567 = vadd.f32 %v565, %v566
  %v568 = vrot.slane %v567, 2
  %v569 = vadd.f32 %v567, %v568
  %v570 = vrot.slane %v569, 1
  %v571 = vadd.f32 %v569, %v570
  %v572 = vsel %vm521, %v562, 0.0
  %v573 = vrot.slane %v572, 4
  %v574 = vadd.f32 %v572, %v573
  %v575 = vrot.slane %v574, 2
  %v576 = vadd.f32 %v574, %v575
  %v577 = vrot.slane %v576, 1
  %v578 = vadd.f32 %v576, %v577
  %v579 = vlog2.pop %v541
  %v580 = vmul.f32 %v579, 0.6931472
  %v581 = vlog2.pop %v548
  %v582 = vmul.f32 %v581, 0.6931472
  %v583 = vadd.f32 %v580, %v520
  %v584 = vadd.f32 %v582, %v528
  %v585 = vsub.f32 %v583, %v571
  %v586 = vsub.f32 %v584, %v578
  %v587 = vmul.f32 %v585, 0.006666667
  %v588 = vmul.f32 %v586, 0.006666667
  %v589 = vmul.f32 %v532, %v549
  %v590 = vmul.f32 %v534, %v550
  %v591 = vrot.slane %v16, 4
  %v592 = vrot.slane %v17, 4
  %v595 = vsub.f32 %v589, %v591
  %v596 = vsub.f32 %v590, %v592
  %v597 = vmul.f32 %v595, 0.006666667
  %v598 = vmul.f32 %v596, 0.006666667
  %v599 = vpack.c.bf16 %v304, %v303
  %v600 = vpack.c.bf16 %v304, %v304
  %v601 = vpack.c.bf16 %v597, %v597
  %v602 = vpack.c.bf16 %v598, %v598
  %v604 = vrot.slane %v600, 1
  %606 = vxpose.xlu0.c.b16.start [1/8] %v604, 128
  %607 = vxpose.xlu0.c.b16.cont [2/8] 0, 128
  %608 = vxpose.xlu0.c.b16.cont [3/8] 0, 128
  %609 = vxpose.xlu0.c.b16.cont [4/8] 0, 128
  %610 = vxpose.xlu0.c.b16.cont [5/8] 0, 128
  %611 = vxpose.xlu0.c.b16.cont [6/8] 0, 128
  %612 = vxpose.xlu0.c.b16.cont [7/8] 0, 128
  %613 = vxpose.xlu0.c.b16.end [8/8] 0, 128
  %v614 = vpop.trf.xlu0
  %v615 = vpop.trf.xlu0
  %v616 = vpop.trf.xlu0
  %v617 = vpop.trf.xlu0
  %v618 = vpop.trf.xlu0
  %v619 = vpop.trf.xlu0
  %v620 = vpop.trf.xlu0
  %v621 = vpop.trf.xlu0
  %vm622 = vcmask 23552
  %v624 = vsel %vm622, %v614, 0
  %vm626 = vcmask 1040384
  %v627 = vsel %vm626, 4294967295, 65535
  %v628 = vsel %vm343, %v627, 0
  %v630 = vand.u32 %v601, %v628
  %v633 = vand.u32 %v602, %v628
  %635 = vmatprep.subr.bf16.mxu0 0
  %636 = vmatpush1.bf16.msra.mxu0 0
  %637 = vmatprep.subr.bf16.mxu0 0
  %638 = vmatpush1.bf16.msra.mxu0 0
  %639 = vmatprep.subr.bf16.mxu0 0
  %640 = vmatpush1.bf16.msra.mxu0 0
  %641 = vmatprep.subr.bf16.mxu0 0
  %642 = vmatpush1.bf16.msra.mxu0 0
  %643 = vmatprep.subr.bf16.mxu0 0
  %644 = vmatpush1.bf16.msra.mxu0 0
  %645 = vmatprep.subr.bf16.mxu0 0
  %646 = vmatpush1.bf16.msra.mxu0 0
  %647 = vmatprep.subr.bf16.mxu0 0
  %648 = vmatpush1.bf16.msra.mxu0 0
  %649 = vmatprep.subr.bf16.mxu0 %v633
  %650 = vmatpush1.bf16.msra.mxu0 %v630
  %651 = vmatprep.subr.bf16.mxu0 0
  %652 = vmatpush2.bf16.msra.mxu0 0
  %653 = vmatprep.subr.bf16.mxu0 0
  %654 = vmatpush2.bf16.msra.mxu0 0
  %655 = vmatprep.subr.bf16.mxu0 0
  %656 = vmatpush2.bf16.msra.mxu0 0
  %657 = vmatprep.subr.bf16.mxu0 0
  %658 = vmatpush2.bf16.msra.mxu0 0
  %659 = vmatprep.subr.bf16.mxu0 0
  %660 = vmatpush2.bf16.msra.mxu0 0
  %661 = vmatprep.subr.bf16.mxu0 0
  %662 = vmatpush2.bf16.msra.mxu0 0
  %663 = vmatprep.subr.bf16.mxu0 0
  %664 = vmatpush2.bf16.msra.mxu0 0
  %665 = vmatprep.subr.bf16.mxu0 0
  %666 = vmatpush2.bf16.msra.mxu0 0
  %667 = vmatprep.mubr.bf16.mxu0 0
  %668 = vmatmul.mubr.bf16.gmra.mxu0 %v624
  %v669 = vpop.f32.mrf.mxu0
  %v670 = vadd.f32 0.0, %v669
  %v671 = vpop.f32.mrf.mxu0
  %v672 = vadd.f32 0.0, %v671
  %v673 = vpop.f32.mrf.mxu0
  %v674 = vadd.f32 0.0, %v673
  %v675 = vpop.f32.mrf.mxu0
  %v676 = vadd.f32 0.0, %v675
  %677 = vdwg.mxu0
  %vm678 = vcmp.gt.f32.partialorder %v427, 0.0
  %vm679 = vcmp.gt.f32.partialorder %v428, 0.0
  %vm680 = vcmp.gt.f32.partialorder %v429, 0.0
  %vm681 = vcmp.gt.f32.partialorder %v430, 0.0
  %v682 = vsel %vm678, %v670, 0.0
  %v683 = vsel %vm679, %v672, 0.0
  %v684 = vsel %vm680, %v674, 0.0
  %v685 = vsel %vm681, %v676, 0.0
  %v686 = vpack.c.bf16 %v684, %v682
  %v687 = vpack.c.bf16 %v685, %v683
  %688 = vxpose.xlu0.c.b16.start [1/8] %v599, 128
  %689 = vxpose.xlu0.c.b16.cont [2/8] 0, 128
  %690 = vxpose.xlu0.c.b16.cont [3/8] 0, 128
  %691 = vxpose.xlu0.c.b16.cont [4/8] 0, 128
  %692 = vxpose.xlu0.c.b16.cont [5/8] 0, 128
  %693 = vxpose.xlu0.c.b16.cont [6/8] 0, 128
  %694 = vxpose.xlu0.c.b16.cont [7/8] 0, 128
  %695 = vxpose.xlu0.c.b16.end [8/8] 0, 128
  %v696 = vpop.trf.xlu0
  %v697 = vpop.trf.xlu0
  %v698 = vpop.trf.xlu0
  %v699 = vpop.trf.xlu0
  %v700 = vpop.trf.xlu0
  %v701 = vpop.trf.xlu0
  %v702 = vpop.trf.xlu0
  %v703 = vpop.trf.xlu0
  %v705 = vsel %vm338, %v696, 0
  %vm707 = vcmask 1044480
  %v709 = vsel %vm707, %v686, 0
  %v712 = vsel %vm707, %v687, 0
  %714 = vmatprep.subr.bf16.mxu0 0
  %715 = vmatpush1.bf16.msra.mxu0 0
  %716 = vmatprep.subr.bf16.mxu0 0
  %717 = vmatpush1.bf16.msra.mxu0 0
  %718 = vmatprep.subr.bf16.mxu0 0
  %719 = vmatpush1.bf16.msra.mxu0 0
  %720 = vmatprep.subr.bf16.mxu0 0
  %721 = vmatpush1.bf16.msra.mxu0 0
  %722 = vmatprep.subr.bf16.mxu0 0
  %723 = vmatpush1.bf16.msra.mxu0 0
  %724 = vmatprep.subr.bf16.mxu0 0
  %725 = vmatpush1.bf16.msra.mxu0 0
  %726 = vmatprep.subr.bf16.mxu0 0
  %727 = vmatpush1.bf16.msra.mxu0 0
  %728 = vmatprep.subr.bf16.mxu0 %v712
  %729 = vmatpush1.bf16.msra.mxu0 %v709
  %730 = vmatprep.subr.bf16.mxu0 0
  %731 = vmatpush2.bf16.msra.mxu0 0
  %732 = vmatprep.subr.bf16.mxu0 0
  %733 = vmatpush2.bf16.msra.mxu0 0
  %734 = vmatprep.subr.bf16.mxu0 0
  %735 = vmatpush2.bf16.msra.mxu0 0
  %736 = vmatprep.subr.bf16.mxu0 0
  %737 = vmatpush2.bf16.msra.mxu0 0
  %738 = vmatprep.subr.bf16.mxu0 0
  %739 = vmatpush2.bf16.msra.mxu0 0
  %740 = vmatprep.subr.bf16.mxu0 0
  %741 = vmatpush2.bf16.msra.mxu0 0
  %742 = vmatprep.subr.bf16.mxu0 0
  %743 = vmatpush2.bf16.msra.mxu0 0
  %744 = vmatprep.subr.bf16.mxu0 0
  %745 = vmatpush2.bf16.msra.mxu0 0
  %746 = vmatprep.mubr.bf16.mxu0 0
  %747 = vmatmul.mubr.bf16.gmra.mxu0 %v705
  %v748 = vpop.f32.mrf.mxu0
  %v749 = vadd.f32 0.0, %v748
  %v750 = vpop.f32.mrf.mxu0
  %v751 = vadd.f32 0.0, %v750
  %v752 = vpop.f32.mrf.mxu0
  %v753 = vadd.f32 0.0, %v752
  %v754 = vpop.f32.mrf.mxu0
  %v755 = vadd.f32 0.0, %v754
  %756 = vdwg.mxu0
  %vm757 = vcmp.gt.f32.partialorder %v326, 0.0
  %vm758 = vcmp.gt.f32.partialorder %v327, 0.0
  %vm759 = vcmp.gt.f32.partialorder %v328, 0.0
  %vm760 = vcmp.gt.f32.partialorder %v329, 0.0
  %v761 = vsel %vm757, %v749, 0.0
  %v762 = vsel %vm758, %v751, 0.0
  %v763 = vsel %vm759, %v753, 0.0
  %v764 = vsel %vm760, %v755, 0.0
  %v765 = vpack.c.bf16 %v763, %v761
  %v766 = vpack.c.bf16 %v764, %v762
  %v767 = vpack.c.bf16 %v587, %v587
  %v768 = vpack.c.bf16 %v588, %v588
  %v771 = vrot.slane %v686, 3
  %v772 = vrot.slane %v687, 3
  %v775 = vrot.slane %v601, 6
  %v776 = vrot.slane %v602, 6
  %v779 = vsel %vm707, %v765, %v771
  %v783 = vsel %vm707, %v766, %v772
  %v785 = vsel %vm343, %v771, %v775
  %v788 = vsel %vm343, %v772, %v776
  %vm790 = vcmask 1043456
  %vm791 = vsmask.f32 3328
  %vm792 = vmand %vm790, %vm791
  %v793 = vsel %vm792, %v785, %v767
  %v794 = vsel %vm792, %v788, %v768
  %v795 = vpack.c.bf16 %v328, %v326
  %v796 = vpack.c.bf16 %v329, %v327
  %v797 = vpack.c.bf16 %v429, %v427
  %v798 = vpack.c.bf16 %v430, %v428
  %v801 = vrot.slane %v795, 6
  %v802 = vrot.slane %v796, 6
  %v805 = vrot.slane %v797, 1
  %v806 = vrot.slane %v798, 1
  %v809 = vsel %vm343, %v18, %v801
  %v812 = vsel %vm343, %v19, %v802
  %vm813 = vcmask 1046528
  %v815 = vsel %vm813, %v809, %v805
  %v818 = vsel %vm813, %v812, %v806
  %v820 = vsel %vm102, %v805, 1065369472
  %v822 = vsel %vm102, %v806, 1065369472
  %v823 = vsel %vm271, %v783, 0
  %v826 = vsel %vm271, %v794, 0
  %v828 = vsel %vm271, %v818, 0
  %v830 = vsel %vm271, %v822, 0
  %832 = vmatprep.subr.bf16.mxu0 0
  %833 = vmatpush1.bf16.xpose.msra.mxu0 0
  %834 = vmatprep.subr.bf16.mxu0 0
  %835 = vmatpush1.bf16.xpose.msra.mxu0 0
  %836 = vmatprep.subr.bf16.mxu0 0
  %837 = vmatpush1.bf16.xpose.msra.mxu0 0
  %838 = vmatprep.subr.bf16.mxu0 0
  %839 = vmatpush1.bf16.xpose.msra.mxu0 0
  %840 = vmatprep.subr.bf16.mxu0 0
  %841 = vmatpush1.bf16.xpose.msra.mxu0 0
  %842 = vmatprep.subr.bf16.mxu0 0
  %843 = vmatpush1.bf16.xpose.msra.mxu0 0
  %844 = vmatprep.subr.bf16.mxu0 %v830
  %845 = vmatpush1.bf16.xpose.msra.mxu0 %v820
  %846 = vmatprep.subr.bf16.mxu0 %v828
  %847 = vmatpush1.bf16.xpose.msra.mxu0 %v815
  %848 = vmatprep.subr.bf16.mxu0 0
  %849 = vmatpush2.bf16.xpose.msra.mxu0 0
  %850 = vmatprep.subr.bf16.mxu0 0
  %851 = vmatpush2.bf16.xpose.msra.mxu0 0
  %852 = vmatprep.subr.bf16.mxu0 0
  %853 = vmatpush2.bf16.xpose.msra.mxu0 0
  %854 = vmatprep.subr.bf16.mxu0 0
  %855 = vmatpush2.bf16.xpose.msra.mxu0 0
  %856 = vmatprep.subr.bf16.mxu0 0
  %857 = vmatpush2.bf16.xpose.msra.mxu0 0
  %858 = vmatprep.subr.bf16.mxu0 0
  %859 = vmatpush2.bf16.xpose.msra.mxu0 0
  %860 = vmatprep.subr.bf16.mxu0 0
  %861 = vmatpush2.bf16.xpose.msra.mxu0 0
  %862 = vmatprep.subr.bf16.mxu0 0
  %863 = vmatpush2.bf16.xpose.msra.mxu0 0
  %864 = vmatprep.mubr.bf16.mxu0 %v823
  %865 = vmatmul.mubr.bf16.gmra.mxu0 %v779
  %v866 = vpop.f32.mrf.mxu0
  %v867 = vadd.f32 0.0, %v866
  %v868 = vpop.f32.mrf.mxu0
  %v869 = vpop.f32.mrf.mxu0
  %v870 = vadd.f32 0.0, %v869
  %v871 = vpop.f32.mrf.mxu0
  %872 = vmatprep.mubr.bf16.mxu0 %v826
  %873 = vmatmul.mubr.bf16.gmra.mxu0 %v793
  %v874 = vpop.f32.mrf.mxu0
  %v875 = vadd.f32 0.0, %v874
  %v876 = vpop.f32.mrf.mxu0
  %v877 = vpop.f32.mrf.mxu0
  %v878 = vpop.f32.mrf.mxu0
  %879 = vdwg.mxu0
  %vm880 = vcmask 203776
  %881 = vst.msk [vmem:[%s3] sm:$0xff] %vm880, %v867
  %882 = vst.msk [vmem:[%s3 + $0x8] sm:$0xff] %vm880, %v870
  %883 = vst.msk [vmem:[%s3 + $0x10] sm:$0xff] %vm880, %v875
  %s884 = scalar_lea.vmem %s2, 16
  %v885 = vld [vmem:[%s884] sm:$0xff]
  %v886 = vld [vmem:[%s884 + $0x8] sm:$0xff]
  %s887 = smul.u32 2, 2
  %s888 = smul.addr %s887, 8
  %s889 = scalar_lea.vmem [#allocation2], %s888
  %v890 = vld [vmem:[%s889] sm:$0xff]
  %v891 = vld [vmem:[%s889 + $0x8] sm:$0xff]
  %v892 = vld [vmem:[%s889 + $0x10] sm:$0x3]
  %v893 = vld [vmem:[%s889 + $0x18] sm:$0x3]
  %895 = vset.pattern.permute.xlu0 10
  %896 = vperm.xlu0 %895, %v885
  %v897 = vpop.permute.xlu0 %896
  %900 = vset.pattern.permute.xlu0 10
  %901 = vperm.xlu0 %900, %v886
  %v902 = vpop.permute.xlu0 %901
  %v904 = vadd.f32 %v890, %v897
  %v905 = vadd.f32 %v891, %v897
  %v906 = vadd.f32 %v892, %v902
  %v907 = vadd.f32 %v893, %v902
  %v908 = vmax.f32 %v904, 0.0
  %v909 = vmax.f32 %v905, 0.0
  %v910 = vmax.f32 %v906, 0.0
  %v911 = vmax.f32 %v907, 0.0
  %912 = vset.pattern.permute.xlu0 11
  %913 = vperm.xlu0 %912, %v885
  %v914 = vpop.permute.xlu0 %913
  %916 = vset.pattern.permute.xlu0 11
  %917 = vperm.xlu0 %916, %v886
  %v918 = vpop.permute.xlu0 %917
  %v920 = vsel %vm338, %v885, 0
  %v922 = vsel %vm338, %v886, 0
  %v925 = vsel %vm343, %v910, 0
  %v928 = vsel %vm343, %v911, 0
  %930 = vmatprep.subr.mxu0 0.0
  %931 = vmatpush1.msra.mxu0 0.0
  %932 = vmatprep.subr.mxu0 0.0
  %933 = vmatpush1.msra.mxu0 0.0
  %934 = vmatprep.subr.mxu0 0.0
  %935 = vmatpush1.msra.mxu0 0.0
  %936 = vmatprep.subr.mxu0 0.0
  %937 = vmatpush1.msra.mxu0 0.0
  %938 = vmatprep.subr.mxu0 0.0
  %939 = vmatpush1.msra.mxu0 0.0
  %940 = vmatprep.subr.mxu0 0.0
  %941 = vmatpush1.msra.mxu0 0.0
  %942 = vmatprep.subr.mxu0 0.0
  %943 = vmatpush1.msra.mxu0 0.0
  %944 = vmatprep.subr.mxu0 0.0
  %945 = vmatpush1.msra.mxu0 0.0
  %946 = vmatprep.subr.mxu0 0.0
  %947 = vmatpush1.msra.mxu0 0.0
  %948 = vmatprep.subr.mxu0 0.0
  %949 = vmatpush1.msra.mxu0 0.0
  %950 = vmatprep.subr.mxu0 0.0
  %951 = vmatpush1.msra.mxu0 0.0
  %952 = vmatprep.subr.mxu0 0.0
  %953 = vmatpush1.msra.mxu0 0.0
  %954 = vmatprep.subr.mxu0 0.0
  %955 = vmatpush1.msra.mxu0 0.0
  %956 = vmatprep.subr.mxu0 0.0
  %957 = vmatpush1.msra.mxu0 0.0
  %958 = vmatprep.subr.mxu0 %v928
  %959 = vmatpush1.msra.mxu0 %v925
  %960 = vmatprep.subr.mxu0 %v909
  %961 = vmatpush1.msra.mxu0 %v908
  %962 = vmatprep.subr.mxu0 0.0
  %963 = vmatpush2.msra.mxu0 0.0
  %964 = vmatprep.subr.mxu0 0.0
  %965 = vmatpush2.msra.mxu0 0.0
  %966 = vmatprep.subr.mxu0 0.0
  %967 = vmatpush2.msra.mxu0 0.0
  %968 = vmatprep.subr.mxu0 0.0
  %969 = vmatpush2.msra.mxu0 0.0
  %970 = vmatprep.subr.mxu0 0.0
  %971 = vmatpush2.msra.mxu0 0.0
  %972 = vmatprep.subr.mxu0 0.0
  %973 = vmatpush2.msra.mxu0 0.0
  %974 = vmatprep.subr.mxu0 0.0
  %975 = vmatpush2.msra.mxu0 0.0
  %976 = vmatprep.subr.mxu0 0.0
  %977 = vmatpush2.msra.mxu0 0.0
  %978 = vmatprep.subr.mxu0 0.0
  %979 = vmatpush2.msra.mxu0 0.0
  %980 = vmatprep.subr.mxu0 0.0
  %981 = vmatpush2.msra.mxu0 0.0
  %982 = vmatprep.subr.mxu0 0.0
  %983 = vmatpush2.msra.mxu0 0.0
  %984 = vmatprep.subr.mxu0 0.0
  %985 = vmatpush2.msra.mxu0 0.0
  %986 = vmatprep.subr.mxu0 0.0
  %987 = vmatpush2.msra.mxu0 0.0
  %988 = vmatprep.subr.mxu0 0.0
  %989 = vmatpush2.msra.mxu0 0.0
  %990 = vmatprep.subr.mxu0 0.0
  %991 = vmatpush2.msra.mxu0 0.0
  %992 = vmatprep.subr.mxu0 0.0
  %993 = vmatpush2.msra.mxu0 0.0
  %994 = vmatprep.mubr.f32.mxu0 0.0
  %995 = vmatmul.mubr.f32.gmra.mxu0 %v920
  %v996 = vpop.f32.mrf.mxu0
  %v997 = vadd.f32 %v914, %v996
  %v998 = vpop.f32.mrf.mxu0
  %v999 = vadd.f32 %v914, %v998
  %1000 = vmatprep.mubr.f32.mxu0 0.0
  %1001 = vmatmul.mubr.f32.gmra.mxu0 %v922
  %v1002 = vpop.f32.mrf.mxu0
  %v1003 = vadd.f32 %v918, %v1002
  %v1004 = vpop.f32.mrf.mxu0
  %v1005 = vadd.f32 %v918, %v1004
  %1006 = vdwg.mxu0
  %v1007 = vmax.f32 %v997, 0.0
  %v1008 = vmax.f32 %v999, 0.0
  %v1009 = vmax.f32 %v1003, 0.0
  %v1010 = vmax.f32 %v1005, 0.0
  %v1011 = vrot.slane %v886, 2
  %v1012 = vrot.slane %v902, 2
  %v1014 = vsel %vm338, %v1011, 0
  %v1017 = vsel %vm343, %v1009, 0
  %v1020 = vsel %vm343, %v1010, 0
  %1022 = vmatprep.subr.mxu0 0.0
  %1023 = vmatpush1.msra.mxu0 0.0
  %1024 = vmatprep.subr.mxu0 0.0
  %1025 = vmatpush1.msra.mxu0 0.0
  %1026 = vmatprep.subr.mxu0 0.0
  %1027 = vmatpush1.msra.mxu0 0.0
  %1028 = vmatprep.subr.mxu0 0.0
  %1029 = vmatpush1.msra.mxu0 0.0
  %1030 = vmatprep.subr.mxu0 0.0
  %1031 = vmatpush1.msra.mxu0 0.0
  %1032 = vmatprep.subr.mxu0 0.0
  %1033 = vmatpush1.msra.mxu0 0.0
  %1034 = vmatprep.subr.mxu0 0.0
  %1035 = vmatpush1.msra.mxu0 0.0
  %1036 = vmatprep.subr.mxu0 0.0
  %1037 = vmatpush1.msra.mxu0 0.0
  %1038 = vmatprep.subr.mxu0 0.0
  %1039 = vmatpush1.msra.mxu0 0.0
  %1040 = vmatprep.subr.mxu0 0.0
  %1041 = vmatpush1.msra.mxu0 0.0
  %1042 = vmatprep.subr.mxu0 0.0
  %1043 = vmatpush1.msra.mxu0 0.0
  %1044 = vmatprep.subr.mxu0 0.0
  %1045 = vmatpush1.msra.mxu0 0.0
  %1046 = vmatprep.subr.mxu0 0.0
  %1047 = vmatpush1.msra.mxu0 0.0
  %1048 = vmatprep.subr.mxu0 0.0
  %1049 = vmatpush1.msra.mxu0 0.0
  %1050 = vmatprep.subr.mxu0 %v1020
  %1051 = vmatpush1.msra.mxu0 %v1017
  %1052 = vmatprep.subr.mxu0 %v1008
  %1053 = vmatpush1.msra.mxu0 %v1007
  %1054 = vmatprep.subr.mxu0 0.0
  %1055 = vmatpush2.msra.mxu0 0.0
  %1056 = vmatprep.subr.mxu0 0.0
  %1057 = vmatpush2.msra.mxu0 0.0
  %1058 = vmatprep.subr.mxu0 0.0
  %1059 = vmatpush2.msra.mxu0 0.0
  %1060 = vmatprep.subr.mxu0 0.0
  %1061 = vmatpush2.msra.mxu0 0.0
  %1062 = vmatprep.subr.mxu0 0.0
  %1063 = vmatpush2.msra.mxu0 0.0
  %1064 = vmatprep.subr.mxu0 0.0
  %1065 = vmatpush2.msra.mxu0 0.0
  %1066 = vmatprep.subr.mxu0 0.0
  %1067 = vmatpush2.msra.mxu0 0.0
  %1068 = vmatprep.subr.mxu0 0.0
  %1069 = vmatpush2.msra.mxu0 0.0
  %1070 = vmatprep.subr.mxu0 0.0
  %1071 = vmatpush2.msra.mxu0 0.0
  %1072 = vmatprep.subr.mxu0 0.0
  %1073 = vmatpush2.msra.mxu0 0.0
  %1074 = vmatprep.subr.mxu0 0.0
  %1075 = vmatpush2.msra.mxu0 0.0
  %1076 = vmatprep.subr.mxu0 0.0
  %1077 = vmatpush2.msra.mxu0 0.0
  %1078 = vmatprep.subr.mxu0 0.0
  %1079 = vmatpush2.msra.mxu0 0.0
  %1080 = vmatprep.subr.mxu0 0.0
  %1081 = vmatpush2.msra.mxu0 0.0
  %1082 = vmatprep.subr.mxu0 0.0
  %1083 = vmatpush2.msra.mxu0 0.0
  %1084 = vmatprep.subr.mxu0 0.0
  %1085 = vmatpush2.msra.mxu0 0.0
  %1086 = vmatprep.mubr.f32.mxu0 0.0
  %1087 = vmatmul.mubr.f32.gmra.mxu0 %v1014
  %v1088 = vpop.f32.mrf.mxu0
  %v1089 = vadd.f32 %v1012, %v1088
  %v1090 = vpop.f32.mrf.mxu0
  %v1091 = vadd.f32 %v1012, %v1090
  %1092 = vdwg.mxu0
  %v1093 = vsel %vm513, %v1089, -inf
  %v1094 = vrot.slane %v1093, 4
  %v1095 = vmax.f32 %v1093, %v1094
  %v1096 = vrot.slane %v1095, 2
  %v1097 = vmax.f32 %v1095, %v1096
  %v1098 = vrot.slane %v1097, 1
  %v1099 = vmax.f32 %v1097, %v1098
  %v1100 = vsel %vm521, %v1091, -inf
  %v1101 = vrot.slane %v1100, 4
  %v1102 = vmax.f32 %v1100, %v1101
  %v1103 = vrot.slane %v1102, 2
  %v1104 = vmax.f32 %v1102, %v1103
  %v1105 = vrot.slane %v1104, 1
  %v1106 = vmax.f32 %v1104, %v1105
  %v1107 = vsub.f32 %v1089, %v1099
  %v1108 = vsub.f32 %v1091, %v1106
  %v1109 = vmul.f32 %v1107, 1.442695
  %v1110 = vpow.pop %v1109
  %v1111 = vmul.f32 %v1108, 1.442695
  %v1112 = vpow.pop %v1111
  %v1113 = vsel %vm513, %v1110, 0.0
  %v1114 = vrot.slane %v1113, 4
  %v1115 = vadd.f32 %v1113, %v1114
  %v1116 = vrot.slane %v1115, 2
  %v1117 = vadd.f32 %v1115, %v1116
  %v1118 = vrot.slane %v1117, 1
  %v1119 = vadd.f32 %v1117, %v1118
  %v1120 = vsel %vm521, %v1112, 0.0
  %v1121 = vrot.slane %v1120, 4
  %v1122 = vadd.f32 %v1120, %v1121
  %v1123 = vrot.slane %v1122, 2
  %v1124 = vadd.f32 %v1122, %v1123
  %v1125 = vrot.slane %v1124, 1
  %v1126 = vadd.f32 %v1124, %v1125
  %v1127 = vrcp.pop %v1119
  %v1128 = vrcp.pop %v1126
  %v1131 = vrot.slane %v1089, 4
  %v1132 = vrot.slane %v1091, 4
  %v1135 = vmul.f32 %v16, %v1131
  %v1136 = vmul.f32 %v17, %v1132
  %v1139 = vrot.slane %v1135, 4
  %v1140 = vrot.slane %v1136, 4
  %v1143 = vsel %vm513, %v1139, 0.0
  %v1144 = vrot.slane %v1143, 4
  %v1145 = vadd.f32 %v1143, %v1144
  %v1146 = vrot.slane %v1145, 2
  %v1147 = vadd.f32 %v1145, %v1146
  %v1148 = vrot.slane %v1147, 1
  %v1149 = vadd.f32 %v1147, %v1148
  %v1150 = vsel %vm521, %v1140, 0.0
  %v1151 = vrot.slane %v1150, 4
  %v1152 = vadd.f32 %v1150, %v1151
  %v1153 = vrot.slane %v1152, 2
  %v1154 = vadd.f32 %v1152, %v1153
  %v1155 = vrot.slane %v1154, 1
  %v1156 = vadd.f32 %v1154, %v1155
  %v1157 = vlog2.pop %v1119
  %v1158 = vmul.f32 %v1157, 0.6931472
  %v1159 = vlog2.pop %v1126
  %v1160 = vmul.f32 %v1159, 0.6931472
  %v1161 = vadd.f32 %v1158, %v1099
  %v1162 = vadd.f32 %v1160, %v1106
  %v1163 = vsub.f32 %v1161, %v1149
  %v1164 = vsub.f32 %v1162, %v1156
  %v1165 = vmul.f32 %v1163, 0.006666667
  %v1166 = vmul.f32 %v1164, 0.006666667
  %v1167 = vmul.f32 %v1110, %v1127
  %v1168 = vmul.f32 %v1112, %v1128
  %v1169 = vsub.f32 %v1167, %v591
  %v1170 = vsub.f32 %v1168, %v592
  %v1171 = vmul.f32 %v1169, 0.006666667
  %v1172 = vmul.f32 %v1170, 0.006666667
  %v1173 = vpack.c.bf16 %v886, %v885
  %v1174 = vpack.c.bf16 %v886, %v886
  %v1175 = vpack.c.bf16 %v1171, %v1171
  %v1176 = vpack.c.bf16 %v1172, %v1172
  %v1178 = vrot.slane %v1174, 1
  %1180 = vxpose.xlu0.c.b16.start [1/8] %v1178, 128
  %1181 = vxpose.xlu0.c.b16.cont [2/8] 0, 128
  %1182 = vxpose.xlu0.c.b16.cont [3/8] 0, 128
  %1183 = vxpose.xlu0.c.b16.cont [4/8] 0, 128
  %1184 = vxpose.xlu0.c.b16.cont [5/8] 0, 128
  %1185 = vxpose.xlu0.c.b16.cont [6/8] 0, 128
  %1186 = vxpose.xlu0.c.b16.cont [7/8] 0, 128
  %1187 = vxpose.xlu0.c.b16.end [8/8] 0, 128
  %v1188 = vpop.trf.xlu0
  %v1189 = vpop.trf.xlu0
  %v1190 = vpop.trf.xlu0
  %v1191 = vpop.trf.xlu0
  %v1192 = vpop.trf.xlu0
  %v1193 = vpop.trf.xlu0
  %v1194 = vpop.trf.xlu0
  %v1195 = vpop.trf.xlu0
  %v1197 = vsel %vm622, %v1188, 0
  %v1200 = vand.u32 %v1175, %v628
  %v1203 = vand.u32 %v1176, %v628
  %1205 = vmatprep.subr.bf16.mxu0 0
  %1206 = vmatpush1.bf16.msra.mxu0 0
  %1207 = vmatprep.subr.bf16.mxu0 0
  %1208 = vmatpush1.bf16.msra.mxu0 0
  %1209 = vmatprep.subr.bf16.mxu0 0
  %1210 = vmatpush1.bf16.msra.mxu0 0
  %1211 = vmatprep.subr.bf16.mxu0 0
  %1212 = vmatpush1.bf16.msra.mxu0 0
  %1213 = vmatprep.subr.bf16.mxu0 0
  %1214 = vmatpush1.bf16.msra.mxu0 0
  %1215 = vmatprep.subr.bf16.mxu0 0
  %1216 = vmatpush1.bf16.msra.mxu0 0
  %1217 = vmatprep.subr.bf16.mxu0 0
  %1218 = vmatpush1.bf16.msra.mxu0 0
  %1219 = vmatprep.subr.bf16.mxu0 %v1203
  %1220 = vmatpush1.bf16.msra.mxu0 %v1200
  %1221 = vmatprep.subr.bf16.mxu0 0
  %1222 = vmatpush2.bf16.msra.mxu0 0
  %1223 = vmatprep.subr.bf16.mxu0 0
  %1224 = vmatpush2.bf16.msra.mxu0 0
  %1225 = vmatprep.subr.bf16.mxu0 0
  %1226 = vmatpush2.bf16.msra.mxu0 0
  %1227 = vmatprep.subr.bf16.mxu0 0
  %1228 = vmatpush2.bf16.msra.mxu0 0
  %1229 = vmatprep.subr.bf16.mxu0 0
  %1230 = vmatpush2.bf16.msra.mxu0 0
  %1231 = vmatprep.subr.bf16.mxu0 0
  %1232 = vmatpush2.bf16.msra.mxu0 0
  %1233 = vmatprep.subr.bf16.mxu0 0
  %1234 = vmatpush2.bf16.msra.mxu0 0
  %1235 = vmatprep.subr.bf16.mxu0 0
  %1236 = vmatpush2.bf16.msra.mxu0 0
  %1237 = vmatprep.mubr.bf16.mxu0 0
  %1238 = vmatmul.mubr.bf16.gmra.mxu0 %v1197
  %v1239 = vpop.f32.mrf.mxu0
  %v1240 = vadd.f32 0.0, %v1239
  %v1241 = vpop.f32.mrf.mxu0
  %v1242 = vadd.f32 0.0, %v1241
  %v1243 = vpop.f32.mrf.mxu0
  %v1244 = vadd.f32 0.0, %v1243
  %v1245 = vpop.f32.mrf.mxu0
  %v1246 = vadd.f32 0.0, %v1245
  %1247 = vdwg.mxu0
  %vm1248 = vcmp.gt.f32.partialorder %v1007, 0.0
  %vm1249 = vcmp.gt.f32.partialorder %v1008, 0.0
  %vm1250 = vcmp.gt.f32.partialorder %v1009, 0.0
  %vm1251 = vcmp.gt.f32.partialorder %v1010, 0.0
  %v1252 = vsel %vm1248, %v1240, 0.0
  %v1253 = vsel %vm1249, %v1242, 0.0
  %v1254 = vsel %vm1250, %v1244, 0.0
  %v1255 = vsel %vm1251, %v1246, 0.0
  %v1256 = vpack.c.bf16 %v1254, %v1252
  %v1257 = vpack.c.bf16 %v1255, %v1253
  %1258 = vxpose.xlu0.c.b16.start [1/8] %v1173, 128
  %1259 = vxpose.xlu0.c.b16.cont [2/8] 0, 128
  %1260 = vxpose.xlu0.c.b16.cont [3/8] 0, 128
  %1261 = vxpose.xlu0.c.b16.cont [4/8] 0, 128
  %1262 = vxpose.xlu0.c.b16.cont [5/8] 0, 128
  %1263 = vxpose.xlu0.c.b16.cont [6/8] 0, 128
  %1264 = vxpose.xlu0.c.b16.cont [7/8] 0, 128
  %1265 = vxpose.xlu0.c.b16.end [8/8] 0, 128
  %v1266 = vpop.trf.xlu0
  %v1267 = vpop.trf.xlu0
  %v1268 = vpop.trf.xlu0
  %v1269 = vpop.trf.xlu0
  %v1270 = vpop.trf.xlu0
  %v1271 = vpop.trf.xlu0
  %v1272 = vpop.trf.xlu0
  %v1273 = vpop.trf.xlu0
  %v1275 = vsel %vm338, %v1266, 0
  %v1278 = vsel %vm707, %v1256, 0
  %v1281 = vsel %vm707, %v1257, 0
  %1283 = vmatprep.subr.bf16.mxu0 0
  %1284 = vmatpush1.bf16.msra.mxu0 0
  %1285 = vmatprep.subr.bf16.mxu0 0
  %1286 = vmatpush1.bf16.msra.mxu0 0
  %1287 = vmatprep.subr.bf16.mxu0 0
  %1288 = vmatpush1.bf16.msra.mxu0 0
  %1289 = vmatprep.subr.bf16.mxu0 0
  %1290 = vmatpush1.bf16.msra.mxu0 0
  %1291 = vmatprep.subr.bf16.mxu0 0
  %1292 = vmatpush1.bf16.msra.mxu0 0
  %1293 = vmatprep.subr.bf16.mxu0 0
  %1294 = vmatpush1.bf16.msra.mxu0 0
  %1295 = vmatprep.subr.bf16.mxu0 0
  %1296 = vmatpush1.bf16.msra.mxu0 0
  %1297 = vmatprep.subr.bf16.mxu0 %v1281
  %1298 = vmatpush1.bf16.msra.mxu0 %v1278
  %1299 = vmatprep.subr.bf16.mxu0 0
  %1300 = vmatpush2.bf16.msra.mxu0 0
  %1301 = vmatprep.subr.bf16.mxu0 0
  %1302 = vmatpush2.bf16.msra.mxu0 0
  %1303 = vmatprep.subr.bf16.mxu0 0
  %1304 = vmatpush2.bf16.msra.mxu0 0
  %1305 = vmatprep.subr.bf16.mxu0 0
  %1306 = vmatpush2.bf16.msra.mxu0 0
  %1307 = vmatprep.subr.bf16.mxu0 0
  %1308 = vmatpush2.bf16.msra.mxu0 0
  %1309 = vmatprep.subr.bf16.mxu0 0
  %1310 = vmatpush2.bf16.msra.mxu0 0
  %1311 = vmatprep.subr.bf16.mxu0 0
  %1312 = vmatpush2.bf16.msra.mxu0 0
  %1313 = vmatprep.subr.bf16.mxu0 0
  %1314 = vmatpush2.bf16.msra.mxu0 0
  %1315 = vmatprep.mubr.bf16.mxu0 0
  %1316 = vmatmul.mubr.bf16.gmra.mxu0 %v1275
  %v1317 = vpop.f32.mrf.mxu0
  %v1318 = vadd.f32 0.0, %v1317
  %v1319 = vpop.f32.mrf.mxu0
  %v1320 = vadd.f32 0.0, %v1319
  %v1321 = vpop.f32.mrf.mxu0
  %v1322 = vadd.f32 0.0, %v1321
  %v1323 = vpop.f32.mrf.mxu0
  %v1324 = vadd.f32 0.0, %v1323
  %1325 = vdwg.mxu0
  %vm1326 = vcmp.gt.f32.partialorder %v908, 0.0
  %vm1327 = vcmp.gt.f32.partialorder %v909, 0.0
  %vm1328 = vcmp.gt.f32.partialorder %v910, 0.0
  %vm1329 = vcmp.gt.f32.partialorder %v911, 0.0
  %v1330 = vsel %vm1326, %v1318, 0.0
  %v1331 = vsel %vm1327, %v1320, 0.0
  %v1332 = vsel %vm1328, %v1322, 0.0
  %v1333 = vsel %vm1329, %v1324, 0.0
  %v1334 = vpack.c.bf16 %v1332, %v1330
  %v1335 = vpack.c.bf16 %v1333, %v1331
  %v1336 = vpack.c.bf16 %v1165, %v1165
  %v1337 = vpack.c.bf16 %v1166, %v1166
  %v1340 = vrot.slane %v1256, 3
  %v1341 = vrot.slane %v1257, 3
  %v1344 = vrot.slane %v1175, 6
  %v1345 = vrot.slane %v1176, 6
  %v1348 = vsel %vm707, %v1334, %v1340
  %v1352 = vsel %vm707, %v1335, %v1341
  %v1354 = vsel %vm343, %v1340, %v1344
  %v1357 = vsel %vm343, %v1341, %v1345
  %v1359 = vsel %vm792, %v1354, %v1336
  %v1360 = vsel %vm792, %v1357, %v1337
  %v1361 = vpack.c.bf16 %v910, %v908
  %v1362 = vpack.c.bf16 %v911, %v909
  %v1363 = vpack.c.bf16 %v1009, %v1007
  %v1364 = vpack.c.bf16 %v1010, %v1008
  %v1367 = vrot.slane %v1361, 6
  %v1368 = vrot.slane %v1362, 6
  %v1371 = vrot.slane %v1363, 1
  %v1372 = vrot.slane %v1364, 1
  %v1374 = vsel %vm343, %v18, %v1367
  %v1376 = vsel %vm343, %v19, %v1368
  %v1378 = vsel %vm813, %v1374, %v1371
  %v1381 = vsel %vm813, %v1376, %v1372
  %v1382 = vsel %vm102, %v1371, 1065369472
  %v1384 = vsel %vm102, %v1372, 1065369472
  %v1385 = vsel %vm271, %v1352, 0
  %v1388 = vsel %vm271, %v1360, 0
  %v1390 = vsel %vm271, %v1381, 0
  %v1392 = vsel %vm271, %v1384, 0
  %1394 = vmatprep.subr.bf16.mxu0 0
  %1395 = vmatpush1.bf16.xpose.msra.mxu0 0
  %1396 = vmatprep.subr.bf16.mxu0 0
  %1397 = vmatpush1.bf16.xpose.msra.mxu0 0
  %1398 = vmatprep.subr.bf16.mxu0 0
  %1399 = vmatpush1.bf16.xpose.msra.mxu0 0
  %1400 = vmatprep.subr.bf16.mxu0 0
  %1401 = vmatpush1.bf16.xpose.msra.mxu0 0
  %1402 = vmatprep.subr.bf16.mxu0 0
  %1403 = vmatpush1.bf16.xpose.msra.mxu0 0
  %1404 = vmatprep.subr.bf16.mxu0 0
  %1405 = vmatpush1.bf16.xpose.msra.mxu0 0
  %1406 = vmatprep.subr.bf16.mxu0 %v1392
  %1407 = vmatpush1.bf16.xpose.msra.mxu0 %v1382
  %1408 = vmatprep.subr.bf16.mxu0 %v1390
  %1409 = vmatpush1.bf16.xpose.msra.mxu0 %v1378
  %1410 = vmatprep.subr.bf16.mxu0 0
  %1411 = vmatpush2.bf16.xpose.msra.mxu0 0
  %1412 = vmatprep.subr.bf16.mxu0 0
  %1413 = vmatpush2.bf16.xpose.msra.mxu0 0
  %1414 = vmatprep.subr.bf16.mxu0 0
  %1415 = vmatpush2.bf16.xpose.msra.mxu0 0
  %1416 = vmatprep.subr.bf16.mxu0 0
  %1417 = vmatpush2.bf16.xpose.msra.mxu0 0
  %1418 = vmatprep.subr.bf16.mxu0 0
  %1419 = vmatpush2.bf16.xpose.msra.mxu0 0
  %1420 = vmatprep.subr.bf16.mxu0 0
  %1421 = vmatpush2.bf16.xpose.msra.mxu0 0
  %1422 = vmatprep.subr.bf16.mxu0 0
  %1423 = vmatpush2.bf16.xpose.msra.mxu0 0
  %1424 = vmatprep.subr.bf16.mxu0 0
  %1425 = vmatpush2.bf16.xpose.msra.mxu0 0
  %1426 = vmatprep.mubr.bf16.mxu0 %v1385
  %1427 = vmatmul.mubr.bf16.gmra.mxu0 %v1348
  %v1428 = vpop.f32.mrf.mxu0
  %v1429 = vadd.f32 0.0, %v1428
  %v1430 = vpop.f32.mrf.mxu0
  %v1431 = vpop.f32.mrf.mxu0
  %v1432 = vadd.f32 0.0, %v1431
  %v1433 = vpop.f32.mrf.mxu0
  %1434 = vmatprep.mubr.bf16.mxu0 %v1388
  %1435 = vmatmul.mubr.bf16.gmra.mxu0 %v1359
  %v1436 = vpop.f32.mrf.mxu0
  %v1437 = vadd.f32 0.0, %v1436
  %v1438 = vpop.f32.mrf.mxu0
  %v1439 = vpop.f32.mrf.mxu0
  %v1440 = vpop.f32.mrf.mxu0
  %1441 = vdwg.mxu0
  %s1442 = scalar_lea.vmem %s3, 24
  %1443 = vst.msk [vmem:[%s1442] sm:$0xff] %vm880, %v1429
  %1444 = vst.msk [vmem:[%s1442 + $0x8] sm:$0xff] %vm880, %v1432
  %1445 = vst.msk [vmem:[%s1442 + $0x10] sm:$0xff] %vm880, %v1437
  %s1446 = scalar_lea.vmem %s2, 32
  %v1447 = vld [vmem:[%s1446] sm:$0xff]
  %v1448 = vld [vmem:[%s1446 + $0x8] sm:$0xff]
  %s1449 = smul.u32 4, 2
  %s1450 = smul.addr %s1449, 8
  %s1451 = scalar_lea.vmem [#allocation2], %s1450
  %v1452 = vld [vmem:[%s1451] sm:$0xff]
  %v1453 = vld [vmem:[%s1451 + $0x8] sm:$0xff]
  %v1454 = vld [vmem:[%s1451 + $0x10] sm:$0x3]
  %v1455 = vld [vmem:[%s1451 + $0x18] sm:$0x3]
  %1457 = vset.pattern.permute.xlu0 10
  %1458 = vperm.xlu0 %1457, %v1447
  %v1459 = vpop.permute.xlu0 %1458
  %1462 = vset.pattern.permute.xlu0 10
  %1463 = vperm.xlu0 %1462, %v1448
  %v1464 = vpop.permute.xlu0 %1463
  %v1466 = vadd.f32 %v1452, %v1459
  %v1467 = vadd.f32 %v1453, %v1459
  %v1468 = vadd.f32 %v1454, %v1464
  %v1469 = vadd.f32 %v1455, %v1464
  %v1470 = vmax.f32 %v1466, 0.0
  %v1471 = vmax.f32 %v1467, 0.0
  %v1472 = vmax.f32 %v1468, 0.0
  %v1473 = vmax.f32 %v1469, 0.0
  %1474 = vset.pattern.permute.xlu0 11
  %1475 = vperm.xlu0 %1474, %v1447
  %v1476 = vpop.permute.xlu0 %1475
  %1478 = vset.pattern.permute.xlu0 11
  %1479 = vperm.xlu0 %1478, %v1448
  %v1480 = vpop.permute.xlu0 %1479
  %v1482 = vsel %vm338, %v1447, 0
  %v1484 = vsel %vm338, %v1448, 0
  %v1487 = vsel %vm343, %v1472, 0
  %v1490 = vsel %vm343, %v1473, 0
  %1492 = vmatprep.subr.mxu0 0.0
  %1493 = vmatpush1.msra.mxu0 0.0
  %1494 = vmatprep.subr.mxu0 0.0
  %1495 = vmatpush1.msra.mxu0 0.0
  %1496 = vmatprep.subr.mxu0 0.0
  %1497 = vmatpush1.msra.mxu0 0.0
  %1498 = vmatprep.subr.mxu0 0.0
  %1499 = vmatpush1.msra.mxu0 0.0
  %1500 = vmatprep.subr.mxu0 0.0
  %1501 = vmatpush1.msra.mxu0 0.0
  %1502 = vmatprep.subr.mxu0 0.0
  %1503 = vmatpush1.msra.mxu0 0.0
  %1504 = vmatprep.subr.mxu0 0.0
  %1505 = vmatpush1.msra.mxu0 0.0
  %1506 = vmatprep.subr.mxu0 0.0
  %1507 = vmatpush1.msra.mxu0 0.0
  %1508 = vmatprep.subr.mxu0 0.0
  %1509 = vmatpush1.msra.mxu0 0.0
  %1510 = vmatprep.subr.mxu0 0.0
  %1511 = vmatpush1.msra.mxu0 0.0
  %1512 = vmatprep.subr.mxu0 0.0
  %1513 = vmatpush1.msra.mxu0 0.0
  %1514 = vmatprep.subr.mxu0 0.0
  %1515 = vmatpush1.msra.mxu0 0.0
  %1516 = vmatprep.subr.mxu0 0.0
  %1517 = vmatpush1.msra.mxu0 0.0
  %1518 = vmatprep.subr.mxu0 0.0
  %1519 = vmatpush1.msra.mxu0 0.0
  %1520 = vmatprep.subr.mxu0 %v1490
  %1521 = vmatpush1.msra.mxu0 %v1487
  %1522 = vmatprep.subr.mxu0 %v1471
  %1523 = vmatpush1.msra.mxu0 %v1470
  %1524 = vmatprep.subr.mxu0 0.0
  %1525 = vmatpush2.msra.mxu0 0.0
  %1526 = vmatprep.subr.mxu0 0.0
  %1527 = vmatpush2.msra.mxu0 0.0
  %1528 = vmatprep.subr.mxu0 0.0
  %1529 = vmatpush2.msra.mxu0 0.0
  %1530 = vmatprep.subr.mxu0 0.0
  %1531 = vmatpush2.msra.mxu0 0.0
  %1532 = vmatprep.subr.mxu0 0.0
  %1533 = vmatpush2.msra.mxu0 0.0
  %1534 = vmatprep.subr.mxu0 0.0
  %1535 = vmatpush2.msra.mxu0 0.0
  %1536 = vmatprep.subr.mxu0 0.0
  %1537 = vmatpush2.msra.mxu0 0.0
  %1538 = vmatprep.subr.mxu0 0.0
  %1539 = vmatpush2.msra.mxu0 0.0
  %1540 = vmatprep.subr.mxu0 0.0
  %1541 = vmatpush2.msra.mxu0 0.0
  %1542 = vmatprep.subr.mxu0 0.0
  %1543 = vmatpush2.msra.mxu0 0.0
  %1544 = vmatprep.subr.mxu0 0.0
  %1545 = vmatpush2.msra.mxu0 0.0
  %1546 = vmatprep.subr.mxu0 0.0
  %1547 = vmatpush2.msra.mxu0 0.0
  %1548 = vmatprep.subr.mxu0 0.0
  %1549 = vmatpush2.msra.mxu0 0.0
  %1550 = vmatprep.subr.mxu0 0.0
  %1551 = vmatpush2.msra.mxu0 0.0
  %1552 = vmatprep.subr.mxu0 0.0
  %1553 = vmatpush2.msra.mxu0 0.0
  %1554 = vmatprep.subr.mxu0 0.0
  %1555 = vmatpush2.msra.mxu0 0.0
  %1556 = vmatprep.mubr.f32.mxu0 0.0
  %1557 = vmatmul.mubr.f32.gmra.mxu0 %v1482
  %v1558 = vpop.f32.mrf.mxu0
  %v1559 = vadd.f32 %v1476, %v1558
  %v1560 = vpop.f32.mrf.mxu0
  %v1561 = vadd.f32 %v1476, %v1560
  %1562 = vmatprep.mubr.f32.mxu0 0.0
  %1563 = vmatmul.mubr.f32.gmra.mxu0 %v1484
  %v1564 = vpop.f32.mrf.mxu0
  %v1565 = vadd.f32 %v1480, %v1564
  %v1566 = vpop.f32.mrf.mxu0
  %v1567 = vadd.f32 %v1480, %v1566
  %1568 = vdwg.mxu0
  %v1569 = vmax.f32 %v1559, 0.0
  %v1570 = vmax.f32 %v1561, 0.0
  %v1571 = vmax.f32 %v1565, 0.0
  %v1572 = vmax.f32 %v1567, 0.0
  %v1573 = vrot.slane %v1448, 2
  %v1574 = vrot.slane %v1464, 2
  %v1576 = vsel %vm338, %v1573, 0
  %v1579 = vsel %vm343, %v1571, 0
  %v1582 = vsel %vm343, %v1572, 0
  %1584 = vmatprep.subr.mxu0 0.0
  %1585 = vmatpush1.msra.mxu0 0.0
  %1586 = vmatprep.subr.mxu0 0.0
  %1587 = vmatpush1.msra.mxu0 0.0
  %1588 = vmatprep.subr.mxu0 0.0
  %1589 = vmatpush1.msra.mxu0 0.0
  %1590 = vmatprep.subr.mxu0 0.0
  %1591 = vmatpush1.msra.mxu0 0.0
  %1592 = vmatprep.subr.mxu0 0.0
  %1593 = vmatpush1.msra.mxu0 0.0
  %1594 = vmatprep.subr.mxu0 0.0
  %1595 = vmatpush1.msra.mxu0 0.0
  %1596 = vmatprep.subr.mxu0 0.0
  %1597 = vmatpush1.msra.mxu0 0.0
  %1598 = vmatprep.subr.mxu0 0.0
  %1599 = vmatpush1.msra.mxu0 0.0
  %1600 = vmatprep.subr.mxu0 0.0
  %1601 = vmatpush1.msra.mxu0 0.0
  %1602 = vmatprep.subr.mxu0 0.0
  %1603 = vmatpush1.msra.mxu0 0.0
  %1604 = vmatprep.subr.mxu0 0.0
  %1605 = vmatpush1.msra.mxu0 0.0
  %1606 = vmatprep.subr.mxu0 0.0
  %1607 = vmatpush1.msra.mxu0 0.0
  %1608 = vmatprep.subr.mxu0 0.0
  %1609 = vmatpush1.msra.mxu0 0.0
  %1610 = vmatprep.subr.mxu0 0.0
  %1611 = vmatpush1.msra.mxu0 0.0
  %1612 = vmatprep.subr.mxu0 %v1582
  %1613 = vmatpush1.msra.mxu0 %v1579
  %1614 = vmatprep.subr.mxu0 %v1570
  %1615 = vmatpush1.msra.mxu0 %v1569
  %1616 = vmatprep.subr.mxu0 0.0
  %1617 = vmatpush2.msra.mxu0 0.0
  %1618 = vmatprep.subr.mxu0 0.0
  %1619 = vmatpush2.msra.mxu0 0.0
  %1620 = vmatprep.subr.mxu0 0.0
  %1621 = vmatpush2.msra.mxu0 0.0
  %1622 = vmatprep.subr.mxu0 0.0
  %1623 = vmatpush2.msra.mxu0 0.0
  %1624 = vmatprep.subr.mxu0 0.0
  %1625 = vmatpush2.msra.mxu0 0.0
  %1626 = vmatprep.subr.mxu0 0.0
  %1627 = vmatpush2.msra.mxu0 0.0
  %1628 = vmatprep.subr.mxu0 0.0
  %1629 = vmatpush2.msra.mxu0 0.0
  %1630 = vmatprep.subr.mxu0 0.0
  %1631 = vmatpush2.msra.mxu0 0.0
  %1632 = vmatprep.subr.mxu0 0.0
  %1633 = vmatpush2.msra.mxu0 0.0
  %1634 = vmatprep.subr.mxu0 0.0
  %1635 = vmatpush2.msra.mxu0 0.0
  %1636 = vmatprep.subr.mxu0 0.0
  %1637 = vmatpush2.msra.mxu0 0.0
  %1638 = vmatprep.subr.mxu0 0.0
  %1639 = vmatpush2.msra.mxu0 0.0
  %1640 = vmatprep.subr.mxu0 0.0
  %1641 = vmatpush2.msra.mxu0 0.0
  %1642 = vmatprep.subr.mxu0 0.0
  %1643 = vmatpush2.msra.mxu0 0.0
  %1644 = vmatprep.subr.mxu0 0.0
  %1645 = vmatpush2.msra.mxu0 0.0
  %1646 = vmatprep.subr.mxu0 0.0
  %1647 = vmatpush2.msra.mxu0 0.0
  %1648 = vmatprep.mubr.f32.mxu0 0.0
  %1649 = vmatmul.mubr.f32.gmra.mxu0 %v1576
  %v1650 = vpop.f32.mrf.mxu0
  %v1651 = vadd.f32 %v1574, %v1650
  %v1652 = vpop.f32.mrf.mxu0
  %v1653 = vadd.f32 %v1574, %v1652
  %1654 = vdwg.mxu0
  %v1655 = vsel %vm513, %v1651, -inf
  %v1656 = vrot.slane %v1655, 4
  %v1657 = vmax.f32 %v1655, %v1656
  %v1658 = vrot.slane %v1657, 2
  %v1659 = vmax.f32 %v1657, %v1658
  %v1660 = vrot.slane %v1659, 1
  %v1661 = vmax.f32 %v1659, %v1660
  %v1662 = vsel %vm521, %v1653, -inf
  %v1663 = vrot.slane %v1662, 4
  %v1664 = vmax.f32 %v1662, %v1663
  %v1665 = vrot.slane %v1664, 2
  %v1666 = vmax.f32 %v1664, %v1665
  %v1667 = vrot.slane %v1666, 1
  %v1668 = vmax.f32 %v1666, %v1667
  %v1669 = vsub.f32 %v1651, %v1661
  %v1670 = vsub.f32 %v1653, %v1668
  %v1671 = vmul.f32 %v1669, 1.442695
  %v1672 = vpow.pop %v1671
  %v1673 = vmul.f32 %v1670, 1.442695
  %v1674 = vpow.pop %v1673
  %v1675 = vsel %vm513, %v1672, 0.0
  %v1676 = vrot.slane %v1675, 4
  %v1677 = vadd.f32 %v1675, %v1676
  %v1678 = vrot.slane %v1677, 2
  %v1679 = vadd.f32 %v1677, %v1678
  %v1680 = vrot.slane %v1679, 1
  %v1681 = vadd.f32 %v1679, %v1680
  %v1682 = vsel %vm521, %v1674, 0.0
  %v1683 = vrot.slane %v1682, 4
  %v1684 = vadd.f32 %v1682, %v1683
  %v1685 = vrot.slane %v1684, 2
  %v1686 = vadd.f32 %v1684, %v1685
  %v1687 = vrot.slane %v1686, 1
  %v1688 = vadd.f32 %v1686, %v1687
  %v1689 = vrcp.pop %v1681
  %v1690 = vrcp.pop %v1688
  %v1693 = vrot.slane %v1651, 4
  %v1694 = vrot.slane %v1653, 4
  %v1697 = vmul.f32 %v16, %v1693
  %v1698 = vmul.f32 %v17, %v1694
  %v1701 = vrot.slane %v1697, 4
  %v1702 = vrot.slane %v1698, 4
  %v1705 = vsel %vm513, %v1701, 0.0
  %v1706 = vrot.slane %v1705, 4
  %v1707 = vadd.f32 %v1705, %v1706
  %v1708 = vrot.slane %v1707, 2
  %v1709 = vadd.f32 %v1707, %v1708
  %v1710 = vrot.slane %v1709, 1
  %v1711 = vadd.f32 %v1709, %v1710
  %v1712 = vsel %vm521, %v1702, 0.0
  %v1713 = vrot.slane %v1712, 4
  %v1714 = vadd.f32 %v1712, %v1713
  %v1715 = vrot.slane %v1714, 2
  %v1716 = vadd.f32 %v1714, %v1715
  %v1717 = vrot.slane %v1716, 1
  %v1718 = vadd.f32 %v1716, %v1717
  %v1719 = vlog2.pop %v1681
  %v1720 = vmul.f32 %v1719, 0.6931472
  %v1721 = vlog2.pop %v1688
  %v1722 = vmul.f32 %v1721, 0.6931472
  %v1723 = vadd.f32 %v1720, %v1661
  %v1724 = vadd.f32 %v1722, %v1668
  %v1725 = vsub.f32 %v1723, %v1711
  %v1726 = vsub.f32 %v1724, %v1718
  %v1727 = vmul.f32 %v1725, 0.006666667
  %v1728 = vmul.f32 %v1726, 0.006666667
  %v1729 = vmul.f32 %v1672, %v1689
  %v1730 = vmul.f32 %v1674, %v1690
  %v1731 = vsub.f32 %v1729, %v591
  %v1732 = vsub.f32 %v1730, %v592
  %v1733 = vmul.f32 %v1731, 0.006666667
  %v1734 = vmul.f32 %v1732, 0.006666667
  %v1735 = vpack.c.bf16 %v1448, %v1447
  %v1736 = vpack.c.bf16 %v1448, %v1448
  %v1737 = vpack.c.bf16 %v1733, %v1733
  %v1738 = vpack.c.bf16 %v1734, %v1734
  %v1740 = vrot.slane %v1736, 1
  %1742 = vxpose.xlu0.c.b16.start [1/8] %v1740, 128
  %1743 = vxpose.xlu0.c.b16.cont [2/8] 0, 128
  %1744 = vxpose.xlu0.c.b16.cont [3/8] 0, 128
  %1745 = vxpose.xlu0.c.b16.cont [4/8] 0, 128
  %1746 = vxpose.xlu0.c.b16.cont [5/8] 0, 128
  %1747 = vxpose.xlu0.c.b16.cont [6/8] 0, 128
  %1748 = vxpose.xlu0.c.b16.cont [7/8] 0, 128
  %1749 = vxpose.xlu0.c.b16.end [8/8] 0, 128
  %v1750 = vpop.trf.xlu0
  %v1751 = vpop.trf.xlu0
  %v1752 = vpop.trf.xlu0
  %v1753 = vpop.trf.xlu0
  %v1754 = vpop.trf.xlu0
  %v1755 = vpop.trf.xlu0
  %v1756 = vpop.trf.xlu0
  %v1757 = vpop.trf.xlu0
  %v1759 = vsel %vm622, %v1750, 0
  %v1762 = vand.u32 %v1737, %v628
  %v1765 = vand.u32 %v1738, %v628
  %1767 = vmatprep.subr.bf16.mxu0 0
  %1768 = vmatpush1.bf16.msra.mxu0 0
  %1769 = vmatprep.subr.bf16.mxu0 0
  %1770 = vmatpush1.bf16.msra.mxu0 0
  %1771 = vmatprep.subr.bf16.mxu0 0
  %1772 = vmatpush1.bf16.msra.mxu0 0
  %1773 = vmatprep.subr.bf16.mxu0 0
  %1774 = vmatpush1.bf16.msra.mxu0 0
  %1775 = vmatprep.subr.bf16.mxu0 0
  %1776 = vmatpush1.bf16.msra.mxu0 0
  %1777 = vmatprep.subr.bf16.mxu0 0
  %1778 = vmatpush1.bf16.msra.mxu0 0
  %1779 = vmatprep.subr.bf16.mxu0 0
  %1780 = vmatpush1.bf16.msra.mxu0 0
  %1781 = vmatprep.subr.bf16.mxu0 %v1765
  %1782 = vmatpush1.bf16.msra.mxu0 %v1762
  %1783 = vmatprep.subr.bf16.mxu0 0
  %1784 = vmatpush2.bf16.msra.mxu0 0
  %1785 = vmatprep.subr.bf16.mxu0 0
  %1786 = vmatpush2.bf16.msra.mxu0 0
  %1787 = vmatprep.subr.bf16.mxu0 0
  %1788 = vmatpush2.bf16.msra.mxu0 0
  %1789 = vmatprep.subr.bf16.mxu0 0
  %1790 = vmatpush2.bf16.msra.mxu0 0
  %1791 = vmatprep.subr.bf16.mxu0 0
  %1792 = vmatpush2.bf16.msra.mxu0 0
  %1793 = vmatprep.subr.bf16.mxu0 0
  %1794 = vmatpush2.bf16.msra.mxu0 0
  %1795 = vmatprep.subr.bf16.mxu0 0
  %1796 = vmatpush2.bf16.msra.mxu0 0
  %1797 = vmatprep.subr.bf16.mxu0 0
  %1798 = vmatpush2.bf16.msra.mxu0 0
  %1799 = vmatprep.mubr.bf16.mxu0 0
  %1800 = vmatmul.mubr.bf16.gmra.mxu0 %v1759
  %v1801 = vpop.f32.mrf.mxu0
  %v1802 = vadd.f32 0.0, %v1801
  %v1803 = vpop.f32.mrf.mxu0
  %v1804 = vadd.f32 0.0, %v1803
  %v1805 = vpop.f32.mrf.mxu0
  %v1806 = vadd.f32 0.0, %v1805
  %v1807 = vpop.f32.mrf.mxu0
  %v1808 = vadd.f32 0.0, %v1807
  %1809 = vdwg.mxu0
  %vm1810 = vcmp.gt.f32.partialorder %v1569, 0.0
  %vm1811 = vcmp.gt.f32.partialorder %v1570, 0.0
  %vm1812 = vcmp.gt.f32.partialorder %v1571, 0.0
  %vm1813 = vcmp.gt.f32.partialorder %v1572, 0.0
  %v1814 = vsel %vm1810, %v1802, 0.0
  %v1815 = vsel %vm1811, %v1804, 0.0
  %v1816 = vsel %vm1812, %v1806, 0.0
  %v1817 = vsel %vm1813, %v1808, 0.0
  %v1818 = vpack.c.bf16 %v1816, %v1814
  %v1819 = vpack.c.bf16 %v1817, %v1815
  %1820 = vxpose.xlu0.c.b16.start [1/8] %v1735, 128
  %1821 = vxpose.xlu0.c.b16.cont [2/8] 0, 128
  %1822 = vxpose.xlu0.c.b16.cont [3/8] 0, 128
  %1823 = vxpose.xlu0.c.b16.cont [4/8] 0, 128
  %1824 = vxpose.xlu0.c.b16.cont [5/8] 0, 128
  %1825 = vxpose.xlu0.c.b16.cont [6/8] 0, 128
  %1826 = vxpose.xlu0.c.b16.cont [7/8] 0, 128
  %1827 = vxpose.xlu0.c.b16.end [8/8] 0, 128
  %v1828 = vpop.trf.xlu0
  %v1829 = vpop.trf.xlu0
  %v1830 = vpop.trf.xlu0
  %v1831 = vpop.trf.xlu0
  %v1832 = vpop.trf.xlu0
  %v1833 = vpop.trf.xlu0
  %v1834 = vpop.trf.xlu0
  %v1835 = vpop.trf.xlu0
  %v1837 = vsel %vm338, %v1828, 0
  %v1840 = vsel %vm707, %v1818, 0
  %v1843 = vsel %vm707, %v1819, 0
  %1845 = vmatprep.subr.bf16.mxu0 0
  %1846 = vmatpush1.bf16.msra.mxu0 0
  %1847 = vmatprep.subr.bf16.mxu0 0
  %1848 = vmatpush1.bf16.msra.mxu0 0
  %1849 = vmatprep.subr.bf16.mxu0 0
  %1850 = vmatpush1.bf16.msra.mxu0 0
  %1851 = vmatprep.subr.bf16.mxu0 0
  %1852 = vmatpush1.bf16.msra.mxu0 0
  %1853 = vmatprep.subr.bf16.mxu0 0
  %1854 = vmatpush1.bf16.msra.mxu0 0
  %1855 = vmatprep.subr.bf16.mxu0 0
  %1856 = vmatpush1.bf16.msra.mxu0 0
  %1857 = vmatprep.subr.bf16.mxu0 0
  %1858 = vmatpush1.bf16.msra.mxu0 0
  %1859 = vmatprep.subr.bf16.mxu0 %v1843
  %1860 = vmatpush1.bf16.msra.mxu0 %v1840
  %1861 = vmatprep.subr.bf16.mxu0 0
  %1862 = vmatpush2.bf16.msra.mxu0 0
  %1863 = vmatprep.subr.bf16.mxu0 0
  %1864 = vmatpush2.bf16.msra.mxu0 0
  %1865 = vmatprep.subr.bf16.mxu0 0
  %1866 = vmatpush2.bf16.msra.mxu0 0
  %1867 = vmatprep.subr.bf16.mxu0 0
  %1868 = vmatpush2.bf16.msra.mxu0 0
  %1869 = vmatprep.subr.bf16.mxu0 0
  %1870 = vmatpush2.bf16.msra.mxu0 0
  %1871 = vmatprep.subr.bf16.mxu0 0
  %1872 = vmatpush2.bf16.msra.mxu0 0
  %1873 = vmatprep.subr.bf16.mxu0 0
  %1874 = vmatpush2.bf16.msra.mxu0 0
  %1875 = vmatprep.subr.bf16.mxu0 0
  %1876 = vmatpush2.bf16.msra.mxu0 0
  %1877 = vmatprep.mubr.bf16.mxu0 0
  %1878 = vmatmul.mubr.bf16.gmra.mxu0 %v1837
  %v1879 = vpop.f32.mrf.mxu0
  %v1880 = vadd.f32 0.0, %v1879
  %v1881 = vpop.f32.mrf.mxu0
  %v1882 = vadd.f32 0.0, %v1881
  %v1883 = vpop.f32.mrf.mxu0
  %v1884 = vadd.f32 0.0, %v1883
  %v1885 = vpop.f32.mrf.mxu0
  %v1886 = vadd.f32 0.0, %v1885
  %1887 = vdwg.mxu0
  %vm1888 = vcmp.gt.f32.partialorder %v1470, 0.0
  %vm1889 = vcmp.gt.f32.partialorder %v1471, 0.0
  %vm1890 = vcmp.gt.f32.partialorder %v1472, 0.0
  %vm1891 = vcmp.gt.f32.partialorder %v1473, 0.0
  %v1892 = vsel %vm1888, %v1880, 0.0
  %v1893 = vsel %vm1889, %v1882, 0.0
  %v1894 = vsel %vm1890, %v1884, 0.0
  %v1895 = vsel %vm1891, %v1886, 0.0
  %v1896 = vpack.c.bf16 %v1894, %v1892
  %v1897 = vpack.c.bf16 %v1895, %v1893
  %v1898 = vpack.c.bf16 %v1727, %v1727
  %v1899 = vpack.c.bf16 %v1728, %v1728
  %v1902 = vrot.slane %v1818, 3
  %v1903 = vrot.slane %v1819, 3
  %v1906 = vrot.slane %v1737, 6
  %v1907 = vrot.slane %v1738, 6
  %v1910 = vsel %vm707, %v1896, %v1902
  %v1914 = vsel %vm707, %v1897, %v1903
  %v1916 = vsel %vm343, %v1902, %v1906
  %v1919 = vsel %vm343, %v1903, %v1907
  %v1921 = vsel %vm792, %v1916, %v1898
  %v1922 = vsel %vm792, %v1919, %v1899
  %v1923 = vpack.c.bf16 %v1472, %v1470
  %v1924 = vpack.c.bf16 %v1473, %v1471
  %v1925 = vpack.c.bf16 %v1571, %v1569
  %v1926 = vpack.c.bf16 %v1572, %v1570
  %v1929 = vrot.slane %v1923, 6
  %v1930 = vrot.slane %v1924, 6
  %v1933 = vrot.slane %v1925, 1
  %v1934 = vrot.slane %v1926, 1
  %v1936 = vsel %vm343, %v18, %v1929
  %v1938 = vsel %vm343, %v19, %v1930
  %v1940 = vsel %vm813, %v1936, %v1933
  %v1943 = vsel %vm813, %v1938, %v1934
  %v1944 = vsel %vm102, %v1933, 1065369472
  %v1946 = vsel %vm102, %v1934, 1065369472
  %v1947 = vsel %vm271, %v1914, 0
  %v1950 = vsel %vm271, %v1922, 0
  %v1952 = vsel %vm271, %v1943, 0
  %v1954 = vsel %vm271, %v1946, 0
  %1956 = vmatprep.subr.bf16.mxu0 0
  %1957 = vmatpush1.bf16.xpose.msra.mxu0 0
  %1958 = vmatprep.subr.bf16.mxu0 0
  %1959 = vmatpush1.bf16.xpose.msra.mxu0 0
  %1960 = vmatprep.subr.bf16.mxu0 0
  %1961 = vmatpush1.bf16.xpose.msra.mxu0 0
  %1962 = vmatprep.subr.bf16.mxu0 0
  %1963 = vmatpush1.bf16.xpose.msra.mxu0 0
  %1964 = vmatprep.subr.bf16.mxu0 0
  %1965 = vmatpush1.bf16.xpose.msra.mxu0 0
  %1966 = vmatprep.subr.bf16.mxu0 0
  %1967 = vmatpush1.bf16.xpose.msra.mxu0 0
  %1968 = vmatprep.subr.bf16.mxu0 %v1954
  %1969 = vmatpush1.bf16.xpose.msra.mxu0 %v1944
  %1970 = vmatprep.subr.bf16.mxu0 %v1952
  %1971 = vmatpush1.bf16.xpose.msra.mxu0 %v1940
  %1972 = vmatprep.subr.bf16.mxu0 0
  %1973 = vmatpush2.bf16.xpose.msra.mxu0 0
  %1974 = vmatprep.subr.bf16.mxu0 0
  %1975 = vmatpush2.bf16.xpose.msra.mxu0 0
  %1976 = vmatprep.subr.bf16.mxu0 0
  %1977 = vmatpush2.bf16.xpose.msra.mxu0 0
  %1978 = vmatprep.subr.bf16.mxu0 0
  %1979 = vmatpush2.bf16.xpose.msra.mxu0 0
  %1980 = vmatprep.subr.bf16.mxu0 0
  %1981 = vmatpush2.bf16.xpose.msra.mxu0 0
  %1982 = vmatprep.subr.bf16.mxu0 0
  %1983 = vmatpush2.bf16.xpose.msra.mxu0 0
  %1984 = vmatprep.subr.bf16.mxu0 0
  %1985 = vmatpush2.bf16.xpose.msra.mxu0 0
  %1986 = vmatprep.subr.bf16.mxu0 0
  %1987 = vmatpush2.bf16.xpose.msra.mxu0 0
  %1988 = vmatprep.mubr.bf16.mxu0 %v1947
  %1989 = vmatmul.mubr.bf16.gmra.mxu0 %v1910
  %v1990 = vpop.f32.mrf.mxu0
  %v1991 = vadd.f32 0.0, %v1990
  %v1992 = vpop.f32.mrf.mxu0
  %v1993 = vpop.f32.mrf.mxu0
  %v1994 = vadd.f32 0.0, %v1993
  %v1995 = vpop.f32.mrf.mxu0
  %1996 = vmatprep.mubr.bf16.mxu0 %v1950
  %1997 = vmatmul.mubr.bf16.gmra.mxu0 %v1921
  %v1998 = vpop.f32.mrf.mxu0
  %v1999 = vadd.f32 0.0, %v1998
  %v2000 = vpop.f32.mrf.mxu0
  %v2001 = vpop.f32.mrf.mxu0
  %v2002 = vpop.f32.mrf.mxu0
  %2003 = vdwg.mxu0
  %s2004 = scalar_lea.vmem %s3, 48
  %2005 = vst.msk [vmem:[%s2004] sm:$0xff] %vm880, %v1991
  %2006 = vst.msk [vmem:[%s2004 + $0x8] sm:$0xff] %vm880, %v1994
  %2007 = vst.msk [vmem:[%s2004 + $0x10] sm:$0xff] %vm880, %v1999
  %s2008 = scalar_lea.vmem %s2, 48
  %v2009 = vld [vmem:[%s2008] sm:$0xff]
  %v2010 = vld [vmem:[%s2008 + $0x8] sm:$0xff]
  %s2011 = smul.u32 6, 2
  %s2012 = smul.addr %s2011, 8
  %s2013 = scalar_lea.vmem [#allocation2], %s2012
  %v2014 = vld [vmem:[%s2013] sm:$0xff]
  %v2015 = vld [vmem:[%s2013 + $0x8] sm:$0xff]
  %v2016 = vld [vmem:[%s2013 + $0x10] sm:$0x3]
  %v2017 = vld [vmem:[%s2013 + $0x18] sm:$0x3]
  %2019 = vset.pattern.permute.xlu0 10
  %2020 = vperm.xlu0 %2019, %v2009
  %v2021 = vpop.permute.xlu0 %2020
  %2024 = vset.pattern.permute.xlu0 10
  %2025 = vperm.xlu0 %2024, %v2010
  %v2026 = vpop.permute.xlu0 %2025
  %v2028 = vadd.f32 %v2014, %v2021
  %v2029 = vadd.f32 %v2015, %v2021
  %v2030 = vadd.f32 %v2016, %v2026
  %v2031 = vadd.f32 %v2017, %v2026
  %v2032 = vmax.f32 %v2028, 0.0
  %v2033 = vmax.f32 %v2029, 0.0
  %v2034 = vmax.f32 %v2030, 0.0
  %v2035 = vmax.f32 %v2031, 0.0
  %2036 = vset.pattern.permute.xlu0 11
  %2037 = vperm.xlu0 %2036, %v2009
  %v2038 = vpop.permute.xlu0 %2037
  %2040 = vset.pattern.permute.xlu0 11
  %2041 = vperm.xlu0 %2040, %v2010
  %v2042 = vpop.permute.xlu0 %2041
  %v2044 = vsel %vm338, %v2009, 0
  %v2046 = vsel %vm338, %v2010, 0
  %v2049 = vsel %vm343, %v2034, 0
  %v2052 = vsel %vm343, %v2035, 0
  %2054 = vmatprep.subr.mxu0 0.0
  %2055 = vmatpush1.msra.mxu0 0.0
  %2056 = vmatprep.subr.mxu0 0.0
  %2057 = vmatpush1.msra.mxu0 0.0
  %2058 = vmatprep.subr.mxu0 0.0
  %2059 = vmatpush1.msra.mxu0 0.0
  %2060 = vmatprep.subr.mxu0 0.0
  %2061 = vmatpush1.msra.mxu0 0.0
  %2062 = vmatprep.subr.mxu0 0.0
  %2063 = vmatpush1.msra.mxu0 0.0
  %2064 = vmatprep.subr.mxu0 0.0
  %2065 = vmatpush1.msra.mxu0 0.0
  %2066 = vmatprep.subr.mxu0 0.0
  %2067 = vmatpush1.msra.mxu0 0.0
  %2068 = vmatprep.subr.mxu0 0.0
  %2069 = vmatpush1.msra.mxu0 0.0
  %2070 = vmatprep.subr.mxu0 0.0
  %2071 = vmatpush1.msra.mxu0 0.0
  %2072 = vmatprep.subr.mxu0 0.0
  %2073 = vmatpush1.msra.mxu0 0.0
  %2074 = vmatprep.subr.mxu0 0.0
  %2075 = vmatpush1.msra.mxu0 0.0
  %2076 = vmatprep.subr.mxu0 0.0
  %2077 = vmatpush1.msra.mxu0 0.0
  %2078 = vmatprep.subr.mxu0 0.0
  %2079 = vmatpush1.msra.mxu0 0.0
  %2080 = vmatprep.subr.mxu0 0.0
  %2081 = vmatpush1.msra.mxu0 0.0
  %2082 = vmatprep.subr.mxu0 %v2052
  %2083 = vmatpush1.msra.mxu0 %v2049
  %2084 = vmatprep.subr.mxu0 %v2033
  %2085 = vmatpush1.msra.mxu0 %v2032
  %2086 = vmatprep.subr.mxu0 0.0
  %2087 = vmatpush2.msra.mxu0 0.0
  %2088 = vmatprep.subr.mxu0 0.0
  %2089 = vmatpush2.msra.mxu0 0.0
  %2090 = vmatprep.subr.mxu0 0.0
  %2091 = vmatpush2.msra.mxu0 0.0
  %2092 = vmatprep.subr.mxu0 0.0
  %2093 = vmatpush2.msra.mxu0 0.0
  %2094 = vmatprep.subr.mxu0 0.0
  %2095 = vmatpush2.msra.mxu0 0.0
  %2096 = vmatprep.subr.mxu0 0.0
  %2097 = vmatpush2.msra.mxu0 0.0
  %2098 = vmatprep.subr.mxu0 0.0
  %2099 = vmatpush2.msra.mxu0 0.0
  %2100 = vmatprep.subr.mxu0 0.0
  %2101 = vmatpush2.msra.mxu0 0.0
  %2102 = vmatprep.subr.mxu0 0.0
  %2103 = vmatpush2.msra.mxu0 0.0
  %2104 = vmatprep.subr.mxu0 0.0
  %2105 = vmatpush2.msra.mxu0 0.0
  %2106 = vmatprep.subr.mxu0 0.0
  %2107 = vmatpush2.msra.mxu0 0.0
  %2108 = vmatprep.subr.mxu0 0.0
  %2109 = vmatpush2.msra.mxu0 0.0
  %2110 = vmatprep.subr.mxu0 0.0
  %2111 = vmatpush2.msra.mxu0 0.0
  %2112 = vmatprep.subr.mxu0 0.0
  %2113 = vmatpush2.msra.mxu0 0.0
  %2114 = vmatprep.subr.mxu0 0.0
  %2115 = vmatpush2.msra.mxu0 0.0
  %2116 = vmatprep.subr.mxu0 0.0
  %2117 = vmatpush2.msra.mxu0 0.0
  %2118 = vmatprep.mubr.f32.mxu0 0.0
  %2119 = vmatmul.mubr.f32.gmra.mxu0 %v2044
  %v2120 = vpop.f32.mrf.mxu0
  %v2121 = vadd.f32 %v2038, %v2120
  %v2122 = vpop.f32.mrf.mxu0
  %v2123 = vadd.f32 %v2038, %v2122
  %2124 = vmatprep.mubr.f32.mxu0 0.0
  %2125 = vmatmul.mubr.f32.gmra.mxu0 %v2046
  %v2126 = vpop.f32.mrf.mxu0
  %v2127 = vadd.f32 %v2042, %v2126
  %v2128 = vpop.f32.mrf.mxu0
  %v2129 = vadd.f32 %v2042, %v2128
  %2130 = vdwg.mxu0
  %v2131 = vmax.f32 %v2121, 0.0
  %v2132 = vmax.f32 %v2123, 0.0
  %v2133 = vmax.f32 %v2127, 0.0
  %v2134 = vmax.f32 %v2129, 0.0
  %v2135 = vrot.slane %v2010, 2
  %v2136 = vrot.slane %v2026, 2
  %v2138 = vsel %vm338, %v2135, 0
  %v2141 = vsel %vm343, %v2133, 0
  %v2144 = vsel %vm343, %v2134, 0
  %2146 = vmatprep.subr.mxu0 0.0
  %2147 = vmatpush1.msra.mxu0 0.0
  %2148 = vmatprep.subr.mxu0 0.0
  %2149 = vmatpush1.msra.mxu0 0.0
  %2150 = vmatprep.subr.mxu0 0.0
  %2151 = vmatpush1.msra.mxu0 0.0
  %2152 = vmatprep.subr.mxu0 0.0
  %2153 = vmatpush1.msra.mxu0 0.0
  %2154 = vmatprep.subr.mxu0 0.0
  %2155 = vmatpush1.msra.mxu0 0.0
  %2156 = vmatprep.subr.mxu0 0.0
  %2157 = vmatpush1.msra.mxu0 0.0
  %2158 = vmatprep.subr.mxu0 0.0
  %2159 = vmatpush1.msra.mxu0 0.0
  %2160 = vmatprep.subr.mxu0 0.0
  %2161 = vmatpush1.msra.mxu0 0.0
  %2162 = vmatprep.subr.mxu0 0.0
  %2163 = vmatpush1.msra.mxu0 0.0
  %2164 = vmatprep.subr.mxu0 0.0
  %2165 = vmatpush1.msra.mxu0 0.0
  %2166 = vmatprep.subr.mxu0 0.0
  %2167 = vmatpush1.msra.mxu0 0.0
  %2168 = vmatprep.subr.mxu0 0.0
  %2169 = vmatpush1.msra.mxu0 0.0
  %2170 = vmatprep.subr.mxu0 0.0
  %2171 = vmatpush1.msra.mxu0 0.0
  %2172 = vmatprep.subr.mxu0 0.0
  %2173 = vmatpush1.msra.mxu0 0.0
  %2174 = vmatprep.subr.mxu0 %v2144
  %2175 = vmatpush1.msra.mxu0 %v2141
  %2176 = vmatprep.subr.mxu0 %v2132
  %2177 = vmatpush1.msra.mxu0 %v2131
  %2178 = vmatprep.subr.mxu0 0.0
  %2179 = vmatpush2.msra.mxu0 0.0
  %2180 = vmatprep.subr.mxu0 0.0
  %2181 = vmatpush2.msra.mxu0 0.0
  %2182 = vmatprep.subr.mxu0 0.0
  %2183 = vmatpush2.msra.mxu0 0.0
  %2184 = vmatprep.subr.mxu0 0.0
  %2185 = vmatpush2.msra.mxu0 0.0
  %2186 = vmatprep.subr.mxu0 0.0
  %2187 = vmatpush2.msra.mxu0 0.0
  %2188 = vmatprep.subr.mxu0 0.0
  %2189 = vmatpush2.msra.mxu0 0.0
  %2190 = vmatprep.subr.mxu0 0.0
  %2191 = vmatpush2.msra.mxu0 0.0
  %2192 = vmatprep.subr.mxu0 0.0
  %2193 = vmatpush2.msra.mxu0 0.0
  %2194 = vmatprep.subr.mxu0 0.0
  %2195 = vmatpush2.msra.mxu0 0.0
  %2196 = vmatprep.subr.mxu0 0.0
  %2197 = vmatpush2.msra.mxu0 0.0
  %2198 = vmatprep.subr.mxu0 0.0
  %2199 = vmatpush2.msra.mxu0 0.0
  %2200 = vmatprep.subr.mxu0 0.0
  %2201 = vmatpush2.msra.mxu0 0.0
  %2202 = vmatprep.subr.mxu0 0.0
  %2203 = vmatpush2.msra.mxu0 0.0
  %2204 = vmatprep.subr.mxu0 0.0
  %2205 = vmatpush2.msra.mxu0 0.0
  %2206 = vmatprep.subr.mxu0 0.0
  %2207 = vmatpush2.msra.mxu0 0.0
  %2208 = vmatprep.subr.mxu0 0.0
  %2209 = vmatpush2.msra.mxu0 0.0
  %2210 = vmatprep.mubr.f32.mxu0 0.0
  %2211 = vmatmul.mubr.f32.gmra.mxu0 %v2138
  %v2212 = vpop.f32.mrf.mxu0
  %v2213 = vadd.f32 %v2136, %v2212
  %v2214 = vpop.f32.mrf.mxu0
  %v2215 = vadd.f32 %v2136, %v2214
  %2216 = vdwg.mxu0
  %v2217 = vsel %vm513, %v2213, -inf
  %v2218 = vrot.slane %v2217, 4
  %v2219 = vmax.f32 %v2217, %v2218
  %v2220 = vrot.slane %v2219, 2
  %v2221 = vmax.f32 %v2219, %v2220
  %v2222 = vrot.slane %v2221, 1
  %v2223 = vmax.f32 %v2221, %v2222
  %v2224 = vsel %vm521, %v2215, -inf
  %v2225 = vrot.slane %v2224, 4
  %v2226 = vmax.f32 %v2224, %v2225
  %v2227 = vrot.slane %v2226, 2
  %v2228 = vmax.f32 %v2226, %v2227
  %v2229 = vrot.slane %v2228, 1
  %v2230 = vmax.f32 %v2228, %v2229
  %v2231 = vsub.f32 %v2213, %v2223
  %v2232 = vsub.f32 %v2215, %v2230
  %v2233 = vmul.f32 %v2231, 1.442695
  %v2234 = vpow.pop %v2233
  %v2235 = vmul.f32 %v2232, 1.442695
  %v2236 = vpow.pop %v2235
  %v2237 = vsel %vm513, %v2234, 0.0
  %v2238 = vrot.slane %v2237, 4
  %v2239 = vadd.f32 %v2237, %v2238
  %v2240 = vrot.slane %v2239, 2
  %v2241 = vadd.f32 %v2239, %v2240
  %v2242 = vrot.slane %v2241, 1
  %v2243 = vadd.f32 %v2241, %v2242
  %v2244 = vsel %vm521, %v2236, 0.0
  %v2245 = vrot.slane %v2244, 4
  %v2246 = vadd.f32 %v2244, %v2245
  %v2247 = vrot.slane %v2246, 2
  %v2248 = vadd.f32 %v2246, %v2247
  %v2249 = vrot.slane %v2248, 1
  %v2250 = vadd.f32 %v2248, %v2249
  %v2251 = vrcp.pop %v2243
  %v2252 = vrcp.pop %v2250
  %v2255 = vrot.slane %v2213, 4
  %v2256 = vrot.slane %v2215, 4
  %v2259 = vmul.f32 %v16, %v2255
  %v2260 = vmul.f32 %v17, %v2256
  %v2263 = vrot.slane %v2259, 4
  %v2264 = vrot.slane %v2260, 4
  %v2267 = vsel %vm513, %v2263, 0.0
  %v2268 = vrot.slane %v2267, 4
  %v2269 = vadd.f32 %v2267, %v2268
  %v2270 = vrot.slane %v2269, 2
  %v2271 = vadd.f32 %v2269, %v2270
  %v2272 = vrot.slane %v2271, 1
  %v2273 = vadd.f32 %v2271, %v2272
  %v2274 = vsel %vm521, %v2264, 0.0
  %v2275 = vrot.slane %v2274, 4
  %v2276 = vadd.f32 %v2274, %v2275
  %v2277 = vrot.slane %v2276, 2
  %v2278 = vadd.f32 %v2276, %v2277
  %v2279 = vrot.slane %v2278, 1
  %v2280 = vadd.f32 %v2278, %v2279
  %v2281 = vlog2.pop %v2243
  %v2282 = vmul.f32 %v2281, 0.6931472
  %v2283 = vlog2.pop %v2250
  %v2284 = vmul.f32 %v2283, 0.6931472
  %v2285 = vadd.f32 %v2282, %v2223
  %v2286 = vadd.f32 %v2284, %v2230
  %v2287 = vsub.f32 %v2285, %v2273
  %v2288 = vsub.f32 %v2286, %v2280
  %v2289 = vmul.f32 %v2287, 0.006666667
  %v2290 = vmul.f32 %v2288, 0.006666667
  %v2291 = vmul.f32 %v2234, %v2251
  %v2292 = vmul.f32 %v2236, %v2252
  %v2293 = vsub.f32 %v2291, %v591
  %v2294 = vsub.f32 %v2292, %v592
  %v2295 = vmul.f32 %v2293, 0.006666667
  %v2296 = vmul.f32 %v2294, 0.006666667
  %v2297 = vpack.c.bf16 %v2010, %v2009
  %v2298 = vpack.c.bf16 %v2010, %v2010
  %v2299 = vpack.c.bf16 %v2295, %v2295
  %v2300 = vpack.c.bf16 %v2296, %v2296
  %v2302 = vrot.slane %v2298, 1
  %2304 = vxpose.xlu0.c.b16.start [1/8] %v2302, 128
  %2305 = vxpose.xlu0.c.b16.cont [2/8] 0, 128
  %2306 = vxpose.xlu0.c.b16.cont [3/8] 0, 128
  %2307 = vxpose.xlu0.c.b16.cont [4/8] 0, 128
  %2308 = vxpose.xlu0.c.b16.cont [5/8] 0, 128
  %2309 = vxpose.xlu0.c.b16.cont [6/8] 0, 128
  %2310 = vxpose.xlu0.c.b16.cont [7/8] 0, 128
  %2311 = vxpose.xlu0.c.b16.end [8/8] 0, 128
  %v2312 = vpop.trf.xlu0
  %v2313 = vpop.trf.xlu0
  %v2314 = vpop.trf.xlu0
  %v2315 = vpop.trf.xlu0
  %v2316 = vpop.trf.xlu0
  %v2317 = vpop.trf.xlu0
  %v2318 = vpop.trf.xlu0
  %v2319 = vpop.trf.xlu0
  %v2321 = vsel %vm622, %v2312, 0
  %v2324 = vand.u32 %v2299, %v628
  %v2327 = vand.u32 %v2300, %v628
  %2329 = vmatprep.subr.bf16.mxu0 0
  %2330 = vmatpush1.bf16.msra.mxu0 0
  %2331 = vmatprep.subr.bf16.mxu0 0
  %2332 = vmatpush1.bf16.msra.mxu0 0
  %2333 = vmatprep.subr.bf16.mxu0 0
  %2334 = vmatpush1.bf16.msra.mxu0 0
  %2335 = vmatprep.subr.bf16.mxu0 0
  %2336 = vmatpush1.bf16.msra.mxu0 0
  %2337 = vmatprep.subr.bf16.mxu0 0
  %2338 = vmatpush1.bf16.msra.mxu0 0
  %2339 = vmatprep.subr.bf16.mxu0 0
  %2340 = vmatpush1.bf16.msra.mxu0 0
  %2341 = vmatprep.subr.bf16.mxu0 0
  %2342 = vmatpush1.bf16.msra.mxu0 0
  %2343 = vmatprep.subr.bf16.mxu0 %v2327
  %2344 = vmatpush1.bf16.msra.mxu0 %v2324
  %2345 = vmatprep.subr.bf16.mxu0 0
  %2346 = vmatpush2.bf16.msra.mxu0 0
  %2347 = vmatprep.subr.bf16.mxu0 0
  %2348 = vmatpush2.bf16.msra.mxu0 0
  %2349 = vmatprep.subr.bf16.mxu0 0
  %2350 = vmatpush2.bf16.msra.mxu0 0
  %2351 = vmatprep.subr.bf16.mxu0 0
  %2352 = vmatpush2.bf16.msra.mxu0 0
  %2353 = vmatprep.subr.bf16.mxu0 0
  %2354 = vmatpush2.bf16.msra.mxu0 0
  %2355 = vmatprep.subr.bf16.mxu0 0
  %2356 = vmatpush2.bf16.msra.mxu0 0
  %2357 = vmatprep.subr.bf16.mxu0 0
  %2358 = vmatpush2.bf16.msra.mxu0 0
  %2359 = vmatprep.subr.bf16.mxu0 0
  %2360 = vmatpush2.bf16.msra.mxu0 0
  %2361 = vmatprep.mubr.bf16.mxu0 0
  %2362 = vmatmul.mubr.bf16.gmra.mxu0 %v2321
  %v2363 = vpop.f32.mrf.mxu0
  %v2364 = vadd.f32 0.0, %v2363
  %v2365 = vpop.f32.mrf.mxu0
  %v2366 = vadd.f32 0.0, %v2365
  %v2367 = vpop.f32.mrf.mxu0
  %v2368 = vadd.f32 0.0, %v2367
  %v2369 = vpop.f32.mrf.mxu0
  %v2370 = vadd.f32 0.0, %v2369
  %2371 = vdwg.mxu0
  %vm2372 = vcmp.gt.f32.partialorder %v2131, 0.0
  %vm2373 = vcmp.gt.f32.partialorder %v2132, 0.0
  %vm2374 = vcmp.gt.f32.partialorder %v2133, 0.0
  %vm2375 = vcmp.gt.f32.partialorder %v2134, 0.0
  %v2376 = vsel %vm2372, %v2364, 0.0
  %v2377 = vsel %vm2373, %v2366, 0.0
  %v2378 = vsel %vm2374, %v2368, 0.0
  %v2379 = vsel %vm2375, %v2370, 0.0
  %v2380 = vpack.c.bf16 %v2378, %v2376
  %v2381 = vpack.c.bf16 %v2379, %v2377
  %2382 = vxpose.xlu0.c.b16.start [1/8] %v2297, 128
  %2383 = vxpose.xlu0.c.b16.cont [2/8] 0, 128
  %2384 = vxpose.xlu0.c.b16.cont [3/8] 0, 128
  %2385 = vxpose.xlu0.c.b16.cont [4/8] 0, 128
  %2386 = vxpose.xlu0.c.b16.cont [5/8] 0, 128
  %2387 = vxpose.xlu0.c.b16.cont [6/8] 0, 128
  %2388 = vxpose.xlu0.c.b16.cont [7/8] 0, 128
  %2389 = vxpose.xlu0.c.b16.end [8/8] 0, 128
  %v2390 = vpop.trf.xlu0
  %v2391 = vpop.trf.xlu0
  %v2392 = vpop.trf.xlu0
  %v2393 = vpop.trf.xlu0
  %v2394 = vpop.trf.xlu0
  %v2395 = vpop.trf.xlu0
  %v2396 = vpop.trf.xlu0
  %v2397 = vpop.trf.xlu0
  %v2399 = vsel %vm338, %v2390, 0
  %v2402 = vsel %vm707, %v2380, 0
  %v2405 = vsel %vm707, %v2381, 0
  %2407 = vmatprep.subr.bf16.mxu0 0
  %2408 = vmatpush1.bf16.msra.mxu0 0
  %2409 = vmatprep.subr.bf16.mxu0 0
  %2410 = vmatpush1.bf16.msra.mxu0 0
  %2411 = vmatprep.subr.bf16.mxu0 0
  %2412 = vmatpush1.bf16.msra.mxu0 0
  %2413 = vmatprep.subr.bf16.mxu0 0
  %2414 = vmatpush1.bf16.msra.mxu0 0
  %2415 = vmatprep.subr.bf16.mxu0 0
  %2416 = vmatpush1.bf16.msra.mxu0 0
  %2417 = vmatprep.subr.bf16.mxu0 0
  %2418 = vmatpush1.bf16.msra.mxu0 0
  %2419 = vmatprep.subr.bf16.mxu0 0
  %2420 = vmatpush1.bf16.msra.mxu0 0
  %2421 = vmatprep.subr.bf16.mxu0 %v2405
  %2422 = vmatpush1.bf16.msra.mxu0 %v2402
  %2423 = vmatprep.subr.bf16.mxu0 0
  %2424 = vmatpush2.bf16.msra.mxu0 0
  %2425 = vmatprep.subr.bf16.mxu0 0
  %2426 = vmatpush2.bf16.msra.mxu0 0
  %2427 = vmatprep.subr.bf16.mxu0 0
  %2428 = vmatpush2.bf16.msra.mxu0 0
  %2429 = vmatprep.subr.bf16.mxu0 0
  %2430 = vmatpush2.bf16.msra.mxu0 0
  %2431 = vmatprep.subr.bf16.mxu0 0
  %2432 = vmatpush2.bf16.msra.mxu0 0
  %2433 = vmatprep.subr.bf16.mxu0 0
  %2434 = vmatpush2.bf16.msra.mxu0 0
  %2435 = vmatprep.subr.bf16.mxu0 0
  %2436 = vmatpush2.bf16.msra.mxu0 0
  %2437 = vmatprep.subr.bf16.mxu0 0
  %2438 = vmatpush2.bf16.msra.mxu0 0
  %2439 = vmatprep.mubr.bf16.mxu0 0
  %2440 = vmatmul.mubr.bf16.gmra.mxu0 %v2399
  %v2441 = vpop.f32.mrf.mxu0
  %v2442 = vadd.f32 0.0, %v2441
  %v2443 = vpop.f32.mrf.mxu0
  %v2444 = vadd.f32 0.0, %v2443
  %v2445 = vpop.f32.mrf.mxu0
  %v2446 = vadd.f32 0.0, %v2445
  %v2447 = vpop.f32.mrf.mxu0
  %v2448 = vadd.f32 0.0, %v2447
  %2449 = vdwg.mxu0
  %vm2450 = vcmp.gt.f32.partialorder %v2032, 0.0
  %vm2451 = vcmp.gt.f32.partialorder %v2033, 0.0
  %vm2452 = vcmp.gt.f32.partialorder %v2034, 0.0
  %vm2453 = vcmp.gt.f32.partialorder %v2035, 0.0
  %v2454 = vsel %vm2450, %v2442, 0.0
  %v2455 = vsel %vm2451, %v2444, 0.0
  %v2456 = vsel %vm2452, %v2446, 0.0
  %v2457 = vsel %vm2453, %v2448, 0.0
  %v2458 = vpack.c.bf16 %v2456, %v2454
  %v2459 = vpack.c.bf16 %v2457, %v2455
  %v2460 = vpack.c.bf16 %v2289, %v2289
  %v2461 = vpack.c.bf16 %v2290, %v2290
  %v2464 = vrot.slane %v2380, 3
  %v2465 = vrot.slane %v2381, 3
  %v2468 = vrot.slane %v2299, 6
  %v2469 = vrot.slane %v2300, 6
  %v2472 = vsel %vm707, %v2458, %v2464
  %v2476 = vsel %vm707, %v2459, %v2465
  %v2478 = vsel %vm343, %v2464, %v2468
  %v2481 = vsel %vm343, %v2465, %v2469
  %v2483 = vsel %vm792, %v2478, %v2460
  %v2484 = vsel %vm792, %v2481, %v2461
  %v2485 = vpack.c.bf16 %v2034, %v2032
  %v2486 = vpack.c.bf16 %v2035, %v2033
  %v2487 = vpack.c.bf16 %v2133, %v2131
  %v2488 = vpack.c.bf16 %v2134, %v2132
  %v2491 = vrot.slane %v2485, 6
  %v2492 = vrot.slane %v2486, 6
  %v2495 = vrot.slane %v2487, 1
  %v2496 = vrot.slane %v2488, 1
  %v2498 = vsel %vm343, %v18, %v2491
  %v2500 = vsel %vm343, %v19, %v2492
  %v2502 = vsel %vm813, %v2498, %v2495
  %v2505 = vsel %vm813, %v2500, %v2496
  %v2506 = vsel %vm102, %v2495, 1065369472
  %v2508 = vsel %vm102, %v2496, 1065369472
  %v2509 = vsel %vm271, %v2476, 0
  %v2512 = vsel %vm271, %v2484, 0
  %v2514 = vsel %vm271, %v2505, 0
  %v2516 = vsel %vm271, %v2508, 0
  %2518 = vmatprep.subr.bf16.mxu0 0
  %2519 = vmatpush1.bf16.xpose.msra.mxu0 0
  %2520 = vmatprep.subr.bf16.mxu0 0
  %2521 = vmatpush1.bf16.xpose.msra.mxu0 0
  %2522 = vmatprep.subr.bf16.mxu0 0
  %2523 = vmatpush1.bf16.xpose.msra.mxu0 0
  %2524 = vmatprep.subr.bf16.mxu0 0
  %2525 = vmatpush1.bf16.xpose.msra.mxu0 0
  %2526 = vmatprep.subr.bf16.mxu0 0
  %2527 = vmatpush1.bf16.xpose.msra.mxu0 0
  %2528 = vmatprep.subr.bf16.mxu0 0
  %2529 = vmatpush1.bf16.xpose.msra.mxu0 0
  %2530 = vmatprep.subr.bf16.mxu0 %v2516
  %2531 = vmatpush1.bf16.xpose.msra.mxu0 %v2506
  %2532 = vmatprep.subr.bf16.mxu0 %v2514
  %2533 = vmatpush1.bf16.xpose.msra.mxu0 %v2502
  %2534 = vmatprep.subr.bf16.mxu0 0
  %2535 = vmatpush2.bf16.xpose.msra.mxu0 0
  %2536 = vmatprep.subr.bf16.mxu0 0
  %2537 = vmatpush2.bf16.xpose.msra.mxu0 0
  %2538 = vmatprep.subr.bf16.mxu0 0
  %2539 = vmatpush2.bf16.xpose.msra.mxu0 0
  %2540 = vmatprep.subr.bf16.mxu0 0
  %2541 = vmatpush2.bf16.xpose.msra.mxu0 0
  %2542 = vmatprep.subr.bf16.mxu0 0
  %2543 = vmatpush2.bf16.xpose.msra.mxu0 0
  %2544 = vmatprep.subr.bf16.mxu0 0
  %2545 = vmatpush2.bf16.xpose.msra.mxu0 0
  %2546 = vmatprep.subr.bf16.mxu0 0
  %2547 = vmatpush2.bf16.xpose.msra.mxu0 0
  %2548 = vmatprep.subr.bf16.mxu0 0
  %2549 = vmatpush2.bf16.xpose.msra.mxu0 0
  %2550 = vmatprep.mubr.bf16.mxu0 %v2509
  %2551 = vmatmul.mubr.bf16.gmra.mxu0 %v2472
  %v2552 = vpop.f32.mrf.mxu0
  %v2553 = vadd.f32 0.0, %v2552
  %v2554 = vpop.f32.mrf.mxu0
  %v2555 = vpop.f32.mrf.mxu0
  %v2556 = vadd.f32 0.0, %v2555
  %v2557 = vpop.f32.mrf.mxu0
  %2558 = vmatprep.mubr.bf16.mxu0 %v2512
  %2559 = vmatmul.mubr.bf16.gmra.mxu0 %v2483
  %v2560 = vpop.f32.mrf.mxu0
  %v2561 = vadd.f32 0.0, %v2560
  %v2562 = vpop.f32.mrf.mxu0
  %v2563 = vpop.f32.mrf.mxu0
  %v2564 = vpop.f32.mrf.mxu0
  %2565 = vdwg.mxu0
  %s2566 = scalar_lea.vmem %s3, 72
  %2567 = vst.msk [vmem:[%s2566] sm:$0xff] %vm880, %v2553
  %2568 = vst.msk [vmem:[%s2566 + $0x8] sm:$0xff] %vm880, %v2556
  %2569 = vst.msk [vmem:[%s2566 + $0x10] sm:$0xff] %vm880, %v2561
  %s2570 = scalar_lea.vmem %s2, 64
  %v2571 = vld [vmem:[%s2570] sm:$0xff]
  %v2572 = vld [vmem:[%s2570 + $0x8] sm:$0xff]
  %s2573 = smul.u32 8, 2
  %s2574 = smul.addr %s2573, 8
  %s2575 = scalar_lea.vmem [#allocation2], %s2574
  %v2576 = vld [vmem:[%s2575] sm:$0xff]
  %v2577 = vld [vmem:[%s2575 + $0x8] sm:$0xff]
  %v2578 = vld [vmem:[%s2575 + $0x10] sm:$0x3]
  %v2579 = vld [vmem:[%s2575 + $0x18] sm:$0x3]
  %2581 = vset.pattern.permute.xlu0 10
  %2582 = vperm.xlu0 %2581, %v2571
  %v2583 = vpop.permute.xlu0 %2582
  %2586 = vset.pattern.permute.xlu0 10
  %2587 = vperm.xlu0 %2586, %v2572
  %v2588 = vpop.permute.xlu0 %2587
  %v2590 = vadd.f32 %v2576, %v2583
  %v2591 = vadd.f32 %v2577, %v2583
  %v2592 = vadd.f32 %v2578, %v2588
  %v2593 = vadd.f32 %v2579, %v2588
  %v2594 = vmax.f32 %v2590, 0.0
  %v2595 = vmax.f32 %v2591, 0.0
  %v2596 = vmax.f32 %v2592, 0.0
  %v2597 = vmax.f32 %v2593, 0.0
  %2598 = vset.pattern.permute.xlu0 11
  %2599 = vperm.xlu0 %2598, %v2571
  %v2600 = vpop.permute.xlu0 %2599
  %2602 = vset.pattern.permute.xlu0 11
  %2603 = vperm.xlu0 %2602, %v2572
  %v2604 = vpop.permute.xlu0 %2603
  %v2606 = vsel %vm338, %v2571, 0
  %v2608 = vsel %vm338, %v2572, 0
  %v2611 = vsel %vm343, %v2596, 0
  %v2614 = vsel %vm343, %v2597, 0
  %2616 = vmatprep.subr.mxu0 0.0
  %2617 = vmatpush1.msra.mxu0 0.0
  %2618 = vmatprep.subr.mxu0 0.0
  %2619 = vmatpush1.msra.mxu0 0.0
  %2620 = vmatprep.subr.mxu0 0.0
  %2621 = vmatpush1.msra.mxu0 0.0
  %2622 = vmatprep.subr.mxu0 0.0
  %2623 = vmatpush1.msra.mxu0 0.0
  %2624 = vmatprep.subr.mxu0 0.0
  %2625 = vmatpush1.msra.mxu0 0.0
  %2626 = vmatprep.subr.mxu0 0.0
  %2627 = vmatpush1.msra.mxu0 0.0
  %2628 = vmatprep.subr.mxu0 0.0
  %2629 = vmatpush1.msra.mxu0 0.0
  %2630 = vmatprep.subr.mxu0 0.0
  %2631 = vmatpush1.msra.mxu0 0.0
  %2632 = vmatprep.subr.mxu0 0.0
  %2633 = vmatpush1.msra.mxu0 0.0
  %2634 = vmatprep.subr.mxu0 0.0
  %2635 = vmatpush1.msra.mxu0 0.0
  %2636 = vmatprep.subr.mxu0 0.0
  %2637 = vmatpush1.msra.mxu0 0.0
  %2638 = vmatprep.subr.mxu0 0.0
  %2639 = vmatpush1.msra.mxu0 0.0
  %2640 = vmatprep.subr.mxu0 0.0
  %2641 = vmatpush1.msra.mxu0 0.0
  %2642 = vmatprep.subr.mxu0 0.0
  %2643 = vmatpush1.msra.mxu0 0.0
  %2644 = vmatprep.subr.mxu0 %v2614
  %2645 = vmatpush1.msra.mxu0 %v2611
  %2646 = vmatprep.subr.mxu0 %v2595
  %2647 = vmatpush1.msra.mxu0 %v2594
  %2648 = vmatprep.subr.mxu0 0.0
  %2649 = vmatpush2.msra.mxu0 0.0
  %2650 = vmatprep.subr.mxu0 0.0
  %2651 = vmatpush2.msra.mxu0 0.0
  %2652 = vmatprep.subr.mxu0 0.0
  %2653 = vmatpush2.msra.mxu0 0.0
  %2654 = vmatprep.subr.mxu0 0.0
  %2655 = vmatpush2.msra.mxu0 0.0
  %2656 = vmatprep.subr.mxu0 0.0
  %2657 = vmatpush2.msra.mxu0 0.0
  %2658 = vmatprep.subr.mxu0 0.0
  %2659 = vmatpush2.msra.mxu0 0.0
  %2660 = vmatprep.subr.mxu0 0.0
  %2661 = vmatpush2.msra.mxu0 0.0
  %2662 = vmatprep.subr.mxu0 0.0
  %2663 = vmatpush2.msra.mxu0 0.0
  %2664 = vmatprep.subr.mxu0 0.0
  %2665 = vmatpush2.msra.mxu0 0.0
  %2666 = vmatprep.subr.mxu0 0.0
  %2667 = vmatpush2.msra.mxu0 0.0
  %2668 = vmatprep.subr.mxu0 0.0
  %2669 = vmatpush2.msra.mxu0 0.0
  %2670 = vmatprep.subr.mxu0 0.0
  %2671 = vmatpush2.msra.mxu0 0.0
  %2672 = vmatprep.subr.mxu0 0.0
  %2673 = vmatpush2.msra.mxu0 0.0
  %2674 = vmatprep.subr.mxu0 0.0
  %2675 = vmatpush2.msra.mxu0 0.0
  %2676 = vmatprep.subr.mxu0 0.0
  %2677 = vmatpush2.msra.mxu0 0.0
  %2678 = vmatprep.subr.mxu0 0.0
  %2679 = vmatpush2.msra.mxu0 0.0
  %2680 = vmatprep.mubr.f32.mxu0 0.0
  %2681 = vmatmul.mubr.f32.gmra.mxu0 %v2606
  %v2682 = vpop.f32.mrf.mxu0
  %v2683 = vadd.f32 %v2600, %v2682
  %v2684 = vpop.f32.mrf.mxu0
  %v2685 = vadd.f32 %v2600, %v2684
  %2686 = vmatprep.mubr.f32.mxu0 0.0
  %2687 = vmatmul.mubr.f32.gmra.mxu0 %v2608
  %v2688 = vpop.f32.mrf.mxu0
  %v2689 = vadd.f32 %v2604, %v2688
  %v2690 = vpop.f32.mrf.mxu0
  %v2691 = vadd.f32 %v2604, %v2690
  %2692 = vdwg.mxu0
  %v2693 = vmax.f32 %v2683, 0.0
  %v2694 = vmax.f32 %v2685, 0.0
  %v2695 = vmax.f32 %v2689, 0.0
  %v2696 = vmax.f32 %v2691, 0.0
  %v2697 = vrot.slane %v2572, 2
  %v2698 = vrot.slane %v2588, 2
  %v2700 = vsel %vm338, %v2697, 0
  %v2703 = vsel %vm343, %v2695, 0
  %v2706 = vsel %vm343, %v2696, 0
  %2708 = vmatprep.subr.mxu0 0.0
  %2709 = vmatpush1.msra.mxu0 0.0
  %2710 = vmatprep.subr.mxu0 0.0
  %2711 = vmatpush1.msra.mxu0 0.0
  %2712 = vmatprep.subr.mxu0 0.0
  %2713 = vmatpush1.msra.mxu0 0.0
  %2714 = vmatprep.subr.mxu0 0.0
  %2715 = vmatpush1.msra.mxu0 0.0
  %2716 = vmatprep.subr.mxu0 0.0
  %2717 = vmatpush1.msra.mxu0 0.0
  %2718 = vmatprep.subr.mxu0 0.0
  %2719 = vmatpush1.msra.mxu0 0.0
  %2720 = vmatprep.subr.mxu0 0.0
  %2721 = vmatpush1.msra.mxu0 0.0
  %2722 = vmatprep.subr.mxu0 0.0
  %2723 = vmatpush1.msra.mxu0 0.0
  %2724 = vmatprep.subr.mxu0 0.0
  %2725 = vmatpush1.msra.mxu0 0.0
  %2726 = vmatprep.subr.mxu0 0.0
  %2727 = vmatpush1.msra.mxu0 0.0
  %2728 = vmatprep.subr.mxu0 0.0
  %2729 = vmatpush1.msra.mxu0 0.0
  %2730 = vmatprep.subr.mxu0 0.0
  %2731 = vmatpush1.msra.mxu0 0.0
  %2732 = vmatprep.subr.mxu0 0.0
  %2733 = vmatpush1.msra.mxu0 0.0
  %2734 = vmatprep.subr.mxu0 0.0
  %2735 = vmatpush1.msra.mxu0 0.0
  %2736 = vmatprep.subr.mxu0 %v2706
  %2737 = vmatpush1.msra.mxu0 %v2703
  %2738 = vmatprep.subr.mxu0 %v2694
  %2739 = vmatpush1.msra.mxu0 %v2693
  %2740 = vmatprep.subr.mxu0 0.0
  %2741 = vmatpush2.msra.mxu0 0.0
  %2742 = vmatprep.subr.mxu0 0.0
  %2743 = vmatpush2.msra.mxu0 0.0
  %2744 = vmatprep.subr.mxu0 0.0
  %2745 = vmatpush2.msra.mxu0 0.0
  %2746 = vmatprep.subr.mxu0 0.0
  %2747 = vmatpush2.msra.mxu0 0.0
  %2748 = vmatprep.subr.mxu0 0.0
  %2749 = vmatpush2.msra.mxu0 0.0
  %2750 = vmatprep.subr.mxu0 0.0
  %2751 = vmatpush2.msra.mxu0 0.0
  %2752 = vmatprep.subr.mxu0 0.0
  %2753 = vmatpush2.msra.mxu0 0.0
  %2754 = vmatprep.subr.mxu0 0.0
  %2755 = vmatpush2.msra.mxu0 0.0
  %2756 = vmatprep.subr.mxu0 0.0
  %2757 = vmatpush2.msra.mxu0 0.0
  %2758 = vmatprep.subr.mxu0 0.0
  %2759 = vmatpush2.msra.mxu0 0.0
  %2760 = vmatprep.subr.mxu0 0.0
  %2761 = vmatpush2.msra.mxu0 0.0
  %2762 = vmatprep.subr.mxu0 0.0
  %2763 = vmatpush2.msra.mxu0 0.0
  %2764 = vmatprep.subr.mxu0 0.0
  %2765 = vmatpush2.msra.mxu0 0.0
  %2766 = vmatprep.subr.mxu0 0.0
  %2767 = vmatpush2.msra.mxu0 0.0
  %2768 = vmatprep.subr.mxu0 0.0
  %2769 = vmatpush2.msra.mxu0 0.0
  %2770 = vmatprep.subr.mxu0 0.0
  %2771 = vmatpush2.msra.mxu0 0.0
  %2772 = vmatprep.mubr.f32.mxu0 0.0
  %2773 = vmatmul.mubr.f32.gmra.mxu0 %v2700
  %v2774 = vpop.f32.mrf.mxu0
  %v2775 = vadd.f32 %v2698, %v2774
  %v2776 = vpop.f32.mrf.mxu0
  %v2777 = vadd.f32 %v2698, %v2776
  %2778 = vdwg.mxu0
  %v2779 = vsel %vm513, %v2775, -inf
  %v2780 = vrot.slane %v2779, 4
  %v2781 = vmax.f32 %v2779, %v2780
  %v2782 = vrot.slane %v2781, 2
  %v2783 = vmax.f32 %v2781, %v2782
  %v2784 = vrot.slane %v2783, 1
  %v2785 = vmax.f32 %v2783, %v2784
  %v2786 = vsel %vm521, %v2777, -inf
  %v2787 = vrot.slane %v2786, 4
  %v2788 = vmax.f32 %v2786, %v2787
  %v2789 = vrot.slane %v2788, 2
  %v2790 = vmax.f32 %v2788, %v2789
  %v2791 = vrot.slane %v2790, 1
  %v2792 = vmax.f32 %v2790, %v2791
  %v2793 = vsub.f32 %v2775, %v2785
  %v2794 = vsub.f32 %v2777, %v2792
  %v2795 = vmul.f32 %v2793, 1.442695
  %v2796 = vpow.pop %v2795
  %v2797 = vmul.f32 %v2794, 1.442695
  %v2798 = vpow.pop %v2797
  %v2799 = vsel %vm513, %v2796, 0.0
  %v2800 = vrot.slane %v2799, 4
  %v2801 = vadd.f32 %v2799, %v2800
  %v2802 = vrot.slane %v2801, 2
  %v2803 = vadd.f32 %v2801, %v2802
  %v2804 = vrot.slane %v2803, 1
  %v2805 = vadd.f32 %v2803, %v2804
  %v2806 = vsel %vm521, %v2798, 0.0
  %v2807 = vrot.slane %v2806, 4
  %v2808 = vadd.f32 %v2806, %v2807
  %v2809 = vrot.slane %v2808, 2
  %v2810 = vadd.f32 %v2808, %v2809
  %v2811 = vrot.slane %v2810, 1
  %v2812 = vadd.f32 %v2810, %v2811
  %v2813 = vrcp.pop %v2805
  %v2814 = vrcp.pop %v2812
  %v2817 = vrot.slane %v2775, 4
  %v2818 = vrot.slane %v2777, 4
  %v2821 = vmul.f32 %v16, %v2817
  %v2822 = vmul.f32 %v17, %v2818
  %v2825 = vrot.slane %v2821, 4
  %v2826 = vrot.slane %v2822, 4
  %v2829 = vsel %vm513, %v2825, 0.0
  %v2830 = vrot.slane %v2829, 4
  %v2831 = vadd.f32 %v2829, %v2830
  %v2832 = vrot.slane %v2831, 2
  %v2833 = vadd.f32 %v2831, %v2832
  %v2834 = vrot.slane %v2833, 1
  %v2835 = vadd.f32 %v2833, %v2834
  %v2836 = vsel %vm521, %v2826, 0.0
  %v2837 = vrot.slane %v2836, 4
  %v2838 = vadd.f32 %v2836, %v2837
  %v2839 = vrot.slane %v2838, 2
  %v2840 = vadd.f32 %v2838, %v2839
  %v2841 = vrot.slane %v2840, 1
  %v2842 = vadd.f32 %v2840, %v2841
  %v2843 = vlog2.pop %v2805
  %v2844 = vmul.f32 %v2843, 0.6931472
  %v2845 = vlog2.pop %v2812
  %v2846 = vmul.f32 %v2845, 0.6931472
  %v2847 = vadd.f32 %v2844, %v2785
  %v2848 = vadd.f32 %v2846, %v2792
  %v2849 = vsub.f32 %v2847, %v2835
  %v2850 = vsub.f32 %v2848, %v2842
  %v2851 = vmul.f32 %v2849, 0.006666667
  %v2852 = vmul.f32 %v2850, 0.006666667
  %v2853 = vmul.f32 %v2796, %v2813
  %v2854 = vmul.f32 %v2798, %v2814
  %v2855 = vsub.f32 %v2853, %v591
  %v2856 = vsub.f32 %v2854, %v592
  %v2857 = vmul.f32 %v2855, 0.006666667
  %v2858 = vmul.f32 %v2856, 0.006666667
  %v2859 = vpack.c.bf16 %v2572, %v2571
  %v2860 = vpack.c.bf16 %v2572, %v2572
  %v2861 = vpack.c.bf16 %v2857, %v2857
  %v2862 = vpack.c.bf16 %v2858, %v2858
  %v2864 = vrot.slane %v2860, 1
  %2866 = vxpose.xlu0.c.b16.start [1/8] %v2864, 128
  %2867 = vxpose.xlu0.c.b16.cont [2/8] 0, 128
  %2868 = vxpose.xlu0.c.b16.cont [3/8] 0, 128
  %2869 = vxpose.xlu0.c.b16.cont [4/8] 0, 128
  %2870 = vxpose.xlu0.c.b16.cont [5/8] 0, 128
  %2871 = vxpose.xlu0.c.b16.cont [6/8] 0, 128
  %2872 = vxpose.xlu0.c.b16.cont [7/8] 0, 128
  %2873 = vxpose.xlu0.c.b16.end [8/8] 0, 128
  %v2874 = vpop.trf.xlu0
  %v2875 = vpop.trf.xlu0
  %v2876 = vpop.trf.xlu0
  %v2877 = vpop.trf.xlu0
  %v2878 = vpop.trf.xlu0
  %v2879 = vpop.trf.xlu0
  %v2880 = vpop.trf.xlu0
  %v2881 = vpop.trf.xlu0
  %v2883 = vsel %vm622, %v2874, 0
  %v2886 = vand.u32 %v2861, %v628
  %v2889 = vand.u32 %v2862, %v628
  %2891 = vmatprep.subr.bf16.mxu0 0
  %2892 = vmatpush1.bf16.msra.mxu0 0
  %2893 = vmatprep.subr.bf16.mxu0 0
  %2894 = vmatpush1.bf16.msra.mxu0 0
  %2895 = vmatprep.subr.bf16.mxu0 0
  %2896 = vmatpush1.bf16.msra.mxu0 0
  %2897 = vmatprep.subr.bf16.mxu0 0
  %2898 = vmatpush1.bf16.msra.mxu0 0
  %2899 = vmatprep.subr.bf16.mxu0 0
  %2900 = vmatpush1.bf16.msra.mxu0 0
  %2901 = vmatprep.subr.bf16.mxu0 0
  %2902 = vmatpush1.bf16.msra.mxu0 0
  %2903 = vmatprep.subr.bf16.mxu0 0
  %2904 = vmatpush1.bf16.msra.mxu0 0
  %2905 = vmatprep.subr.bf16.mxu0 %v2889
  %2906 = vmatpush1.bf16.msra.mxu0 %v2886
  %2907 = vmatprep.subr.bf16.mxu0 0
  %2908 = vmatpush2.bf16.msra.mxu0 0
  %2909 = vmatprep.subr.bf16.mxu0 0
  %2910 = vmatpush2.bf16.msra.mxu0 0
  %2911 = vmatprep.subr.bf16.mxu0 0
  %2912 = vmatpush2.bf16.msra.mxu0 0
  %2913 = vmatprep.subr.bf16.mxu0 0
  %2914 = vmatpush2.bf16.msra.mxu0 0
  %2915 = vmatprep.subr.bf16.mxu0 0
  %2916 = vmatpush2.bf16.msra.mxu0 0
  %2917 = vmatprep.subr.bf16.mxu0 0
  %2918 = vmatpush2.bf16.msra.mxu0 0
  %2919 = vmatprep.subr.bf16.mxu0 0
  %2920 = vmatpush2.bf16.msra.mxu0 0
  %2921 = vmatprep.subr.bf16.mxu0 0
  %2922 = vmatpush2.bf16.msra.mxu0 0
  %2923 = vmatprep.mubr.bf16.mxu0 0
  %2924 = vmatmul.mubr.bf16.gmra.mxu0 %v2883
  %v2925 = vpop.f32.mrf.mxu0
  %v2926 = vadd.f32 0.0, %v2925
  %v2927 = vpop.f32.mrf.mxu0
  %v2928 = vadd.f32 0.0, %v2927
  %v2929 = vpop.f32.mrf.mxu0
  %v2930 = vadd.f32 0.0, %v2929
  %v2931 = vpop.f32.mrf.mxu0
  %v2932 = vadd.f32 0.0, %v2931
  %2933 = vdwg.mxu0
  %vm2934 = vcmp.gt.f32.partialorder %v2693, 0.0
  %vm2935 = vcmp.gt.f32.partialorder %v2694, 0.0
  %vm2936 = vcmp.gt.f32.partialorder %v2695, 0.0
  %vm2937 = vcmp.gt.f32.partialorder %v2696, 0.0
  %v2938 = vsel %vm2934, %v2926, 0.0
  %v2939 = vsel %vm2935, %v2928, 0.0
  %v2940 = vsel %vm2936, %v2930, 0.0
  %v2941 = vsel %vm2937, %v2932, 0.0
  %v2942 = vpack.c.bf16 %v2940, %v2938
  %v2943 = vpack.c.bf16 %v2941, %v2939
  %2944 = vxpose.xlu0.c.b16.start [1/8] %v2859, 128
  %2945 = vxpose.xlu0.c.b16.cont [2/8] 0, 128
  %2946 = vxpose.xlu0.c.b16.cont [3/8] 0, 128
  %2947 = vxpose.xlu0.c.b16.cont [4/8] 0, 128
  %2948 = vxpose.xlu0.c.b16.cont [5/8] 0, 128
  %2949 = vxpose.xlu0.c.b16.cont [6/8] 0, 128
  %2950 = vxpose.xlu0.c.b16.cont [7/8] 0, 128
  %2951 = vxpose.xlu0.c.b16.end [8/8] 0, 128
  %v2952 = vpop.trf.xlu0
  %v2953 = vpop.trf.xlu0
  %v2954 = vpop.trf.xlu0
  %v2955 = vpop.trf.xlu0
  %v2956 = vpop.trf.xlu0
  %v2957 = vpop.trf.xlu0
  %v2958 = vpop.trf.xlu0
  %v2959 = vpop.trf.xlu0
  %v2961 = vsel %vm338, %v2952, 0
  %v2964 = vsel %vm707, %v2942, 0
  %v2967 = vsel %vm707, %v2943, 0
  %2969 = vmatprep.subr.bf16.mxu0 0
  %2970 = vmatpush1.bf16.msra.mxu0 0
  %2971 = vmatprep.subr.bf16.mxu0 0
  %2972 = vmatpush1.bf16.msra.mxu0 0
  %2973 = vmatprep.subr.bf16.mxu0 0
  %2974 = vmatpush1.bf16.msra.mxu0 0
  %2975 = vmatprep.subr.bf16.mxu0 0
  %2976 = vmatpush1.bf16.msra.mxu0 0
  %2977 = vmatprep.subr.bf16.mxu0 0
  %2978 = vmatpush1.bf16.msra.mxu0 0
  %2979 = vmatprep.subr.bf16.mxu0 0
  %2980 = vmatpush1.bf16.msra.mxu0 0
  %2981 = vmatprep.subr.bf16.mxu0 0
  %2982 = vmatpush1.bf16.msra.mxu0 0
  %2983 = vmatprep.subr.bf16.mxu0 %v2967
  %2984 = vmatpush1.bf16.msra.mxu0 %v2964
  %2985 = vmatprep.subr.bf16.mxu0 0
  %2986 = vmatpush2.bf16.msra.mxu0 0
  %2987 = vmatprep.subr.bf16.mxu0 0
  %2988 = vmatpush2.bf16.msra.mxu0 0
  %2989 = vmatprep.subr.bf16.mxu0 0
  %2990 = vmatpush2.bf16.msra.mxu0 0
  %2991 = vmatprep.subr.bf16.mxu0 0
  %2992 = vmatpush2.bf16.msra.mxu0 0
  %2993 = vmatprep.subr.bf16.mxu0 0
  %2994 = vmatpush2.bf16.msra.mxu0 0
  %2995 = vmatprep.subr.bf16.mxu0 0
  %2996 = vmatpush2.bf16.msra.mxu0 0
  %2997 = vmatprep.subr.bf16.mxu0 0
  %2998 = vmatpush2.bf16.msra.mxu0 0
  %2999 = vmatprep.subr.bf16.mxu0 0
  %3000 = vmatpush2.bf16.msra.mxu0 0
  %3001 = vmatprep.mubr.bf16.mxu0 0
  %3002 = vmatmul.mubr.bf16.gmra.mxu0 %v2961
  %v3003 = vpop.f32.mrf.mxu0
  %v3004 = vadd.f32 0.0, %v3003
  %v3005 = vpop.f32.mrf.mxu0
  %v3006 = vadd.f32 0.0, %v3005
  %v3007 = vpop.f32.mrf.mxu0
  %v3008 = vadd.f32 0.0, %v3007
  %v3009 = vpop.f32.mrf.mxu0
  %v3010 = vadd.f32 0.0, %v3009
  %3011 = vdwg.mxu0
  %vm3012 = vcmp.gt.f32.partialorder %v2594, 0.0
  %vm3013 = vcmp.gt.f32.partialorder %v2595, 0.0
  %vm3014 = vcmp.gt.f32.partialorder %v2596, 0.0
  %vm3015 = vcmp.gt.f32.partialorder %v2597, 0.0
  %v3016 = vsel %vm3012, %v3004, 0.0
  %v3017 = vsel %vm3013, %v3006, 0.0
  %v3018 = vsel %vm3014, %v3008, 0.0
  %v3019 = vsel %vm3015, %v3010, 0.0
  %v3020 = vpack.c.bf16 %v3018, %v3016
  %v3021 = vpack.c.bf16 %v3019, %v3017
  %v3022 = vpack.c.bf16 %v2851, %v2851
  %v3023 = vpack.c.bf16 %v2852, %v2852
  %v3026 = vrot.slane %v2942, 3
  %v3027 = vrot.slane %v2943, 3
  %v3030 = vrot.slane %v2861, 6
  %v3031 = vrot.slane %v2862, 6
  %v3034 = vsel %vm707, %v3020, %v3026
  %v3038 = vsel %vm707, %v3021, %v3027
  %v3040 = vsel %vm343, %v3026, %v3030
  %v3043 = vsel %vm343, %v3027, %v3031
  %v3045 = vsel %vm792, %v3040, %v3022
  %v3046 = vsel %vm792, %v3043, %v3023
  %v3047 = vpack.c.bf16 %v2596, %v2594
  %v3048 = vpack.c.bf16 %v2597, %v2595
  %v3049 = vpack.c.bf16 %v2695, %v2693
  %v3050 = vpack.c.bf16 %v2696, %v2694
  %v3053 = vrot.slane %v3047, 6
  %v3054 = vrot.slane %v3048, 6
  %v3057 = vrot.slane %v3049, 1
  %v3058 = vrot.slane %v3050, 1
  %v3060 = vsel %vm343, %v18, %v3053
  %v3062 = vsel %vm343, %v19, %v3054
  %v3064 = vsel %vm813, %v3060, %v3057
  %v3067 = vsel %vm813, %v3062, %v3058
  %v3068 = vsel %vm102, %v3057, 1065369472
  %v3070 = vsel %vm102, %v3058, 1065369472
  %v3071 = vsel %vm271, %v3038, 0
  %v3074 = vsel %vm271, %v3046, 0
  %v3076 = vsel %vm271, %v3067, 0
  %v3078 = vsel %vm271, %v3070, 0
  %3080 = vmatprep.subr.bf16.mxu0 0
  %3081 = vmatpush1.bf16.xpose.msra.mxu0 0
  %3082 = vmatprep.subr.bf16.mxu0 0
  %3083 = vmatpush1.bf16.xpose.msra.mxu0 0
  %3084 = vmatprep.subr.bf16.mxu0 0
  %3085 = vmatpush1.bf16.xpose.msra.mxu0 0
  %3086 = vmatprep.subr.bf16.mxu0 0
  %3087 = vmatpush1.bf16.xpose.msra.mxu0 0
  %3088 = vmatprep.subr.bf16.mxu0 0
  %3089 = vmatpush1.bf16.xpose.msra.mxu0 0
  %3090 = vmatprep.subr.bf16.mxu0 0
  %3091 = vmatpush1.bf16.xpose.msra.mxu0 0
  %3092 = vmatprep.subr.bf16.mxu0 %v3078
  %3093 = vmatpush1.bf16.xpose.msra.mxu0 %v3068
  %3094 = vmatprep.subr.bf16.mxu0 %v3076
  %3095 = vmatpush1.bf16.xpose.msra.mxu0 %v3064
  %3096 = vmatprep.subr.bf16.mxu0 0
  %3097 = vmatpush2.bf16.xpose.msra.mxu0 0
  %3098 = vmatprep.subr.bf16.mxu0 0
  %3099 = vmatpush2.bf16.xpose.msra.mxu0 0
  %3100 = vmatprep.subr.bf16.mxu0 0
  %3101 = vmatpush2.bf16.xpose.msra.mxu0 0
  %3102 = vmatprep.subr.bf16.mxu0 0
  %3103 = vmatpush2.bf16.xpose.msra.mxu0 0
  %3104 = vmatprep.subr.bf16.mxu0 0
  %3105 = vmatpush2.bf16.xpose.msra.mxu0 0
  %3106 = vmatprep.subr.bf16.mxu0 0
  %3107 = vmatpush2.bf16.xpose.msra.mxu0 0
  %3108 = vmatprep.subr.bf16.mxu0 0
  %3109 = vmatpush2.bf16.xpose.msra.mxu0 0
  %3110 = vmatprep.subr.bf16.mxu0 0
  %3111 = vmatpush2.bf16.xpose.msra.mxu0 0
  %3112 = vmatprep.mubr.bf16.mxu0 %v3071
  %3113 = vmatmul.mubr.bf16.gmra.mxu0 %v3034
  %v3114 = vpop.f32.mrf.mxu0
  %v3115 = vadd.f32 0.0, %v3114
  %v3116 = vpop.f32.mrf.mxu0
  %v3117 = vpop.f32.mrf.mxu0
  %v3118 = vadd.f32 0.0, %v3117
  %v3119 = vpop.f32.mrf.mxu0
  %3120 = vmatprep.mubr.bf16.mxu0 %v3074
  %3121 = vmatmul.mubr.bf16.gmra.mxu0 %v3045
  %v3122 = vpop.f32.mrf.mxu0
  %v3123 = vadd.f32 0.0, %v3122
  %v3124 = vpop.f32.mrf.mxu0
  %v3125 = vpop.f32.mrf.mxu0
  %v3126 = vpop.f32.mrf.mxu0
  %3127 = vdwg.mxu0
  %s3128 = scalar_lea.vmem %s3, 96
  %3129 = vst.msk [vmem:[%s3128] sm:$0xff] %vm880, %v3115
  %3130 = vst.msk [vmem:[%s3128 + $0x8] sm:$0xff] %vm880, %v3118
  %3131 = vst.msk [vmem:[%s3128 + $0x10] sm:$0xff] %vm880, %v3123
  %s3132 = scalar_lea.vmem %s2, 80
  %v3133 = vld [vmem:[%s3132] sm:$0xff]
  %v3134 = vld [vmem:[%s3132 + $0x8] sm:$0xff]
  %s3135 = smul.u32 10, 2
  %s3136 = smul.addr %s3135, 8
  %s3137 = scalar_lea.vmem [#allocation2], %s3136
  %v3138 = vld [vmem:[%s3137] sm:$0xff]
  %v3139 = vld [vmem:[%s3137 + $0x8] sm:$0xff]
  %v3140 = vld [vmem:[%s3137 + $0x10] sm:$0x3]
  %v3141 = vld [vmem:[%s3137 + $0x18] sm:$0x3]
  %3143 = vset.pattern.permute.xlu0 10
  %3144 = vperm.xlu0 %3143, %v3133
  %v3145 = vpop.permute.xlu0 %3144
  %3148 = vset.pattern.permute.xlu0 10
  %3149 = vperm.xlu0 %3148, %v3134
  %v3150 = vpop.permute.xlu0 %3149
  %v3152 = vadd.f32 %v3138, %v3145
  %v3153 = vadd.f32 %v3139, %v3145
  %v3154 = vadd.f32 %v3140, %v3150
  %v3155 = vadd.f32 %v3141, %v3150
  %v3156 = vmax.f32 %v3152, 0.0
  %v3157 = vmax.f32 %v3153, 0.0
  %v3158 = vmax.f32 %v3154, 0.0
  %v3159 = vmax.f32 %v3155, 0.0
  %3160 = vset.pattern.permute.xlu0 11
  %3161 = vperm.xlu0 %3160, %v3133
  %v3162 = vpop.permute.xlu0 %3161
  %3164 = vset.pattern.permute.xlu0 11
  %3165 = vperm.xlu0 %3164, %v3134
  %v3166 = vpop.permute.xlu0 %3165
  %v3168 = vsel %vm338, %v3133, 0
  %v3170 = vsel %vm338, %v3134, 0
  %v3173 = vsel %vm343, %v3158, 0
  %v3176 = vsel %vm343, %v3159, 0
  %3178 = vmatprep.subr.mxu0 0.0
  %3179 = vmatpush1.msra.mxu0 0.0
  %3180 = vmatprep.subr.mxu0 0.0
  %3181 = vmatpush1.msra.mxu0 0.0
  %3182 = vmatprep.subr.mxu0 0.0
  %3183 = vmatpush1.msra.mxu0 0.0
  %3184 = vmatprep.subr.mxu0 0.0
  %3185 = vmatpush1.msra.mxu0 0.0
  %3186 = vmatprep.subr.mxu0 0.0
  %3187 = vmatpush1.msra.mxu0 0.0
  %3188 = vmatprep.subr.mxu0 0.0
  %3189 = vmatpush1.msra.mxu0 0.0
  %3190 = vmatprep.subr.mxu0 0.0
  %3191 = vmatpush1.msra.mxu0 0.0
  %3192 = vmatprep.subr.mxu0 0.0
  %3193 = vmatpush1.msra.mxu0 0.0
  %3194 = vmatprep.subr.mxu0 0.0
  %3195 = vmatpush1.msra.mxu0 0.0
  %3196 = vmatprep.subr.mxu0 0.0
  %3197 = vmatpush1.msra.mxu0 0.0
  %3198 = vmatprep.subr.mxu0 0.0
  %3199 = vmatpush1.msra.mxu0 0.0
  %3200 = vmatprep.subr.mxu0 0.0
  %3201 = vmatpush1.msra.mxu0 0.0
  %3202 = vmatprep.subr.mxu0 0.0
  %3203 = vmatpush1.msra.mxu0 0.0
  %3204 = vmatprep.subr.mxu0 0.0
  %3205 = vmatpush1.msra.mxu0 0.0
  %3206 = vmatprep.subr.mxu0 %v3176
  %3207 = vmatpush1.msra.mxu0 %v3173
  %3208 = vmatprep.subr.mxu0 %v3157
  %3209 = vmatpush1.msra.mxu0 %v3156
  %3210 = vmatprep.subr.mxu0 0.0
  %3211 = vmatpush2.msra.mxu0 0.0
  %3212 = vmatprep.subr.mxu0 0.0
  %3213 = vmatpush2.msra.mxu0 0.0
  %3214 = vmatprep.subr.mxu0 0.0
  %3215 = vmatpush2.msra.mxu0 0.0
  %3216 = vmatprep.subr.mxu0 0.0
  %3217 = vmatpush2.msra.mxu0 0.0
  %3218 = vmatprep.subr.mxu0 0.0
  %3219 = vmatpush2.msra.mxu0 0.0
  %3220 = vmatprep.subr.mxu0 0.0
  %3221 = vmatpush2.msra.mxu0 0.0
  %3222 = vmatprep.subr.mxu0 0.0
  %3223 = vmatpush2.msra.mxu0 0.0
  %3224 = vmatprep.subr.mxu0 0.0
  %3225 = vmatpush2.msra.mxu0 0.0
  %3226 = vmatprep.subr.mxu0 0.0
  %3227 = vmatpush2.msra.mxu0 0.0
  %3228 = vmatprep.subr.mxu0 0.0
  %3229 = vmatpush2.msra.mxu0 0.0
  %3230 = vmatprep.subr.mxu0 0.0
  %3231 = vmatpush2.msra.mxu0 0.0
  %3232 = vmatprep.subr.mxu0 0.0
  %3233 = vmatpush2.msra.mxu0 0.0
  %3234 = vmatprep.subr.mxu0 0.0
  %3235 = vmatpush2.msra.mxu0 0.0
  %3236 = vmatprep.subr.mxu0 0.0
  %3237 = vmatpush2.msra.mxu0 0.0
  %3238 = vmatprep.subr.mxu0 0.0
  %3239 = vmatpush2.msra.mxu0 0.0
  %3240 = vmatprep.subr.mxu0 0.0
  %3241 = vmatpush2.msra.mxu0 0.0
  %3242 = vmatprep.mubr.f32.mxu0 0.0
  %3243 = vmatmul.mubr.f32.gmra.mxu0 %v3168
  %v3244 = vpop.f32.mrf.mxu0
  %v3245 = vadd.f32 %v3162, %v3244
  %v3246 = vpop.f32.mrf.mxu0
  %v3247 = vadd.f32 %v3162, %v3246
  %3248 = vmatprep.mubr.f32.mxu0 0.0
  %3249 = vmatmul.mubr.f32.gmra.mxu0 %v3170
  %v3250 = vpop.f32.mrf.mxu0
  %v3251 = vadd.f32 %v3166, %v3250
  %v3252 = vpop.f32.mrf.mxu0
  %v3253 = vadd.f32 %v3166, %v3252
  %3254 = vdwg.mxu0
  %v3255 = vmax.f32 %v3245, 0.0
  %v3256 = vmax.f32 %v3247, 0.0
  %v3257 = vmax.f32 %v3251, 0.0
  %v3258 = vmax.f32 %v3253, 0.0
  %v3259 = vrot.slane %v3134, 2
  %v3260 = vrot.slane %v3150, 2
  %v3262 = vsel %vm338, %v3259, 0
  %v3265 = vsel %vm343, %v3257, 0
  %v3268 = vsel %vm343, %v3258, 0
  %3270 = vmatprep.subr.mxu0 0.0
  %3271 = vmatpush1.msra.mxu0 0.0
  %3272 = vmatprep.subr.mxu0 0.0
  %3273 = vmatpush1.msra.mxu0 0.0
  %3274 = vmatprep.subr.mxu0 0.0
  %3275 = vmatpush1.msra.mxu0 0.0
  %3276 = vmatprep.subr.mxu0 0.0
  %3277 = vmatpush1.msra.mxu0 0.0
  %3278 = vmatprep.subr.mxu0 0.0
  %3279 = vmatpush1.msra.mxu0 0.0
  %3280 = vmatprep.subr.mxu0 0.0
  %3281 = vmatpush1.msra.mxu0 0.0
  %3282 = vmatprep.subr.mxu0 0.0
  %3283 = vmatpush1.msra.mxu0 0.0
  %3284 = vmatprep.subr.mxu0 0.0
  %3285 = vmatpush1.msra.mxu0 0.0
  %3286 = vmatprep.subr.mxu0 0.0
  %3287 = vmatpush1.msra.mxu0 0.0
  %3288 = vmatprep.subr.mxu0 0.0
  %3289 = vmatpush1.msra.mxu0 0.0
  %3290 = vmatprep.subr.mxu0 0.0
  %3291 = vmatpush1.msra.mxu0 0.0
  %3292 = vmatprep.subr.mxu0 0.0
  %3293 = vmatpush1.msra.mxu0 0.0
  %3294 = vmatprep.subr.mxu0 0.0
  %3295 = vmatpush1.msra.mxu0 0.0
  %3296 = vmatprep.subr.mxu0 0.0
  %3297 = vmatpush1.msra.mxu0 0.0
  %3298 = vmatprep.subr.mxu0 %v3268
  %3299 = vmatpush1.msra.mxu0 %v3265
  %3300 = vmatprep.subr.mxu0 %v3256
  %3301 = vmatpush1.msra.mxu0 %v3255
  %3302 = vmatprep.subr.mxu0 0.0
  %3303 = vmatpush2.msra.mxu0 0.0
  %3304 = vmatprep.subr.mxu0 0.0
  %3305 = vmatpush2.msra.mxu0 0.0
  %3306 = vmatprep.subr.mxu0 0.0
  %3307 = vmatpush2.msra.mxu0 0.0
  %3308 = vmatprep.subr.mxu0 0.0
  %3309 = vmatpush2.msra.mxu0 0.0
  %3310 = vmatprep.subr.mxu0 0.0
  %3311 = vmatpush2.msra.mxu0 0.0
  %3312 = vmatprep.subr.mxu0 0.0
  %3313 = vmatpush2.msra.mxu0 0.0
  %3314 = vmatprep.subr.mxu0 0.0
  %3315 = vmatpush2.msra.mxu0 0.0
  %3316 = vmatprep.subr.mxu0 0.0
  %3317 = vmatpush2.msra.mxu0 0.0
  %3318 = vmatprep.subr.mxu0 0.0
  %3319 = vmatpush2.msra.mxu0 0.0
  %3320 = vmatprep.subr.mxu0 0.0
  %3321 = vmatpush2.msra.mxu0 0.0
  %3322 = vmatprep.subr.mxu0 0.0
  %3323 = vmatpush2.msra.mxu0 0.0
  %3324 = vmatprep.subr.mxu0 0.0
  %3325 = vmatpush2.msra.mxu0 0.0
  %3326 = vmatprep.subr.mxu0 0.0
  %3327 = vmatpush2.msra.mxu0 0.0
  %3328 = vmatprep.subr.mxu0 0.0
  %3329 = vmatpush2.msra.mxu0 0.0
  %3330 = vmatprep.subr.mxu0 0.0
  %3331 = vmatpush2.msra.mxu0 0.0
  %3332 = vmatprep.subr.mxu0 0.0
  %3333 = vmatpush2.msra.mxu0 0.0
  %3334 = vmatprep.mubr.f32.mxu0 0.0
  %3335 = vmatmul.mubr.f32.gmra.mxu0 %v3262
  %v3336 = vpop.f32.mrf.mxu0
  %v3337 = vadd.f32 %v3260, %v3336
  %v3338 = vpop.f32.mrf.mxu0
  %v3339 = vadd.f32 %v3260, %v3338
  %3340 = vdwg.mxu0
  %v3341 = vsel %vm513, %v3337, -inf
  %v3342 = vrot.slane %v3341, 4
  %v3343 = vmax.f32 %v3341, %v3342
  %v3344 = vrot.slane %v3343, 2
  %v3345 = vmax.f32 %v3343, %v3344
  %v3346 = vrot.slane %v3345, 1
  %v3347 = vmax.f32 %v3345, %v3346
  %v3348 = vsel %vm521, %v3339, -inf
  %v3349 = vrot.slane %v3348, 4
  %v3350 = vmax.f32 %v3348, %v3349
  %v3351 = vrot.slane %v3350, 2
  %v3352 = vmax.f32 %v3350, %v3351
  %v3353 = vrot.slane %v3352, 1
  %v3354 = vmax.f32 %v3352, %v3353
  %v3355 = vsub.f32 %v3337, %v3347
  %v3356 = vsub.f32 %v3339, %v3354
  %v3357 = vmul.f32 %v3355, 1.442695
  %v3358 = vpow.pop %v3357
  %v3359 = vmul.f32 %v3356, 1.442695
  %v3360 = vpow.pop %v3359
  %v3361 = vsel %vm513, %v3358, 0.0
  %v3362 = vrot.slane %v3361, 4
  %v3363 = vadd.f32 %v3361, %v3362
  %v3364 = vrot.slane %v3363, 2
  %v3365 = vadd.f32 %v3363, %v3364
  %v3366 = vrot.slane %v3365, 1
  %v3367 = vadd.f32 %v3365, %v3366
  %v3368 = vsel %vm521, %v3360, 0.0
  %v3369 = vrot.slane %v3368, 4
  %v3370 = vadd.f32 %v3368, %v3369
  %v3371 = vrot.slane %v3370, 2
  %v3372 = vadd.f32 %v3370, %v3371
  %v3373 = vrot.slane %v3372, 1
  %v3374 = vadd.f32 %v3372, %v3373
  %v3375 = vrcp.pop %v3367
  %v3376 = vrcp.pop %v3374
  %v3379 = vrot.slane %v3337, 4
  %v3380 = vrot.slane %v3339, 4
  %v3383 = vmul.f32 %v16, %v3379
  %v3384 = vmul.f32 %v17, %v3380
  %v3387 = vrot.slane %v3383, 4
  %v3388 = vrot.slane %v3384, 4
  %v3391 = vsel %vm513, %v3387, 0.0
  %v3392 = vrot.slane %v3391, 4
  %v3393 = vadd.f32 %v3391, %v3392
  %v3394 = vrot.slane %v3393, 2
  %v3395 = vadd.f32 %v3393, %v3394
  %v3396 = vrot.slane %v3395, 1
  %v3397 = vadd.f32 %v3395, %v3396
  %v3398 = vsel %vm521, %v3388, 0.0
  %v3399 = vrot.slane %v3398, 4
  %v3400 = vadd.f32 %v3398, %v3399
  %v3401 = vrot.slane %v3400, 2
  %v3402 = vadd.f32 %v3400, %v3401
  %v3403 = vrot.slane %v3402, 1
  %v3404 = vadd.f32 %v3402, %v3403
  %v3405 = vlog2.pop %v3367
  %v3406 = vmul.f32 %v3405, 0.6931472
  %v3407 = vlog2.pop %v3374
  %v3408 = vmul.f32 %v3407, 0.6931472
  %v3409 = vadd.f32 %v3406, %v3347
  %v3410 = vadd.f32 %v3408, %v3354
  %v3411 = vsub.f32 %v3409, %v3397
  %v3412 = vsub.f32 %v3410, %v3404
  %v3413 = vmul.f32 %v3411, 0.006666667
  %v3414 = vmul.f32 %v3412, 0.006666667
  %v3415 = vmul.f32 %v3358, %v3375
  %v3416 = vmul.f32 %v3360, %v3376
  %v3417 = vsub.f32 %v3415, %v591
  %v3418 = vsub.f32 %v3416, %v592
  %v3419 = vmul.f32 %v3417, 0.006666667
  %v3420 = vmul.f32 %v3418, 0.006666667
  %v3421 = vpack.c.bf16 %v3134, %v3133
  %v3422 = vpack.c.bf16 %v3134, %v3134
  %v3423 = vpack.c.bf16 %v3419, %v3419
  %v3424 = vpack.c.bf16 %v3420, %v3420
  %v3426 = vrot.slane %v3422, 1
  %3428 = vxpose.xlu0.c.b16.start [1/8] %v3426, 128
  %3429 = vxpose.xlu0.c.b16.cont [2/8] 0, 128
  %3430 = vxpose.xlu0.c.b16.cont [3/8] 0, 128
  %3431 = vxpose.xlu0.c.b16.cont [4/8] 0, 128
  %3432 = vxpose.xlu0.c.b16.cont [5/8] 0, 128
  %3433 = vxpose.xlu0.c.b16.cont [6/8] 0, 128
  %3434 = vxpose.xlu0.c.b16.cont [7/8] 0, 128
  %3435 = vxpose.xlu0.c.b16.end [8/8] 0, 128
  %v3436 = vpop.trf.xlu0
  %v3437 = vpop.trf.xlu0
  %v3438 = vpop.trf.xlu0
  %v3439 = vpop.trf.xlu0
  %v3440 = vpop.trf.xlu0
  %v3441 = vpop.trf.xlu0
  %v3442 = vpop.trf.xlu0
  %v3443 = vpop.trf.xlu0
  %v3445 = vsel %vm622, %v3436, 0
  %v3448 = vand.u32 %v3423, %v628
  %v3451 = vand.u32 %v3424, %v628
  %3453 = vmatprep.subr.bf16.mxu0 0
  %3454 = vmatpush1.bf16.msra.mxu0 0
  %3455 = vmatprep.subr.bf16.mxu0 0
  %3456 = vmatpush1.bf16.msra.mxu0 0
  %3457 = vmatprep.subr.bf16.mxu0 0
  %3458 = vmatpush1.bf16.msra.mxu0 0
  %3459 = vmatprep.subr.bf16.mxu0 0
  %3460 = vmatpush1.bf16.msra.mxu0 0
  %3461 = vmatprep.subr.bf16.mxu0 0
  %3462 = vmatpush1.bf16.msra.mxu0 0
  %3463 = vmatprep.subr.bf16.mxu0 0
  %3464 = vmatpush1.bf16.msra.mxu0 0
  %3465 = vmatprep.subr.bf16.mxu0 0
  %3466 = vmatpush1.bf16.msra.mxu0 0
  %3467 = vmatprep.subr.bf16.mxu0 %v3451
  %3468 = vmatpush1.bf16.msra.mxu0 %v3448
  %3469 = vmatprep.subr.bf16.mxu0 0
  %3470 = vmatpush2.bf16.msra.mxu0 0
  %3471 = vmatprep.subr.bf16.mxu0 0
  %3472 = vmatpush2.bf16.msra.mxu0 0
  %3473 = vmatprep.subr.bf16.mxu0 0
  %3474 = vmatpush2.bf16.msra.mxu0 0
  %3475 = vmatprep.subr.bf16.mxu0 0
  %3476 = vmatpush2.bf16.msra.mxu0 0
  %3477 = vmatprep.subr.bf16.mxu0 0
  %3478 = vmatpush2.bf16.msra.mxu0 0
  %3479 = vmatprep.subr.bf16.mxu0 0
  %3480 = vmatpush2.bf16.msra.mxu0 0
  %3481 = vmatprep.subr.bf16.mxu0 0
  %3482 = vmatpush2.bf16.msra.mxu0 0
  %3483 = vmatprep.subr.bf16.mxu0 0
  %3484 = vmatpush2.bf16.msra.mxu0 0
  %3485 = vmatprep.mubr.bf16.mxu0 0
  %3486 = vmatmul.mubr.bf16.gmra.mxu0 %v3445
  %v3487 = vpop.f32.mrf.mxu0
  %v3488 = vadd.f32 0.0, %v3487
  %v3489 = vpop.f32.mrf.mxu0
  %v3490 = vadd.f32 0.0, %v3489
  %v3491 = vpop.f32.mrf.mxu0
  %v3492 = vadd.f32 0.0, %v3491
  %v3493 = vpop.f32.mrf.mxu0
  %v3494 = vadd.f32 0.0, %v3493
  %3495 = vdwg.mxu0
  %vm3496 = vcmp.gt.f32.partialorder %v3255, 0.0
  %vm3497 = vcmp.gt.f32.partialorder %v3256, 0.0
  %vm3498 = vcmp.gt.f32.partialorder %v3257, 0.0
  %vm3499 = vcmp.gt.f32.partialorder %v3258, 0.0
  %v3500 = vsel %vm3496, %v3488, 0.0
  %v3501 = vsel %vm3497, %v3490, 0.0
  %v3502 = vsel %vm3498, %v3492, 0.0
  %v3503 = vsel %vm3499, %v3494, 0.0
  %v3504 = vpack.c.bf16 %v3502, %v3500
  %v3505 = vpack.c.bf16 %v3503, %v3501
  %3506 = vxpose.xlu0.c.b16.start [1/8] %v3421, 128
  %3507 = vxpose.xlu0.c.b16.cont [2/8] 0, 128
  %3508 = vxpose.xlu0.c.b16.cont [3/8] 0, 128
  %3509 = vxpose.xlu0.c.b16.cont [4/8] 0, 128
  %3510 = vxpose.xlu0.c.b16.cont [5/8] 0, 128
  %3511 = vxpose.xlu0.c.b16.cont [6/8] 0, 128
  %3512 = vxpose.xlu0.c.b16.cont [7/8] 0, 128
  %3513 = vxpose.xlu0.c.b16.end [8/8] 0, 128
  %v3514 = vpop.trf.xlu0
  %v3515 = vpop.trf.xlu0
  %v3516 = vpop.trf.xlu0
  %v3517 = vpop.trf.xlu0
  %v3518 = vpop.trf.xlu0
  %v3519 = vpop.trf.xlu0
  %v3520 = vpop.trf.xlu0
  %v3521 = vpop.trf.xlu0
  %v3523 = vsel %vm338, %v3514, 0
  %v3526 = vsel %vm707, %v3504, 0
  %v3529 = vsel %vm707, %v3505, 0
  %3531 = vmatprep.subr.bf16.mxu0 0
  %3532 = vmatpush1.bf16.msra.mxu0 0
  %3533 = vmatprep.subr.bf16.mxu0 0
  %3534 = vmatpush1.bf16.msra.mxu0 0
  %3535 = vmatprep.subr.bf16.mxu0 0
  %3536 = vmatpush1.bf16.msra.mxu0 0
  %3537 = vmatprep.subr.bf16.mxu0 0
  %3538 = vmatpush1.bf16.msra.mxu0 0
  %3539 = vmatprep.subr.bf16.mxu0 0
  %3540 = vmatpush1.bf16.msra.mxu0 0
  %3541 = vmatprep.subr.bf16.mxu0 0
  %3542 = vmatpush1.bf16.msra.mxu0 0
  %3543 = vmatprep.subr.bf16.mxu0 0
  %3544 = vmatpush1.bf16.msra.mxu0 0
  %3545 = vmatprep.subr.bf16.mxu0 %v3529
  %3546 = vmatpush1.bf16.msra.mxu0 %v3526
  %3547 = vmatprep.subr.bf16.mxu0 0
  %3548 = vmatpush2.bf16.msra.mxu0 0
  %3549 = vmatprep.subr.bf16.mxu0 0
  %3550 = vmatpush2.bf16.msra.mxu0 0
  %3551 = vmatprep.subr.bf16.mxu0 0
  %3552 = vmatpush2.bf16.msra.mxu0 0
  %3553 = vmatprep.subr.bf16.mxu0 0
  %3554 = vmatpush2.bf16.msra.mxu0 0
  %3555 = vmatprep.subr.bf16.mxu0 0
  %3556 = vmatpush2.bf16.msra.mxu0 0
  %3557 = vmatprep.subr.bf16.mxu0 0
  %3558 = vmatpush2.bf16.msra.mxu0 0
  %3559 = vmatprep.subr.bf16.mxu0 0
  %3560 = vmatpush2.bf16.msra.mxu0 0
  %3561 = vmatprep.subr.bf16.mxu0 0
  %3562 = vmatpush2.bf16.msra.mxu0 0
  %3563 = vmatprep.mubr.bf16.mxu0 0
  %3564 = vmatmul.mubr.bf16.gmra.mxu0 %v3523
  %v3565 = vpop.f32.mrf.mxu0
  %v3566 = vadd.f32 0.0, %v3565
  %v3567 = vpop.f32.mrf.mxu0
  %v3568 = vadd.f32 0.0, %v3567
  %v3569 = vpop.f32.mrf.mxu0
  %v3570 = vadd.f32 0.0, %v3569
  %v3571 = vpop.f32.mrf.mxu0
  %v3572 = vadd.f32 0.0, %v3571
  %3573 = vdwg.mxu0
  %vm3574 = vcmp.gt.f32.partialorder %v3156, 0.0
  %vm3575 = vcmp.gt.f32.partialorder %v3157, 0.0
  %vm3576 = vcmp.gt.f32.partialorder %v3158, 0.0
  %vm3577 = vcmp.gt.f32.partialorder %v3159, 0.0
  %v3578 = vsel %vm3574, %v3566, 0.0
  %v3579 = vsel %vm3575, %v3568, 0.0
  %v3580 = vsel %vm3576, %v3570, 0.0
  %v3581 = vsel %vm3577, %v3572, 0.0
  %v3582 = vpack.c.bf16 %v3580, %v3578
  %v3583 = vpack.c.bf16 %v3581, %v3579
  %v3584 = vpack.c.bf16 %v3413, %v3413
  %v3585 = vpack.c.bf16 %v3414, %v3414
  %v3588 = vrot.slane %v3504, 3
  %v3589 = vrot.slane %v3505, 3
  %v3592 = vrot.slane %v3423, 6
  %v3593 = vrot.slane %v3424, 6
  %v3596 = vsel %vm707, %v3582, %v3588
  %v3600 = vsel %vm707, %v3583, %v3589
  %v3602 = vsel %vm343, %v3588, %v3592
  %v3605 = vsel %vm343, %v3589, %v3593
  %v3607 = vsel %vm792, %v3602, %v3584
  %v3608 = vsel %vm792, %v3605, %v3585
  %v3609 = vpack.c.bf16 %v3158, %v3156
  %v3610 = vpack.c.bf16 %v3159, %v3157
  %v3611 = vpack.c.bf16 %v3257, %v3255
  %v3612 = vpack.c.bf16 %v3258, %v3256
  %v3615 = vrot.slane %v3609, 6
  %v3616 = vrot.slane %v3610, 6
  %v3619 = vrot.slane %v3611, 1
  %v3620 = vrot.slane %v3612, 1
  %v3622 = vsel %vm343, %v18, %v3615
  %v3624 = vsel %vm343, %v19, %v3616
  %v3626 = vsel %vm813, %v3622, %v3619
  %v3629 = vsel %vm813, %v3624, %v3620
  %v3630 = vsel %vm102, %v3619, 1065369472
  %v3632 = vsel %vm102, %v3620, 1065369472
  %v3633 = vsel %vm271, %v3600, 0
  %v3636 = vsel %vm271, %v3608, 0
  %v3638 = vsel %vm271, %v3629, 0
  %v3640 = vsel %vm271, %v3632, 0
  %3642 = vmatprep.subr.bf16.mxu0 0
  %3643 = vmatpush1.bf16.xpose.msra.mxu0 0
  %3644 = vmatprep.subr.bf16.mxu0 0
  %3645 = vmatpush1.bf16.xpose.msra.mxu0 0
  %3646 = vmatprep.subr.bf16.mxu0 0
  %3647 = vmatpush1.bf16.xpose.msra.mxu0 0
  %3648 = vmatprep.subr.bf16.mxu0 0
  %3649 = vmatpush1.bf16.xpose.msra.mxu0 0
  %3650 = vmatprep.subr.bf16.mxu0 0
  %3651 = vmatpush1.bf16.xpose.msra.mxu0 0
  %3652 = vmatprep.subr.bf16.mxu0 0
  %3653 = vmatpush1.bf16.xpose.msra.mxu0 0
  %3654 = vmatprep.subr.bf16.mxu0 %v3640
  %3655 = vmatpush1.bf16.xpose.msra.mxu0 %v3630
  %3656 = vmatprep.subr.bf16.mxu0 %v3638
  %3657 = vmatpush1.bf16.xpose.msra.mxu0 %v3626
  %3658 = vmatprep.subr.bf16.mxu0 0
  %3659 = vmatpush2.bf16.xpose.msra.mxu0 0
  %3660 = vmatprep.subr.bf16.mxu0 0
  %3661 = vmatpush2.bf16.xpose.msra.mxu0 0
  %3662 = vmatprep.subr.bf16.mxu0 0
  %3663 = vmatpush2.bf16.xpose.msra.mxu0 0
  %3664 = vmatprep.subr.bf16.mxu0 0
  %3665 = vmatpush2.bf16.xpose.msra.mxu0 0
  %3666 = vmatprep.subr.bf16.mxu0 0
  %3667 = vmatpush2.bf16.xpose.msra.mxu0 0
  %3668 = vmatprep.subr.bf16.mxu0 0
  %3669 = vmatpush2.bf16.xpose.msra.mxu0 0
  %3670 = vmatprep.subr.bf16.mxu0 0
  %3671 = vmatpush2.bf16.xpose.msra.mxu0 0
  %3672 = vmatprep.subr.bf16.mxu0 0
  %3673 = vmatpush2.bf16.xpose.msra.mxu0 0
  %3674 = vmatprep.mubr.bf16.mxu0 %v3633
  %3675 = vmatmul.mubr.bf16.gmra.mxu0 %v3596
  %v3676 = vpop.f32.mrf.mxu0
  %v3677 = vadd.f32 0.0, %v3676
  %v3678 = vpop.f32.mrf.mxu0
  %v3679 = vpop.f32.mrf.mxu0
  %v3680 = vadd.f32 0.0, %v3679
  %v3681 = vpop.f32.mrf.mxu0
  %3682 = vmatprep.mubr.bf16.mxu0 %v3636
  %3683 = vmatmul.mubr.bf16.gmra.mxu0 %v3607
  %v3684 = vpop.f32.mrf.mxu0
  %v3685 = vadd.f32 0.0, %v3684
  %v3686 = vpop.f32.mrf.mxu0
  %v3687 = vpop.f32.mrf.mxu0
  %v3688 = vpop.f32.mrf.mxu0
  %3689 = vdwg.mxu0
  %s3690 = scalar_lea.vmem %s3, 120
  %3691 = vst.msk [vmem:[%s3690] sm:$0xff] %vm880, %v3677
  %3692 = vst.msk [vmem:[%s3690 + $0x8] sm:$0xff] %vm880, %v3680
  %3693 = vst.msk [vmem:[%s3690 + $0x10] sm:$0xff] %vm880, %v3685
  %s3694 = scalar_lea.vmem %s2, 96
  %v3695 = vld [vmem:[%s3694] sm:$0xff]
  %v3696 = vld [vmem:[%s3694 + $0x8] sm:$0xff]
  %s3697 = smul.u32 12, 2
  %s3698 = smul.addr %s3697, 8
  %s3699 = scalar_lea.vmem [#allocation2], %s3698
  %v3700 = vld [vmem:[%s3699] sm:$0xff]
  %v3701 = vld [vmem:[%s3699 + $0x8] sm:$0xff]
  %v3702 = vld [vmem:[%s3699 + $0x10] sm:$0x3]
  %v3703 = vld [vmem:[%s3699 + $0x18] sm:$0x3]
  %3705 = vset.pattern.permute.xlu0 10
  %3706 = vperm.xlu0 %3705, %v3695
  %v3707 = vpop.permute.xlu0 %3706
  %3710 = vset.pattern.permute.xlu0 10
  %3711 = vperm.xlu0 %3710, %v3696
  %v3712 = vpop.permute.xlu0 %3711
  %v3714 = vadd.f32 %v3700, %v3707
  %v3715 = vadd.f32 %v3701, %v3707
  %v3716 = vadd.f32 %v3702, %v3712
  %v3717 = vadd.f32 %v3703, %v3712
  %v3718 = vmax.f32 %v3714, 0.0
  %v3719 = vmax.f32 %v3715, 0.0
  %v3720 = vmax.f32 %v3716, 0.0
  %v3721 = vmax.f32 %v3717, 0.0
  %3722 = vset.pattern.permute.xlu0 11
  %3723 = vperm.xlu0 %3722, %v3695
  %v3724 = vpop.permute.xlu0 %3723
  %3726 = vset.pattern.permute.xlu0 11
  %3727 = vperm.xlu0 %3726, %v3696
  %v3728 = vpop.permute.xlu0 %3727
  %v3730 = vsel %vm338, %v3695, 0
  %v3732 = vsel %vm338, %v3696, 0
  %v3735 = vsel %vm343, %v3720, 0
  %v3738 = vsel %vm343, %v3721, 0
  %3740 = vmatprep.subr.mxu0 0.0
  %3741 = vmatpush1.msra.mxu0 0.0
  %3742 = vmatprep.subr.mxu0 0.0
  %3743 = vmatpush1.msra.mxu0 0.0
  %3744 = vmatprep.subr.mxu0 0.0
  %3745 = vmatpush1.msra.mxu0 0.0
  %3746 = vmatprep.subr.mxu0 0.0
  %3747 = vmatpush1.msra.mxu0 0.0
  %3748 = vmatprep.subr.mxu0 0.0
  %3749 = vmatpush1.msra.mxu0 0.0
  %3750 = vmatprep.subr.mxu0 0.0
  %3751 = vmatpush1.msra.mxu0 0.0
  %3752 = vmatprep.subr.mxu0 0.0
  %3753 = vmatpush1.msra.mxu0 0.0
  %3754 = vmatprep.subr.mxu0 0.0
  %3755 = vmatpush1.msra.mxu0 0.0
  %3756 = vmatprep.subr.mxu0 0.0
  %3757 = vmatpush1.msra.mxu0 0.0
  %3758 = vmatprep.subr.mxu0 0.0
  %3759 = vmatpush1.msra.mxu0 0.0
  %3760 = vmatprep.subr.mxu0 0.0
  %3761 = vmatpush1.msra.mxu0 0.0
  %3762 = vmatprep.subr.mxu0 0.0
  %3763 = vmatpush1.msra.mxu0 0.0
  %3764 = vmatprep.subr.mxu0 0.0
  %3765 = vmatpush1.msra.mxu0 0.0
  %3766 = vmatprep.subr.mxu0 0.0
  %3767 = vmatpush1.msra.mxu0 0.0
  %3768 = vmatprep.subr.mxu0 %v3738
  %3769 = vmatpush1.msra.mxu0 %v3735
  %3770 = vmatprep.subr.mxu0 %v3719
  %3771 = vmatpush1.msra.mxu0 %v3718
  %3772 = vmatprep.subr.mxu0 0.0
  %3773 = vmatpush2.msra.mxu0 0.0
  %3774 = vmatprep.subr.mxu0 0.0
  %3775 = vmatpush2.msra.mxu0 0.0
  %3776 = vmatprep.subr.mxu0 0.0
  %3777 = vmatpush2.msra.mxu0 0.0
  %3778 = vmatprep.subr.mxu0 0.0
  %3779 = vmatpush2.msra.mxu0 0.0
  %3780 = vmatprep.subr.mxu0 0.0
  %3781 = vmatpush2.msra.mxu0 0.0
  %3782 = vmatprep.subr.mxu0 0.0
  %3783 = vmatpush2.msra.mxu0 0.0
  %3784 = vmatprep.subr.mxu0 0.0
  %3785 = vmatpush2.msra.mxu0 0.0
  %3786 = vmatprep.subr.mxu0 0.0
  %3787 = vmatpush2.msra.mxu0 0.0
  %3788 = vmatprep.subr.mxu0 0.0
  %3789 = vmatpush2.msra.mxu0 0.0
  %3790 = vmatprep.subr.mxu0 0.0
  %3791 = vmatpush2.msra.mxu0 0.0
  %3792 = vmatprep.subr.mxu0 0.0
  %3793 = vmatpush2.msra.mxu0 0.0
  %3794 = vmatprep.subr.mxu0 0.0
  %3795 = vmatpush2.msra.mxu0 0.0
  %3796 = vmatprep.subr.mxu0 0.0
  %3797 = vmatpush2.msra.mxu0 0.0
  %3798 = vmatprep.subr.mxu0 0.0
  %3799 = vmatpush2.msra.mxu0 0.0
  %3800 = vmatprep.subr.mxu0 0.0
  %3801 = vmatpush2.msra.mxu0 0.0
  %3802 = vmatprep.subr.mxu0 0.0
  %3803 = vmatpush2.msra.mxu0 0.0
  %3804 = vmatprep.mubr.f32.mxu0 0.0
  %3805 = vmatmul.mubr.f32.gmra.mxu0 %v3730
  %v3806 = vpop.f32.mrf.mxu0
  %v3807 = vadd.f32 %v3724, %v3806
  %v3808 = vpop.f32.mrf.mxu0
  %v3809 = vadd.f32 %v3724, %v3808
  %3810 = vmatprep.mubr.f32.mxu0 0.0
  %3811 = vmatmul.mubr.f32.gmra.mxu0 %v3732
  %v3812 = vpop.f32.mrf.mxu0
  %v3813 = vadd.f32 %v3728, %v3812
  %v3814 = vpop.f32.mrf.mxu0
  %v3815 = vadd.f32 %v3728, %v3814
  %3816 = vdwg.mxu0
  %v3817 = vmax.f32 %v3807, 0.0
  %v3818 = vmax.f32 %v3809, 0.0
  %v3819 = vmax.f32 %v3813, 0.0
  %v3820 = vmax.f32 %v3815, 0.0
  %v3821 = vrot.slane %v3696, 2
  %v3822 = vrot.slane %v3712, 2
  %v3824 = vsel %vm338, %v3821, 0
  %v3827 = vsel %vm343, %v3819, 0
  %v3830 = vsel %vm343, %v3820, 0
  %3832 = vmatprep.subr.mxu0 0.0
  %3833 = vmatpush1.msra.mxu0 0.0
  %3834 = vmatprep.subr.mxu0 0.0
  %3835 = vmatpush1.msra.mxu0 0.0
  %3836 = vmatprep.subr.mxu0 0.0
  %3837 = vmatpush1.msra.mxu0 0.0
  %3838 = vmatprep.subr.mxu0 0.0
  %3839 = vmatpush1.msra.mxu0 0.0
  %3840 = vmatprep.subr.mxu0 0.0
  %3841 = vmatpush1.msra.mxu0 0.0
  %3842 = vmatprep.subr.mxu0 0.0
  %3843 = vmatpush1.msra.mxu0 0.0
  %3844 = vmatprep.subr.mxu0 0.0
  %3845 = vmatpush1.msra.mxu0 0.0
  %3846 = vmatprep.subr.mxu0 0.0
  %3847 = vmatpush1.msra.mxu0 0.0
  %3848 = vmatprep.subr.mxu0 0.0
  %3849 = vmatpush1.msra.mxu0 0.0
  %3850 = vmatprep.subr.mxu0 0.0
  %3851 = vmatpush1.msra.mxu0 0.0
  %3852 = vmatprep.subr.mxu0 0.0
  %3853 = vmatpush1.msra.mxu0 0.0
  %3854 = vmatprep.subr.mxu0 0.0
  %3855 = vmatpush1.msra.mxu0 0.0
  %3856 = vmatprep.subr.mxu0 0.0
  %3857 = vmatpush1.msra.mxu0 0.0
  %3858 = vmatprep.subr.mxu0 0.0
  %3859 = vmatpush1.msra.mxu0 0.0
  %3860 = vmatprep.subr.mxu0 %v3830
  %3861 = vmatpush1.msra.mxu0 %v3827
  %3862 = vmatprep.subr.mxu0 %v3818
  %3863 = vmatpush1.msra.mxu0 %v3817
  %3864 = vmatprep.subr.mxu0 0.0
  %3865 = vmatpush2.msra.mxu0 0.0
  %3866 = vmatprep.subr.mxu0 0.0
  %3867 = vmatpush2.msra.mxu0 0.0
  %3868 = vmatprep.subr.mxu0 0.0
  %3869 = vmatpush2.msra.mxu0 0.0
  %3870 = vmatprep.subr.mxu0 0.0
  %3871 = vmatpush2.msra.mxu0 0.0
  %3872 = vmatprep.subr.mxu0 0.0
  %3873 = vmatpush2.msra.mxu0 0.0
  %3874 = vmatprep.subr.mxu0 0.0
  %3875 = vmatpush2.msra.mxu0 0.0
  %3876 = vmatprep.subr.mxu0 0.0
  %3877 = vmatpush2.msra.mxu0 0.0
  %3878 = vmatprep.subr.mxu0 0.0
  %3879 = vmatpush2.msra.mxu0 0.0
  %3880 = vmatprep.subr.mxu0 0.0
  %3881 = vmatpush2.msra.mxu0 0.0
  %3882 = vmatprep.subr.mxu0 0.0
  %3883 = vmatpush2.msra.mxu0 0.0
  %3884 = vmatprep.subr.mxu0 0.0
  %3885 = vmatpush2.msra.mxu0 0.0
  %3886 = vmatprep.subr.mxu0 0.0
  %3887 = vmatpush2.msra.mxu0 0.0
  %3888 = vmatprep.subr.mxu0 0.0
  %3889 = vmatpush2.msra.mxu0 0.0
  %3890 = vmatprep.subr.mxu0 0.0
  %3891 = vmatpush2.msra.mxu0 0.0
  %3892 = vmatprep.subr.mxu0 0.0
  %3893 = vmatpush2.msra.mxu0 0.0
  %3894 = vmatprep.subr.mxu0 0.0
  %3895 = vmatpush2.msra.mxu0 0.0
  %3896 = vmatprep.mubr.f32.mxu0 0.0
  %3897 = vmatmul.mubr.f32.gmra.mxu0 %v3824
  %v3898 = vpop.f32.mrf.mxu0
  %v3899 = vadd.f32 %v3822, %v3898
  %v3900 = vpop.f32.mrf.mxu0
  %v3901 = vadd.f32 %v3822, %v3900
  %3902 = vdwg.mxu0
  %v3903 = vsel %vm513, %v3899, -inf
  %v3904 = vrot.slane %v3903, 4
  %v3905 = vmax.f32 %v3903, %v3904
  %v3906 = vrot.slane %v3905, 2
  %v3907 = vmax.f32 %v3905, %v3906
  %v3908 = vrot.slane %v3907, 1
  %v3909 = vmax.f32 %v3907, %v3908
  %v3910 = vsel %vm521, %v3901, -inf
  %v3911 = vrot.slane %v3910, 4
  %v3912 = vmax.f32 %v3910, %v3911
  %v3913 = vrot.slane %v3912, 2
  %v3914 = vmax.f32 %v3912, %v3913
  %v3915 = vrot.slane %v3914, 1
  %v3916 = vmax.f32 %v3914, %v3915
  %v3917 = vsub.f32 %v3899, %v3909
  %v3918 = vsub.f32 %v3901, %v3916
  %v3919 = vmul.f32 %v3917, 1.442695
  %v3920 = vpow.pop %v3919
  %v3921 = vmul.f32 %v3918, 1.442695
  %v3922 = vpow.pop %v3921
  %v3923 = vsel %vm513, %v3920, 0.0
  %v3924 = vrot.slane %v3923, 4
  %v3925 = vadd.f32 %v3923, %v3924
  %v3926 = vrot.slane %v3925, 2
  %v3927 = vadd.f32 %v3925, %v3926
  %v3928 = vrot.slane %v3927, 1
  %v3929 = vadd.f32 %v3927, %v3928
  %v3930 = vsel %vm521, %v3922, 0.0
  %v3931 = vrot.slane %v3930, 4
  %v3932 = vadd.f32 %v3930, %v3931
  %v3933 = vrot.slane %v3932, 2
  %v3934 = vadd.f32 %v3932, %v3933
  %v3935 = vrot.slane %v3934, 1
  %v3936 = vadd.f32 %v3934, %v3935
  %v3937 = vrcp.pop %v3929
  %v3938 = vrcp.pop %v3936
  %v3941 = vrot.slane %v3899, 4
  %v3942 = vrot.slane %v3901, 4
  %v3945 = vmul.f32 %v16, %v3941
  %v3946 = vmul.f32 %v17, %v3942
  %v3949 = vrot.slane %v3945, 4
  %v3950 = vrot.slane %v3946, 4
  %v3953 = vsel %vm513, %v3949, 0.0
  %v3954 = vrot.slane %v3953, 4
  %v3955 = vadd.f32 %v3953, %v3954
  %v3956 = vrot.slane %v3955, 2
  %v3957 = vadd.f32 %v3955, %v3956
  %v3958 = vrot.slane %v3957, 1
  %v3959 = vadd.f32 %v3957, %v3958
  %v3960 = vsel %vm521, %v3950, 0.0
  %v3961 = vrot.slane %v3960, 4
  %v3962 = vadd.f32 %v3960, %v3961
  %v3963 = vrot.slane %v3962, 2
  %v3964 = vadd.f32 %v3962, %v3963
  %v3965 = vrot.slane %v3964, 1
  %v3966 = vadd.f32 %v3964, %v3965
  %v3967 = vlog2.pop %v3929
  %v3968 = vmul.f32 %v3967, 0.6931472
  %v3969 = vlog2.pop %v3936
  %v3970 = vmul.f32 %v3969, 0.6931472
  %v3971 = vadd.f32 %v3968, %v3909
  %v3972 = vadd.f32 %v3970, %v3916
  %v3973 = vsub.f32 %v3971, %v3959
  %v3974 = vsub.f32 %v3972, %v3966
  %v3975 = vmul.f32 %v3973, 0.006666667
  %v3976 = vmul.f32 %v3974, 0.006666667
  %v3977 = vmul.f32 %v3920, %v3937
  %v3978 = vmul.f32 %v3922, %v3938
  %v3979 = vsub.f32 %v3977, %v591
  %v3980 = vsub.f32 %v3978, %v592
  %v3981 = vmul.f32 %v3979, 0.006666667
  %v3982 = vmul.f32 %v3980, 0.006666667
  %v3983 = vpack.c.bf16 %v3696, %v3695
  %v3984 = vpack.c.bf16 %v3696, %v3696
  %v3985 = vpack.c.bf16 %v3981, %v3981
  %v3986 = vpack.c.bf16 %v3982, %v3982
  %v3988 = vrot.slane %v3984, 1
  %3990 = vxpose.xlu0.c.b16.start [1/8] %v3988, 128
  %3991 = vxpose.xlu0.c.b16.cont [2/8] 0, 128
  %3992 = vxpose.xlu0.c.b16.cont [3/8] 0, 128
  %3993 = vxpose.xlu0.c.b16.cont [4/8] 0, 128
  %3994 = vxpose.xlu0.c.b16.cont [5/8] 0, 128
  %3995 = vxpose.xlu0.c.b16.cont [6/8] 0, 128
  %3996 = vxpose.xlu0.c.b16.cont [7/8] 0, 128
  %3997 = vxpose.xlu0.c.b16.end [8/8] 0, 128
  %v3998 = vpop.trf.xlu0
  %v3999 = vpop.trf.xlu0
  %v4000 = vpop.trf.xlu0
  %v4001 = vpop.trf.xlu0
  %v4002 = vpop.trf.xlu0
  %v4003 = vpop.trf.xlu0
  %v4004 = vpop.trf.xlu0
  %v4005 = vpop.trf.xlu0
  %v4007 = vsel %vm622, %v3998, 0
  %v4010 = vand.u32 %v3985, %v628
  %v4013 = vand.u32 %v3986, %v628
  %4015 = vmatprep.subr.bf16.mxu0 0
  %4016 = vmatpush1.bf16.msra.mxu0 0
  %4017 = vmatprep.subr.bf16.mxu0 0
  %4018 = vmatpush1.bf16.msra.mxu0 0
  %4019 = vmatprep.subr.bf16.mxu0 0
  %4020 = vmatpush1.bf16.msra.mxu0 0
  %4021 = vmatprep.subr.bf16.mxu0 0
  %4022 = vmatpush1.bf16.msra.mxu0 0
  %4023 = vmatprep.subr.bf16.mxu0 0
  %4024 = vmatpush1.bf16.msra.mxu0 0
  %4025 = vmatprep.subr.bf16.mxu0 0
  %4026 = vmatpush1.bf16.msra.mxu0 0
  %4027 = vmatprep.subr.bf16.mxu0 0
  %4028 = vmatpush1.bf16.msra.mxu0 0
  %4029 = vmatprep.subr.bf16.mxu0 %v4013
  %4030 = vmatpush1.bf16.msra.mxu0 %v4010
  %4031 = vmatprep.subr.bf16.mxu0 0
  %4032 = vmatpush2.bf16.msra.mxu0 0
  %4033 = vmatprep.subr.bf16.mxu0 0
  %4034 = vmatpush2.bf16.msra.mxu0 0
  %4035 = vmatprep.subr.bf16.mxu0 0
  %4036 = vmatpush2.bf16.msra.mxu0 0
  %4037 = vmatprep.subr.bf16.mxu0 0
  %4038 = vmatpush2.bf16.msra.mxu0 0
  %4039 = vmatprep.subr.bf16.mxu0 0
  %4040 = vmatpush2.bf16.msra.mxu0 0
  %4041 = vmatprep.subr.bf16.mxu0 0
  %4042 = vmatpush2.bf16.msra.mxu0 0
  %4043 = vmatprep.subr.bf16.mxu0 0
  %4044 = vmatpush2.bf16.msra.mxu0 0
  %4045 = vmatprep.subr.bf16.mxu0 0
  %4046 = vmatpush2.bf16.msra.mxu0 0
  %4047 = vmatprep.mubr.bf16.mxu0 0
  %4048 = vmatmul.mubr.bf16.gmra.mxu0 %v4007
  %v4049 = vpop.f32.mrf.mxu0
  %v4050 = vadd.f32 0.0, %v4049
  %v4051 = vpop.f32.mrf.mxu0
  %v4052 = vadd.f32 0.0, %v4051
  %v4053 = vpop.f32.mrf.mxu0
  %v4054 = vadd.f32 0.0, %v4053
  %v4055 = vpop.f32.mrf.mxu0
  %v4056 = vadd.f32 0.0, %v4055
  %4057 = vdwg.mxu0
  %vm4058 = vcmp.gt.f32.partialorder %v3817, 0.0
  %vm4059 = vcmp.gt.f32.partialorder %v3818, 0.0
  %vm4060 = vcmp.gt.f32.partialorder %v3819, 0.0
  %vm4061 = vcmp.gt.f32.partialorder %v3820, 0.0
  %v4062 = vsel %vm4058, %v4050, 0.0
  %v4063 = vsel %vm4059, %v4052, 0.0
  %v4064 = vsel %vm4060, %v4054, 0.0
  %v4065 = vsel %vm4061, %v4056, 0.0
  %v4066 = vpack.c.bf16 %v4064, %v4062
  %v4067 = vpack.c.bf16 %v4065, %v4063
  %4068 = vxpose.xlu0.c.b16.start [1/8] %v3983, 128
  %4069 = vxpose.xlu0.c.b16.cont [2/8] 0, 128
  %4070 = vxpose.xlu0.c.b16.cont [3/8] 0, 128
  %4071 = vxpose.xlu0.c.b16.cont [4/8] 0, 128
  %4072 = vxpose.xlu0.c.b16.cont [5/8] 0, 128
  %4073 = vxpose.xlu0.c.b16.cont [6/8] 0, 128
  %4074 = vxpose.xlu0.c.b16.cont [7/8] 0, 128
  %4075 = vxpose.xlu0.c.b16.end [8/8] 0, 128
  %v4076 = vpop.trf.xlu0
  %v4077 = vpop.trf.xlu0
  %v4078 = vpop.trf.xlu0
  %v4079 = vpop.trf.xlu0
  %v4080 = vpop.trf.xlu0
  %v4081 = vpop.trf.xlu0
  %v4082 = vpop.trf.xlu0
  %v4083 = vpop.trf.xlu0
  %v4085 = vsel %vm338, %v4076, 0
  %v4088 = vsel %vm707, %v4066, 0
  %v4091 = vsel %vm707, %v4067, 0
  %4093 = vmatprep.subr.bf16.mxu0 0
  %4094 = vmatpush1.bf16.msra.mxu0 0
  %4095 = vmatprep.subr.bf16.mxu0 0
  %4096 = vmatpush1.bf16.msra.mxu0 0
  %4097 = vmatprep.subr.bf16.mxu0 0
  %4098 = vmatpush1.bf16.msra.mxu0 0
  %4099 = vmatprep.subr.bf16.mxu0 0
  %4100 = vmatpush1.bf16.msra.mxu0 0
  %4101 = vmatprep.subr.bf16.mxu0 0
  %4102 = vmatpush1.bf16.msra.mxu0 0
  %4103 = vmatprep.subr.bf16.mxu0 0
  %4104 = vmatpush1.bf16.msra.mxu0 0
  %4105 = vmatprep.subr.bf16.mxu0 0
  %4106 = vmatpush1.bf16.msra.mxu0 0
  %4107 = vmatprep.subr.bf16.mxu0 %v4091
  %4108 = vmatpush1.bf16.msra.mxu0 %v4088
  %4109 = vmatprep.subr.bf16.mxu0 0
  %4110 = vmatpush2.bf16.msra.mxu0 0
  %4111 = vmatprep.subr.bf16.mxu0 0
  %4112 = vmatpush2.bf16.msra.mxu0 0
  %4113 = vmatprep.subr.bf16.mxu0 0
  %4114 = vmatpush2.bf16.msra.mxu0 0
  %4115 = vmatprep.subr.bf16.mxu0 0
  %4116 = vmatpush2.bf16.msra.mxu0 0
  %4117 = vmatprep.subr.bf16.mxu0 0
  %4118 = vmatpush2.bf16.msra.mxu0 0
  %4119 = vmatprep.subr.bf16.mxu0 0
  %4120 = vmatpush2.bf16.msra.mxu0 0
  %4121 = vmatprep.subr.bf16.mxu0 0
  %4122 = vmatpush2.bf16.msra.mxu0 0
  %4123 = vmatprep.subr.bf16.mxu0 0
  %4124 = vmatpush2.bf16.msra.mxu0 0
  %4125 = vmatprep.mubr.bf16.mxu0 0
  %4126 = vmatmul.mubr.bf16.gmra.mxu0 %v4085
  %v4127 = vpop.f32.mrf.mxu0
  %v4128 = vadd.f32 0.0, %v4127
  %v4129 = vpop.f32.mrf.mxu0
  %v4130 = vadd.f32 0.0, %v4129
  %v4131 = vpop.f32.mrf.mxu0
  %v4132 = vadd.f32 0.0, %v4131
  %v4133 = vpop.f32.mrf.mxu0
  %v4134 = vadd.f32 0.0, %v4133
  %4135 = vdwg.mxu0
  %vm4136 = vcmp.gt.f32.partialorder %v3718, 0.0
  %vm4137 = vcmp.gt.f32.partialorder %v3719, 0.0
  %vm4138 = vcmp.gt.f32.partialorder %v3720, 0.0
  %vm4139 = vcmp.gt.f32.partialorder %v3721, 0.0
  %v4140 = vsel %vm4136, %v4128, 0.0
  %v4141 = vsel %vm4137, %v4130, 0.0
  %v4142 = vsel %vm4138, %v4132, 0.0
  %v4143 = vsel %vm4139, %v4134, 0.0
  %v4144 = vpack.c.bf16 %v4142, %v4140
  %v4145 = vpack.c.bf16 %v4143, %v4141
  %v4146 = vpack.c.bf16 %v3975, %v3975
  %v4147 = vpack.c.bf16 %v3976, %v3976
  %v4150 = vrot.slane %v4066, 3
  %v4151 = vrot.slane %v4067, 3
  %v4154 = vrot.slane %v3985, 6
  %v4155 = vrot.slane %v3986, 6
  %v4158 = vsel %vm707, %v4144, %v4150
  %v4162 = vsel %vm707, %v4145, %v4151
  %v4164 = vsel %vm343, %v4150, %v4154
  %v4167 = vsel %vm343, %v4151, %v4155
  %v4169 = vsel %vm792, %v4164, %v4146
  %v4170 = vsel %vm792, %v4167, %v4147
  %v4171 = vpack.c.bf16 %v3720, %v3718
  %v4172 = vpack.c.bf16 %v3721, %v3719
  %v4173 = vpack.c.bf16 %v3819, %v3817
  %v4174 = vpack.c.bf16 %v3820, %v3818
  %v4177 = vrot.slane %v4171, 6
  %v4178 = vrot.slane %v4172, 6
  %v4181 = vrot.slane %v4173, 1
  %v4182 = vrot.slane %v4174, 1
  %v4184 = vsel %vm343, %v18, %v4177
  %v4186 = vsel %vm343, %v19, %v4178
  %v4188 = vsel %vm813, %v4184, %v4181
  %v4191 = vsel %vm813, %v4186, %v4182
  %v4192 = vsel %vm102, %v4181, 1065369472
  %v4194 = vsel %vm102, %v4182, 1065369472
  %v4195 = vsel %vm271, %v4162, 0
  %v4198 = vsel %vm271, %v4170, 0
  %v4200 = vsel %vm271, %v4191, 0
  %v4202 = vsel %vm271, %v4194, 0
  %4204 = vmatprep.subr.bf16.mxu0 0
  %4205 = vmatpush1.bf16.xpose.msra.mxu0 0
  %4206 = vmatprep.subr.bf16.mxu0 0
  %4207 = vmatpush1.bf16.xpose.msra.mxu0 0
  %4208 = vmatprep.subr.bf16.mxu0 0
  %4209 = vmatpush1.bf16.xpose.msra.mxu0 0
  %4210 = vmatprep.subr.bf16.mxu0 0
  %4211 = vmatpush1.bf16.xpose.msra.mxu0 0
  %4212 = vmatprep.subr.bf16.mxu0 0
  %4213 = vmatpush1.bf16.xpose.msra.mxu0 0
  %4214 = vmatprep.subr.bf16.mxu0 0
  %4215 = vmatpush1.bf16.xpose.msra.mxu0 0
  %4216 = vmatprep.subr.bf16.mxu0 %v4202
  %4217 = vmatpush1.bf16.xpose.msra.mxu0 %v4192
  %4218 = vmatprep.subr.bf16.mxu0 %v4200
  %4219 = vmatpush1.bf16.xpose.msra.mxu0 %v4188
  %4220 = vmatprep.subr.bf16.mxu0 0
  %4221 = vmatpush2.bf16.xpose.msra.mxu0 0
  %4222 = vmatprep.subr.bf16.mxu0 0
  %4223 = vmatpush2.bf16.xpose.msra.mxu0 0
  %4224 = vmatprep.subr.bf16.mxu0 0
  %4225 = vmatpush2.bf16.xpose.msra.mxu0 0
  %4226 = vmatprep.subr.bf16.mxu0 0
  %4227 = vmatpush2.bf16.xpose.msra.mxu0 0
  %4228 = vmatprep.subr.bf16.mxu0 0
  %4229 = vmatpush2.bf16.xpose.msra.mxu0 0
  %4230 = vmatprep.subr.bf16.mxu0 0
  %4231 = vmatpush2.bf16.xpose.msra.mxu0 0
  %4232 = vmatprep.subr.bf16.mxu0 0
  %4233 = vmatpush2.bf16.xpose.msra.mxu0 0
  %4234 = vmatprep.subr.bf16.mxu0 0
  %4235 = vmatpush2.bf16.xpose.msra.mxu0 0
  %4236 = vmatprep.mubr.bf16.mxu0 %v4195
  %4237 = vmatmul.mubr.bf16.gmra.mxu0 %v4158
  %v4238 = vpop.f32.mrf.mxu0
  %v4239 = vadd.f32 0.0, %v4238
  %v4240 = vpop.f32.mrf.mxu0
  %v4241 = vpop.f32.mrf.mxu0
  %v4242 = vadd.f32 0.0, %v4241
  %v4243 = vpop.f32.mrf.mxu0
  %4244 = vmatprep.mubr.bf16.mxu0 %v4198
  %4245 = vmatmul.mubr.bf16.gmra.mxu0 %v4169
  %v4246 = vpop.f32.mrf.mxu0
  %v4247 = vadd.f32 0.0, %v4246
  %v4248 = vpop.f32.mrf.mxu0
  %v4249 = vpop.f32.mrf.mxu0
  %v4250 = vpop.f32.mrf.mxu0
  %4251 = vdwg.mxu0
  %s4252 = scalar_lea.vmem %s3, 144
  %4253 = vst.msk [vmem:[%s4252] sm:$0xff] %vm880, %v4239
  %4254 = vst.msk [vmem:[%s4252 + $0x8] sm:$0xff] %vm880, %v4242
  %4255 = vst.msk [vmem:[%s4252 + $0x10] sm:$0xff] %vm880, %v4247
  %s4256 = scalar_lea.vmem %s2, 112
  %v4257 = vld [vmem:[%s4256] sm:$0xff]
  %v4258 = vld [vmem:[%s4256 + $0x8] sm:$0xff]
  %s4259 = smul.u32 14, 2
  %s4260 = smul.addr %s4259, 8
  %s4261 = scalar_lea.vmem [#allocation2], %s4260
  %v4262 = vld [vmem:[%s4261] sm:$0xff]
  %v4263 = vld [vmem:[%s4261 + $0x8] sm:$0xff]
  %v4264 = vld [vmem:[%s4261 + $0x10] sm:$0x3]
  %v4265 = vld [vmem:[%s4261 + $0x18] sm:$0x3]
  %4267 = vset.pattern.permute.xlu0 10
  %4268 = vperm.xlu0 %4267, %v4257
  %v4269 = vpop.permute.xlu0 %4268
  %4272 = vset.pattern.permute.xlu0 10
  %4273 = vperm.xlu0 %4272, %v4258
  %v4274 = vpop.permute.xlu0 %4273
  %v4276 = vadd.f32 %v4262, %v4269
  %v4277 = vadd.f32 %v4263, %v4269
  %v4278 = vadd.f32 %v4264, %v4274
  %v4279 = vadd.f32 %v4265, %v4274
  %v4280 = vmax.f32 %v4276, 0.0
  %v4281 = vmax.f32 %v4277, 0.0
  %v4282 = vmax.f32 %v4278, 0.0
  %v4283 = vmax.f32 %v4279, 0.0
  %4284 = vset.pattern.permute.xlu0 11
  %4285 = vperm.xlu0 %4284, %v4257
  %v4286 = vpop.permute.xlu0 %4285
  %4288 = vset.pattern.permute.xlu0 11
  %4289 = vperm.xlu0 %4288, %v4258
  %v4290 = vpop.permute.xlu0 %4289
  %v4292 = vsel %vm338, %v4257, 0
  %v4294 = vsel %vm338, %v4258, 0
  %v4297 = vsel %vm343, %v4282, 0
  %v4300 = vsel %vm343, %v4283, 0
  %4302 = vmatprep.subr.mxu0 0.0
  %4303 = vmatpush1.msra.mxu0 0.0
  %4304 = vmatprep.subr.mxu0 0.0
  %4305 = vmatpush1.msra.mxu0 0.0
  %4306 = vmatprep.subr.mxu0 0.0
  %4307 = vmatpush1.msra.mxu0 0.0
  %4308 = vmatprep.subr.mxu0 0.0
  %4309 = vmatpush1.msra.mxu0 0.0
  %4310 = vmatprep.subr.mxu0 0.0
  %4311 = vmatpush1.msra.mxu0 0.0
  %4312 = vmatprep.subr.mxu0 0.0
  %4313 = vmatpush1.msra.mxu0 0.0
  %4314 = vmatprep.subr.mxu0 0.0
  %4315 = vmatpush1.msra.mxu0 0.0
  %4316 = vmatprep.subr.mxu0 0.0
  %4317 = vmatpush1.msra.mxu0 0.0
  %4318 = vmatprep.subr.mxu0 0.0
  %4319 = vmatpush1.msra.mxu0 0.0
  %4320 = vmatprep.subr.mxu0 0.0
  %4321 = vmatpush1.msra.mxu0 0.0
  %4322 = vmatprep.subr.mxu0 0.0
  %4323 = vmatpush1.msra.mxu0 0.0
  %4324 = vmatprep.subr.mxu0 0.0
  %4325 = vmatpush1.msra.mxu0 0.0
  %4326 = vmatprep.subr.mxu0 0.0
  %4327 = vmatpush1.msra.mxu0 0.0
  %4328 = vmatprep.subr.mxu0 0.0
  %4329 = vmatpush1.msra.mxu0 0.0
  %4330 = vmatprep.subr.mxu0 %v4300
  %4331 = vmatpush1.msra.mxu0 %v4297
  %4332 = vmatprep.subr.mxu0 %v4281
  %4333 = vmatpush1.msra.mxu0 %v4280
  %4334 = vmatprep.subr.mxu0 0.0
  %4335 = vmatpush2.msra.mxu0 0.0
  %4336 = vmatprep.subr.mxu0 0.0
  %4337 = vmatpush2.msra.mxu0 0.0
  %4338 = vmatprep.subr.mxu0 0.0
  %4339 = vmatpush2.msra.mxu0 0.0
  %4340 = vmatprep.subr.mxu0 0.0
  %4341 = vmatpush2.msra.mxu0 0.0
  %4342 = vmatprep.subr.mxu0 0.0
  %4343 = vmatpush2.msra.mxu0 0.0
  %4344 = vmatprep.subr.mxu0 0.0
  %4345 = vmatpush2.msra.mxu0 0.0
  %4346 = vmatprep.subr.mxu0 0.0
  %4347 = vmatpush2.msra.mxu0 0.0
  %4348 = vmatprep.subr.mxu0 0.0
  %4349 = vmatpush2.msra.mxu0 0.0
  %4350 = vmatprep.subr.mxu0 0.0
  %4351 = vmatpush2.msra.mxu0 0.0
  %4352 = vmatprep.subr.mxu0 0.0
  %4353 = vmatpush2.msra.mxu0 0.0
  %4354 = vmatprep.subr.mxu0 0.0
  %4355 = vmatpush2.msra.mxu0 0.0
  %4356 = vmatprep.subr.mxu0 0.0
  %4357 = vmatpush2.msra.mxu0 0.0
  %4358 = vmatprep.subr.mxu0 0.0
  %4359 = vmatpush2.msra.mxu0 0.0
  %4360 = vmatprep.subr.mxu0 0.0
  %4361 = vmatpush2.msra.mxu0 0.0
  %4362 = vmatprep.subr.mxu0 0.0
  %4363 = vmatpush2.msra.mxu0 0.0
  %4364 = vmatprep.subr.mxu0 0.0
  %4365 = vmatpush2.msra.mxu0 0.0
  %4366 = vmatprep.mubr.f32.mxu0 0.0
  %4367 = vmatmul.mubr.f32.gmra.mxu0 %v4292
  %v4368 = vpop.f32.mrf.mxu0
  %v4369 = vadd.f32 %v4286, %v4368
  %v4370 = vpop.f32.mrf.mxu0
  %v4371 = vadd.f32 %v4286, %v4370
  %4372 = vmatprep.mubr.f32.mxu0 0.0
  %4373 = vmatmul.mubr.f32.gmra.mxu0 %v4294
  %v4374 = vpop.f32.mrf.mxu0
  %v4375 = vadd.f32 %v4290, %v4374
  %v4376 = vpop.f32.mrf.mxu0
  %v4377 = vadd.f32 %v4290, %v4376
  %4378 = vdwg.mxu0
  %v4379 = vmax.f32 %v4369, 0.0
  %v4380 = vmax.f32 %v4371, 0.0
  %v4381 = vmax.f32 %v4375, 0.0
  %v4382 = vmax.f32 %v4377, 0.0
  %v4383 = vrot.slane %v4258, 2
  %v4384 = vrot.slane %v4274, 2
  %v4386 = vsel %vm338, %v4383, 0
  %v4389 = vsel %vm343, %v4381, 0
  %v4392 = vsel %vm343, %v4382, 0
  %4394 = vmatprep.subr.mxu0 0.0
  %4395 = vmatpush1.msra.mxu0 0.0
  %4396 = vmatprep.subr.mxu0 0.0
  %4397 = vmatpush1.msra.mxu0 0.0
  %4398 = vmatprep.subr.mxu0 0.0
  %4399 = vmatpush1.msra.mxu0 0.0
  %4400 = vmatprep.subr.mxu0 0.0
  %4401 = vmatpush1.msra.mxu0 0.0
  %4402 = vmatprep.subr.mxu0 0.0
  %4403 = vmatpush1.msra.mxu0 0.0
  %4404 = vmatprep.subr.mxu0 0.0
  %4405 = vmatpush1.msra.mxu0 0.0
  %4406 = vmatprep.subr.mxu0 0.0
  %4407 = vmatpush1.msra.mxu0 0.0
  %4408 = vmatprep.subr.mxu0 0.0
  %4409 = vmatpush1.msra.mxu0 0.0
  %4410 = vmatprep.subr.mxu0 0.0
  %4411 = vmatpush1.msra.mxu0 0.0
  %4412 = vmatprep.subr.mxu0 0.0
  %4413 = vmatpush1.msra.mxu0 0.0
  %4414 = vmatprep.subr.mxu0 0.0
  %4415 = vmatpush1.msra.mxu0 0.0
  %4416 = vmatprep.subr.mxu0 0.0
  %4417 = vmatpush1.msra.mxu0 0.0
  %4418 = vmatprep.subr.mxu0 0.0
  %4419 = vmatpush1.msra.mxu0 0.0
  %4420 = vmatprep.subr.mxu0 0.0
  %4421 = vmatpush1.msra.mxu0 0.0
  %4422 = vmatprep.subr.mxu0 %v4392
  %4423 = vmatpush1.msra.mxu0 %v4389
  %4424 = vmatprep.subr.mxu0 %v4380
  %4425 = vmatpush1.msra.mxu0 %v4379
  %4426 = vmatprep.subr.mxu0 0.0
  %4427 = vmatpush2.msra.mxu0 0.0
  %4428 = vmatprep.subr.mxu0 0.0
  %4429 = vmatpush2.msra.mxu0 0.0
  %4430 = vmatprep.subr.mxu0 0.0
  %4431 = vmatpush2.msra.mxu0 0.0
  %4432 = vmatprep.subr.mxu0 0.0
  %4433 = vmatpush2.msra.mxu0 0.0
  %4434 = vmatprep.subr.mxu0 0.0
  %4435 = vmatpush2.msra.mxu0 0.0
  %4436 = vmatprep.subr.mxu0 0.0
  %4437 = vmatpush2.msra.mxu0 0.0
  %4438 = vmatprep.subr.mxu0 0.0
  %4439 = vmatpush2.msra.mxu0 0.0
  %4440 = vmatprep.subr.mxu0 0.0
  %4441 = vmatpush2.msra.mxu0 0.0
  %4442 = vmatprep.subr.mxu0 0.0
  %4443 = vmatpush2.msra.mxu0 0.0
  %4444 = vmatprep.subr.mxu0 0.0
  %4445 = vmatpush2.msra.mxu0 0.0
  %4446 = vmatprep.subr.mxu0 0.0
  %4447 = vmatpush2.msra.mxu0 0.0
  %4448 = vmatprep.subr.mxu0 0.0
  %4449 = vmatpush2.msra.mxu0 0.0
  %4450 = vmatprep.subr.mxu0 0.0
  %4451 = vmatpush2.msra.mxu0 0.0
  %4452 = vmatprep.subr.mxu0 0.0
  %4453 = vmatpush2.msra.mxu0 0.0
  %4454 = vmatprep.subr.mxu0 0.0
  %4455 = vmatpush2.msra.mxu0 0.0
  %4456 = vmatprep.subr.mxu0 0.0
  %4457 = vmatpush2.msra.mxu0 0.0
  %4458 = vmatprep.mubr.f32.mxu0 0.0
  %4459 = vmatmul.mubr.f32.gmra.mxu0 %v4386
  %v4460 = vpop.f32.mrf.mxu0
  %v4461 = vadd.f32 %v4384, %v4460
  %v4462 = vpop.f32.mrf.mxu0
  %v4463 = vadd.f32 %v4384, %v4462
  %4464 = vdwg.mxu0
  %v4465 = vsel %vm513, %v4461, -inf
  %v4466 = vrot.slane %v4465, 4
  %v4467 = vmax.f32 %v4465, %v4466
  %v4468 = vrot.slane %v4467, 2
  %v4469 = vmax.f32 %v4467, %v4468
  %v4470 = vrot.slane %v4469, 1
  %v4471 = vmax.f32 %v4469, %v4470
  %v4472 = vsel %vm521, %v4463, -inf
  %v4473 = vrot.slane %v4472, 4
  %v4474 = vmax.f32 %v4472, %v4473
  %v4475 = vrot.slane %v4474, 2
  %v4476 = vmax.f32 %v4474, %v4475
  %v4477 = vrot.slane %v4476, 1
  %v4478 = vmax.f32 %v4476, %v4477
  %v4479 = vsub.f32 %v4461, %v4471
  %v4480 = vsub.f32 %v4463, %v4478
  %v4481 = vmul.f32 %v4479, 1.442695
  %v4482 = vpow.pop %v4481
  %v4483 = vmul.f32 %v4480, 1.442695
  %v4484 = vpow.pop %v4483
  %v4485 = vsel %vm513, %v4482, 0.0
  %v4486 = vrot.slane %v4485, 4
  %v4487 = vadd.f32 %v4485, %v4486
  %v4488 = vrot.slane %v4487, 2
  %v4489 = vadd.f32 %v4487, %v4488
  %v4490 = vrot.slane %v4489, 1
  %v4491 = vadd.f32 %v4489, %v4490
  %v4492 = vsel %vm521, %v4484, 0.0
  %v4493 = vrot.slane %v4492, 4
  %v4494 = vadd.f32 %v4492, %v4493
  %v4495 = vrot.slane %v4494, 2
  %v4496 = vadd.f32 %v4494, %v4495
  %v4497 = vrot.slane %v4496, 1
  %v4498 = vadd.f32 %v4496, %v4497
  %v4499 = vrcp.pop %v4491
  %v4500 = vrcp.pop %v4498
  %v4503 = vrot.slane %v4461, 4
  %v4504 = vrot.slane %v4463, 4
  %v4507 = vmul.f32 %v16, %v4503
  %v4508 = vmul.f32 %v17, %v4504
  %v4511 = vrot.slane %v4507, 4
  %v4512 = vrot.slane %v4508, 4
  %v4515 = vsel %vm513, %v4511, 0.0
  %v4516 = vrot.slane %v4515, 4
  %v4517 = vadd.f32 %v4515, %v4516
  %v4518 = vrot.slane %v4517, 2
  %v4519 = vadd.f32 %v4517, %v4518
  %v4520 = vrot.slane %v4519, 1
  %v4521 = vadd.f32 %v4519, %v4520
  %v4522 = vsel %vm521, %v4512, 0.0
  %v4523 = vrot.slane %v4522, 4
  %v4524 = vadd.f32 %v4522, %v4523
  %v4525 = vrot.slane %v4524, 2
  %v4526 = vadd.f32 %v4524, %v4525
  %v4527 = vrot.slane %v4526, 1
  %v4528 = vadd.f32 %v4526, %v4527
  %v4529 = vlog2.pop %v4491
  %v4530 = vmul.f32 %v4529, 0.6931472
  %v4531 = vlog2.pop %v4498
  %v4532 = vmul.f32 %v4531, 0.6931472
  %v4533 = vadd.f32 %v4530, %v4471
  %v4534 = vadd.f32 %v4532, %v4478
  %v4535 = vsub.f32 %v4533, %v4521
  %v4536 = vsub.f32 %v4534, %v4528
  %v4537 = vmul.f32 %v4535, 0.006666667
  %v4538 = vmul.f32 %v4536, 0.006666667
  %v4539 = vmul.f32 %v4482, %v4499
  %v4540 = vmul.f32 %v4484, %v4500
  %v4541 = vsub.f32 %v4539, %v591
  %v4542 = vsub.f32 %v4540, %v592
  %v4543 = vmul.f32 %v4541, 0.006666667
  %v4544 = vmul.f32 %v4542, 0.006666667
  %v4545 = vpack.c.bf16 %v4258, %v4257
  %v4546 = vpack.c.bf16 %v4258, %v4258
  %v4547 = vpack.c.bf16 %v4543, %v4543
  %v4548 = vpack.c.bf16 %v4544, %v4544
  %v4550 = vrot.slane %v4546, 1
  %4552 = vxpose.xlu0.c.b16.start [1/8] %v4550, 128
  %4553 = vxpose.xlu0.c.b16.cont [2/8] 0, 128
  %4554 = vxpose.xlu0.c.b16.cont [3/8] 0, 128
  %4555 = vxpose.xlu0.c.b16.cont [4/8] 0, 128
  %4556 = vxpose.xlu0.c.b16.cont [5/8] 0, 128
  %4557 = vxpose.xlu0.c.b16.cont [6/8] 0, 128
  %4558 = vxpose.xlu0.c.b16.cont [7/8] 0, 128
  %4559 = vxpose.xlu0.c.b16.end [8/8] 0, 128
  %v4560 = vpop.trf.xlu0
  %v4561 = vpop.trf.xlu0
  %v4562 = vpop.trf.xlu0
  %v4563 = vpop.trf.xlu0
  %v4564 = vpop.trf.xlu0
  %v4565 = vpop.trf.xlu0
  %v4566 = vpop.trf.xlu0
  %v4567 = vpop.trf.xlu0
  %v4569 = vsel %vm622, %v4560, 0
  %v4572 = vand.u32 %v4547, %v628
  %v4575 = vand.u32 %v4548, %v628
  %4577 = vmatprep.subr.bf16.mxu0 0
  %4578 = vmatpush1.bf16.msra.mxu0 0
  %4579 = vmatprep.subr.bf16.mxu0 0
  %4580 = vmatpush1.bf16.msra.mxu0 0
  %4581 = vmatprep.subr.bf16.mxu0 0
  %4582 = vmatpush1.bf16.msra.mxu0 0
  %4583 = vmatprep.subr.bf16.mxu0 0
  %4584 = vmatpush1.bf16.msra.mxu0 0
  %4585 = vmatprep.subr.bf16.mxu0 0
  %4586 = vmatpush1.bf16.msra.mxu0 0
  %4587 = vmatprep.subr.bf16.mxu0 0
  %4588 = vmatpush1.bf16.msra.mxu0 0
  %4589 = vmatprep.subr.bf16.mxu0 0
  %4590 = vmatpush1.bf16.msra.mxu0 0
  %4591 = vmatprep.subr.bf16.mxu0 %v4575
  %4592 = vmatpush1.bf16.msra.mxu0 %v4572
  %4593 = vmatprep.subr.bf16.mxu0 0
  %4594 = vmatpush2.bf16.msra.mxu0 0
  %4595 = vmatprep.subr.bf16.mxu0 0
  %4596 = vmatpush2.bf16.msra.mxu0 0
  %4597 = vmatprep.subr.bf16.mxu0 0
  %4598 = vmatpush2.bf16.msra.mxu0 0
  %4599 = vmatprep.subr.bf16.mxu0 0
  %4600 = vmatpush2.bf16.msra.mxu0 0
  %4601 = vmatprep.subr.bf16.mxu0 0
  %4602 = vmatpush2.bf16.msra.mxu0 0
  %4603 = vmatprep.subr.bf16.mxu0 0
  %4604 = vmatpush2.bf16.msra.mxu0 0
  %4605 = vmatprep.subr.bf16.mxu0 0
  %4606 = vmatpush2.bf16.msra.mxu0 0
  %4607 = vmatprep.subr.bf16.mxu0 0
  %4608 = vmatpush2.bf16.msra.mxu0 0
  %4609 = vmatprep.mubr.bf16.mxu0 0
  %4610 = vmatmul.mubr.bf16.gmra.mxu0 %v4569
  %v4611 = vpop.f32.mrf.mxu0
  %v4612 = vadd.f32 0.0, %v4611
  %v4613 = vpop.f32.mrf.mxu0
  %v4614 = vadd.f32 0.0, %v4613
  %v4615 = vpop.f32.mrf.mxu0
  %v4616 = vadd.f32 0.0, %v4615
  %v4617 = vpop.f32.mrf.mxu0
  %v4618 = vadd.f32 0.0, %v4617
  %4619 = vdwg.mxu0
  %vm4620 = vcmp.gt.f32.partialorder %v4379, 0.0
  %vm4621 = vcmp.gt.f32.partialorder %v4380, 0.0
  %vm4622 = vcmp.gt.f32.partialorder %v4381, 0.0
  %vm4623 = vcmp.gt.f32.partialorder %v4382, 0.0
  %v4624 = vsel %vm4620, %v4612, 0.0
  %v4625 = vsel %vm4621, %v4614, 0.0
  %v4626 = vsel %vm4622, %v4616, 0.0
  %v4627 = vsel %vm4623, %v4618, 0.0
  %v4628 = vpack.c.bf16 %v4626, %v4624
  %v4629 = vpack.c.bf16 %v4627, %v4625
  %4630 = vxpose.xlu0.c.b16.start [1/8] %v4545, 128
  %4631 = vxpose.xlu0.c.b16.cont [2/8] 0, 128
  %4632 = vxpose.xlu0.c.b16.cont [3/8] 0, 128
  %4633 = vxpose.xlu0.c.b16.cont [4/8] 0, 128
  %4634 = vxpose.xlu0.c.b16.cont [5/8] 0, 128
  %4635 = vxpose.xlu0.c.b16.cont [6/8] 0, 128
  %4636 = vxpose.xlu0.c.b16.cont [7/8] 0, 128
  %4637 = vxpose.xlu0.c.b16.end [8/8] 0, 128
  %v4638 = vpop.trf.xlu0
  %v4639 = vpop.trf.xlu0
  %v4640 = vpop.trf.xlu0
  %v4641 = vpop.trf.xlu0
  %v4642 = vpop.trf.xlu0
  %v4643 = vpop.trf.xlu0
  %v4644 = vpop.trf.xlu0
  %v4645 = vpop.trf.xlu0
  %v4647 = vsel %vm338, %v4638, 0
  %v4650 = vsel %vm707, %v4628, 0
  %v4653 = vsel %vm707, %v4629, 0
  %4655 = vmatprep.subr.bf16.mxu0 0
  %4656 = vmatpush1.bf16.msra.mxu0 0
  %4657 = vmatprep.subr.bf16.mxu0 0
  %4658 = vmatpush1.bf16.msra.mxu0 0
  %4659 = vmatprep.subr.bf16.mxu0 0
  %4660 = vmatpush1.bf16.msra.mxu0 0
  %4661 = vmatprep.subr.bf16.mxu0 0
  %4662 = vmatpush1.bf16.msra.mxu0 0
  %4663 = vmatprep.subr.bf16.mxu0 0
  %4664 = vmatpush1.bf16.msra.mxu0 0
  %4665 = vmatprep.subr.bf16.mxu0 0
  %4666 = vmatpush1.bf16.msra.mxu0 0
  %4667 = vmatprep.subr.bf16.mxu0 0
  %4668 = vmatpush1.bf16.msra.mxu0 0
  %4669 = vmatprep.subr.bf16.mxu0 %v4653
  %4670 = vmatpush1.bf16.msra.mxu0 %v4650
  %4671 = vmatprep.subr.bf16.mxu0 0
  %4672 = vmatpush2.bf16.msra.mxu0 0
  %4673 = vmatprep.subr.bf16.mxu0 0
  %4674 = vmatpush2.bf16.msra.mxu0 0
  %4675 = vmatprep.subr.bf16.mxu0 0
  %4676 = vmatpush2.bf16.msra.mxu0 0
  %4677 = vmatprep.subr.bf16.mxu0 0
  %4678 = vmatpush2.bf16.msra.mxu0 0
  %4679 = vmatprep.subr.bf16.mxu0 0
  %4680 = vmatpush2.bf16.msra.mxu0 0
  %4681 = vmatprep.subr.bf16.mxu0 0
  %4682 = vmatpush2.bf16.msra.mxu0 0
  %4683 = vmatprep.subr.bf16.mxu0 0
  %4684 = vmatpush2.bf16.msra.mxu0 0
  %4685 = vmatprep.subr.bf16.mxu0 0
  %4686 = vmatpush2.bf16.msra.mxu0 0
  %4687 = vmatprep.mubr.bf16.mxu0 0
  %4688 = vmatmul.mubr.bf16.gmra.mxu0 %v4647
  %v4689 = vpop.f32.mrf.mxu0
  %v4690 = vadd.f32 0.0, %v4689
  %v4691 = vpop.f32.mrf.mxu0
  %v4692 = vadd.f32 0.0, %v4691
  %v4693 = vpop.f32.mrf.mxu0
  %v4694 = vadd.f32 0.0, %v4693
  %v4695 = vpop.f32.mrf.mxu0
  %v4696 = vadd.f32 0.0, %v4695
  %4697 = vdwg.mxu0
  %vm4698 = vcmp.gt.f32.partialorder %v4280, 0.0
  %vm4699 = vcmp.gt.f32.partialorder %v4281, 0.0
  %vm4700 = vcmp.gt.f32.partialorder %v4282, 0.0
  %vm4701 = vcmp.gt.f32.partialorder %v4283, 0.0
  %v4702 = vsel %vm4698, %v4690, 0.0
  %v4703 = vsel %vm4699, %v4692, 0.0
  %v4704 = vsel %vm4700, %v4694, 0.0
  %v4705 = vsel %vm4701, %v4696, 0.0
  %v4706 = vpack.c.bf16 %v4704, %v4702
  %v4707 = vpack.c.bf16 %v4705, %v4703
  %v4708 = vpack.c.bf16 %v4537, %v4537
  %v4709 = vpack.c.bf16 %v4538, %v4538
  %v4712 = vrot.slane %v4628, 3
  %v4713 = vrot.slane %v4629, 3
  %v4716 = vrot.slane %v4547, 6
  %v4717 = vrot.slane %v4548, 6
  %v4720 = vsel %vm707, %v4706, %v4712
  %v4724 = vsel %vm707, %v4707, %v4713
  %v4726 = vsel %vm343, %v4712, %v4716
  %v4729 = vsel %vm343, %v4713, %v4717
  %v4731 = vsel %vm792, %v4726, %v4708
  %v4732 = vsel %vm792, %v4729, %v4709
  %v4733 = vpack.c.bf16 %v4282, %v4280
  %v4734 = vpack.c.bf16 %v4283, %v4281
  %v4735 = vpack.c.bf16 %v4381, %v4379
  %v4736 = vpack.c.bf16 %v4382, %v4380
  %v4739 = vrot.slane %v4733, 6
  %v4740 = vrot.slane %v4734, 6
  %v4743 = vrot.slane %v4735, 1
  %v4744 = vrot.slane %v4736, 1
  %v4746 = vsel %vm343, %v18, %v4739
  %v4748 = vsel %vm343, %v19, %v4740
  %v4750 = vsel %vm813, %v4746, %v4743
  %v4753 = vsel %vm813, %v4748, %v4744
  %v4754 = vsel %vm102, %v4743, 1065369472
  %v4756 = vsel %vm102, %v4744, 1065369472
  %v4757 = vsel %vm271, %v4724, 0
  %v4760 = vsel %vm271, %v4732, 0
  %v4762 = vsel %vm271, %v4753, 0
  %v4764 = vsel %vm271, %v4756, 0
  %4766 = vmatprep.subr.bf16.mxu0 0
  %4767 = vmatpush1.bf16.xpose.msra.mxu0 0
  %4768 = vmatprep.subr.bf16.mxu0 0
  %4769 = vmatpush1.bf16.xpose.msra.mxu0 0
  %4770 = vmatprep.subr.bf16.mxu0 0
  %4771 = vmatpush1.bf16.xpose.msra.mxu0 0
  %4772 = vmatprep.subr.bf16.mxu0 0
  %4773 = vmatpush1.bf16.xpose.msra.mxu0 0
  %4774 = vmatprep.subr.bf16.mxu0 0
  %4775 = vmatpush1.bf16.xpose.msra.mxu0 0
  %4776 = vmatprep.subr.bf16.mxu0 0
  %4777 = vmatpush1.bf16.xpose.msra.mxu0 0
  %4778 = vmatprep.subr.bf16.mxu0 %v4764
  %4779 = vmatpush1.bf16.xpose.msra.mxu0 %v4754
  %4780 = vmatprep.subr.bf16.mxu0 %v4762
  %4781 = vmatpush1.bf16.xpose.msra.mxu0 %v4750
  %4782 = vmatprep.subr.bf16.mxu0 0
  %4783 = vmatpush2.bf16.xpose.msra.mxu0 0
  %4784 = vmatprep.subr.bf16.mxu0 0
  %4785 = vmatpush2.bf16.xpose.msra.mxu0 0
  %4786 = vmatprep.subr.bf16.mxu0 0
  %4787 = vmatpush2.bf16.xpose.msra.mxu0 0
  %4788 = vmatprep.subr.bf16.mxu0 0
  %4789 = vmatpush2.bf16.xpose.msra.mxu0 0
  %4790 = vmatprep.subr.bf16.mxu0 0
  %4791 = vmatpush2.bf16.xpose.msra.mxu0 0
  %4792 = vmatprep.subr.bf16.mxu0 0
  %4793 = vmatpush2.bf16.xpose.msra.mxu0 0
  %4794 = vmatprep.subr.bf16.mxu0 0
  %4795 = vmatpush2.bf16.xpose.msra.mxu0 0
  %4796 = vmatprep.subr.bf16.mxu0 0
  %4797 = vmatpush2.bf16.xpose.msra.mxu0 0
  %4798 = vmatprep.mubr.bf16.mxu0 %v4757
  %4799 = vmatmul.mubr.bf16.gmra.mxu0 %v4720
  %v4800 = vpop.f32.mrf.mxu0
  %v4801 = vadd.f32 0.0, %v4800
  %v4802 = vpop.f32.mrf.mxu0
  %v4803 = vpop.f32.mrf.mxu0
  %v4804 = vadd.f32 0.0, %v4803
  %v4805 = vpop.f32.mrf.mxu0
  %4806 = vmatprep.mubr.bf16.mxu0 %v4760
  %4807 = vmatmul.mubr.bf16.gmra.mxu0 %v4731
  %v4808 = vpop.f32.mrf.mxu0
  %v4809 = vadd.f32 0.0, %v4808
  %v4810 = vpop.f32.mrf.mxu0
  %v4811 = vpop.f32.mrf.mxu0
  %v4812 = vpop.f32.mrf.mxu0
  %4813 = vdwg.mxu0
  %s4814 = scalar_lea.vmem %s3, 168
  %4815 = vst.msk [vmem:[%s4814] sm:$0xff] %vm880, %v4801
  %4816 = vst.msk [vmem:[%s4814 + $0x8] sm:$0xff] %vm880, %v4804
  %4817 = vst.msk [vmem:[%s4814 + $0x10] sm:$0xff] %vm880, %v4809
  // Predicated region
  $region14: #{reset_core.1} parent=0 // pred_check
    _
  $region15: #{reset_core.1} parent=0 // pred_check_branch
    %4819 = sbr.rel (0) target = $region17
  $region16: #{reset_core.1} parent=0 // pred_region
    _
  $region17: #{reset_core.1} parent=0 // pred_fallthru
    _
  // Predicated region
  $region18: #{reset_core.1} parent=0 // pred_check
    _
  $region19: #{reset_core.1} parent=0 // pred_check_branch
    %4821 = sbr.rel (0) target = $region21
  $region20: #{reset_core.1} parent=0 // pred_region
    _
  $region21: #{reset_core.1} parent=0 // pred_fallthru
    _

</llo_original>
